<compile_context>
chip_gen: v6e
topology: v6e:2x2x1
jax: 0.10.0
libtpu: 0.0.40
codegen_flags: <defaults>
</compile_context>

<pallas_src>
import jax
import jax.numpy as jnp
from jax import lax
from jax.experimental import pallas as pl
from jax.experimental.pallas import tpu as pltpu


# ---------------------------------------------------------------------------
# LSTM-cell math (PyTorch gate order i, f, g, o; b = b_ih + b_hh folded).
# Two dots instead of a lane-dim concat; f32 gate math; bf16 MXU operands.
# ---------------------------------------------------------------------------

def _lstm_cell(x_bf16, h_f32, c_f32, wx_ref, wh_ref, b_bcast_f32, hidden):
    """x: (B,E) bf16, h/c: (B,H) f32, wx/wh: (E,4H)/(H,4H) bf16 refs,
    b_bcast: (B,4H) f32 (pre-broadcast, hoisted out of the loop)."""
    gates = (jnp.dot(x_bf16, wx_ref[...], preferred_element_type=jnp.float32)
             + jnp.dot(h_f32.astype(jnp.bfloat16), wh_ref[...],
                       preferred_element_type=jnp.float32)
             + b_bcast_f32)
    i = jax.nn.sigmoid(gates[:, 0 * hidden:1 * hidden])
    f = jax.nn.sigmoid(gates[:, 1 * hidden:2 * hidden])
    g = jnp.tanh(gates[:, 2 * hidden:3 * hidden])
    o = jax.nn.sigmoid(gates[:, 3 * hidden:4 * hidden])
    c_new = f * c_f32 + i * g
    h_new = o * jnp.tanh(c_new)
    return h_new, c_new


# ---------------------------------------------------------------------------
# Fused encoder + decoder kernel (single invocation, no grid)
# ---------------------------------------------------------------------------

def seq2seq_kernel(flags_ref,                          # (T,) int32   SMEM
                   src_emb_ref,                        # (S, B, E)   bf16
                   tgt_emb_ref,                        # (T, B, E)   bf16
                   dec_emb_ref,                        # (V, E)      bf16
                   enc_wx_ref, enc_wh_ref, enc_b_ref,  # (E,4H),(H,4H) bf16; (1,4H) f32
                   dec_wx_ref, dec_wh_ref, dec_b_ref,  # (E,4H),(H,4H) bf16; (1,4H) f32
                   wfc_ref, bfc_ref,                   # (H, V) bf16; (1, V) f32
                   out_ref,                            # (T, B, V)   f32
                   h_sc, c_sc, x_sc):                  # (B,H) f32, (B,H) f32, (B,E) bf16
    seq_len, batch, _ = src_emb_ref.shape
    target_len, _, vocab = out_ref.shape
    hidden = h_sc.shape[1]

    # Hoisted bias broadcasts (would be re-emitted per iteration inside loops).
    enc_b = jnp.broadcast_to(enc_b_ref[...], (batch, 4 * hidden))
    dec_b = jnp.broadcast_to(dec_b_ref[...], (batch, 4 * hidden))
    bfc = jnp.broadcast_to(bfc_ref[...], (batch, vocab))

    # ---------------- Encoder: zero-initialized single-layer LSTM ----------
    def enc_step(t, carry):
        h, c = carry
        return _lstm_cell(src_emb_ref[t], h, c,
                          enc_wx_ref, enc_wh_ref, enc_b, hidden)

    h0 = jnp.zeros((batch, hidden), jnp.float32)
    c0 = jnp.zeros((batch, hidden), jnp.float32)
    # Short static source length -> full unroll.  For long sources, use a
    # modest unroll factor (4-8) instead to bound code size / vreg pressure.
    h_enc, c_enc = lax.fori_loop(0, seq_len, enc_step, (h0, c0), unroll=True)
    h_sc[...] = h_enc
    c_sc[...] = c_enc

    # ---------------- Decoder: outputs[0] stays zero; loop t = 1..T-1 ------
    out_ref[0] = jnp.zeros((batch, vocab), jnp.float32)
    x_sc[...] = tgt_emb_ref[0]                 # x = embedding of target[0]

    @pl.loop(1, target_len)
    def _(t):
        h_new, c_new = _lstm_cell(x_sc[...], h_sc[...], c_sc[...],
                                  dec_wx_ref, dec_wh_ref, dec_b, hidden)
        h_sc[...] = h_new
        c_sc[...] = c_new

        logits = (jnp.dot(h_new.astype(jnp.bfloat16), wfc_ref[...],
                          preferred_element_type=jnp.float32) + bfc)   # (B,V) f32
        out_ref[t] = logits

        teacher = flags_ref[t] != 0

        @pl.when(teacher)
        def _():
            # Next input = embedding of target[t] (pre-gathered, already bf16).
            x_sc[...] = tgt_emb_ref[t]

        @pl.when(jnp.logical_not(teacher))
        def _():
            # Greedy path only when actually needed (~(1-ratio) of steps):
            # first-max tie-break argmax (== torch.argmax), then pick the
            # embedding row via a one-hot matmul over the resident table.
            # TODO(synk): at realistic vocab sizes, replace the one-hot matmul
            # with per-row dynamic loads from dec_emb_ref (O(B*E) vs O(B*V*E));
            # at V=256 the matmul is negligible and lowers robustly.
            mx = jnp.max(logits, axis=-1, keepdims=True)
            col = lax.broadcasted_iota(jnp.int32, logits.shape, 1)
            best = jnp.min(jnp.where(logits == mx, col, vocab),
                           axis=-1, keepdims=True)                     # (B,1) int32
            onehot = (lax.broadcasted_iota(jnp.int32, (batch, vocab), 1)
                      == best).astype(jnp.bfloat16)
            x_sc[...] = jnp.dot(onehot, dec_emb_ref[...],
                                preferred_element_type=jnp.float32
                                ).astype(jnp.bfloat16)


_VMEM = pl.BlockSpec(memory_space=pltpu.MemorySpace.VMEM)
_SMEM = pl.BlockSpec(memory_space=pltpu.MemorySpace.SMEM)


def _run_fused(flags, src_emb, tgt_emb, dec_emb,
               enc_wx, enc_wh, enc_b, dec_wx, dec_wh, dec_b, wfc, bfc):
    target_len, batch, emb_dim = tgt_emb.shape
    hidden = enc_wh.shape[0]
    vocab = wfc.shape[1]
    return pl.pallas_call(
        seq2seq_kernel,
        out_shape=jax.ShapeDtypeStruct((target_len, batch, vocab), jnp.float32),
        in_specs=[_SMEM] + [_VMEM] * 11,
        out_specs=_VMEM,
        scratch_shapes=[pltpu.VMEM((batch, hidden), jnp.float32),    # h carry
                        pltpu.VMEM((batch, hidden), jnp.float32),    # c carry
                        pltpu.VMEM((batch, emb_dim), jnp.bfloat16)], # x carry (bf16)
    )(flags, src_emb, tgt_emb, dec_emb,
      enc_wx, enc_wh, enc_b, dec_wx, dec_wh, dec_b, wfc, bfc)


# ---------------------------------------------------------------------------
# Seq2Seq forward: everything (casts, gathers, flags, kernel) under one jit.
# ---------------------------------------------------------------------------

@jax.jit
def seq2seq_forward(source, target, params, tf_key, teacher_force_ratio=0.5):
    """source: [S, B] int32, target: [T, B] int32 -> outputs [T, B, V] float32."""
    target_len = target.shape[0]

    # bf16 MXU operands (one-time casts, fused into the same XLA program).
    enc_wx = params["enc_wih"].astype(jnp.bfloat16)
    enc_wh = params["enc_whh"].astype(jnp.bfloat16)
    dec_wx = params["dec_wih"].astype(jnp.bfloat16)
    dec_wh = params["dec_whh"].astype(jnp.bfloat16)
    wfc = params["fc_w"].astype(jnp.bfloat16)
    dec_emb = params["dec_emb"].astype(jnp.bfloat16)

    # One-time embedding gathers (XLA), streamed into the kernel as bf16.
    src_emb = params["enc_emb"][source].astype(jnp.bfloat16)    # (S, B, E)
    tgt_emb = dec_emb[target]                                    # (T, B, E)

    # Deterministic per-time-step teacher-forcing coin flips (index 0 unused),
    # standing in for Python's random.random() in the torch loop.
    flags = (jax.random.uniform(tf_key, (target_len,))
             < teacher_force_ratio).astype(jnp.int32)

    return _run_fused(flags, src_emb, tgt_emb, dec_emb,
                      enc_wx, enc_wh, params["enc_b"],
                      dec_wx, dec_wh, params["dec_b"],
                      wfc, params["fc_b"])


# ---------------------------------------------------------------------------
# Deterministic parameter init (mirrors nn.Embedding / nn.LSTM / nn.Linear)
# ---------------------------------------------------------------------------

def init_params(key, src_vocab, trg_vocab, emb_dim, hidden_dim):
    ks = jax.random.split(key, 10)
    k = 1.0 / jnp.sqrt(hidden_dim)

    def u(kk, shape, scale):
        return jax.random.uniform(kk, shape, jnp.float32, -scale, scale)

    return {
        "enc_emb": u(ks[0], (src_vocab, emb_dim), 1.0),
        "enc_wih": u(ks[1], (emb_dim, 4 * hidden_dim), k),
        "enc_whh": u(ks[2], (hidden_dim, 4 * hidden_dim), k),
        "enc_b":   u(ks[3], (1, 4 * hidden_dim), k),      # b_ih + b_hh folded
        "dec_emb": u(ks[4], (trg_vocab, emb_dim), 1.0),
        "dec_wih": u(ks[5], (emb_dim, 4 * hidden_dim), k),
        "dec_whh": u(ks[6], (hidden_dim, 4 * hidden_dim), k),
        "dec_b":   u(ks[7], (1, 4 * hidden_dim), k),
        "fc_w":    u(ks[8], (hidden_dim, trg_vocab), k),
        "fc_b":    u(ks[9], (1, trg_vocab), k),
    }


# ---------------------------------------------------------------------------
# Demo
# ---------------------------------------------------------------------------

if __name__ == "__main__":
    SRC_VOCAB = 300
    TRG_VOCAB = 256      # "len(trg.vocab)"
    EMB = 128            # lane-dense
    HIDDEN = 128
    BATCH = 16           # fills bf16 (16,128) sublane tiles
    SRC_LEN = 6
    TRG_LEN = 8

    root = jax.random.PRNGKey(0)
    k_params, k_src, k_trg, k_tf = jax.random.split(root, 4)

    params = init_params(k_params, SRC_VOCAB, TRG_VOCAB, EMB, HIDDEN)
    source = jax.random.randint(k_src, (SRC_LEN, BATCH), 0, SRC_VOCAB, jnp.int32)
    target = jax.random.randint(k_trg, (TRG_LEN, BATCH), 0, TRG_VOCAB, jnp.int32)

    outputs = seq2seq_forward(source, target, params, k_tf,
                              teacher_force_ratio=0.5)
    outputs = jax.block_until_ready(outputs)

    assert outputs.shape == (TRG_LEN, BATCH, TRG_VOCAB)
    assert outputs.dtype == jnp.float32
    assert bool(jnp.all(outputs[0] == 0.0))      # outputs[0] untouched, as in PyTorch
    assert bool(jnp.all(jnp.isfinite(outputs)))
    print("KERNEL_OK")
</pallas_src>

<mosaic_0001>
module attributes {stable_mosaic.version = 11 : i64} {
  func.func @seq2seq_kernel(%arg0: memref<8xi32, #tpu.memory_space<smem>>, %arg1: memref<6x16x128xbf16, #tpu.memory_space<vmem>>, %arg2: memref<8x16x128xbf16, #tpu.memory_space<vmem>>, %arg3: memref<256x128xbf16, #tpu.memory_space<vmem>>, %arg4: memref<128x512xbf16, #tpu.memory_space<vmem>>, %arg5: memref<128x512xbf16, #tpu.memory_space<vmem>>, %arg6: memref<1x512xf32, #tpu.memory_space<vmem>>, %arg7: memref<128x512xbf16, #tpu.memory_space<vmem>>, %arg8: memref<128x512xbf16, #tpu.memory_space<vmem>>, %arg9: memref<1x512xf32, #tpu.memory_space<vmem>>, %arg10: memref<128x256xbf16, #tpu.memory_space<vmem>>, %arg11: memref<1x256xf32, #tpu.memory_space<vmem>>, %arg12: memref<8x16x256xf32, #tpu.memory_space<vmem>>, %arg13: memref<16x128xf32, #tpu.memory_space<vmem>>, %arg14: memref<16x128xf32, #tpu.memory_space<vmem>>, %arg15: memref<16x128xbf16, #tpu.memory_space<vmem>>) attributes {dimension_semantics = [], scalar_prefetch = 0 : i64, scratch_operands = 3 : i64, tpu.core_type = #tpu.core_type<tc>} {
    %c0 = arith.constant 0 : index
    %c0_0 = arith.constant 0 : index
    %0 = vector.load %arg6[%c0, %c0_0] : memref<1x512xf32, #tpu.memory_space<vmem>>, vector<1x512xf32>
    %1 = vector.shape_cast %0 : vector<1x512xf32> to vector<1x512xf32>
    %2 = vector.broadcast %1 : vector<1x512xf32> to vector<16x512xf32>
    %c0_1 = arith.constant 0 : index
    %c0_2 = arith.constant 0 : index
    %3 = vector.load %arg9[%c0_1, %c0_2] : memref<1x512xf32, #tpu.memory_space<vmem>>, vector<1x512xf32>
    %4 = vector.shape_cast %3 : vector<1x512xf32> to vector<1x512xf32>
    %5 = vector.broadcast %4 : vector<1x512xf32> to vector<16x512xf32>
    %c0_3 = arith.constant 0 : index
    %c0_4 = arith.constant 0 : index
    %6 = vector.load %arg11[%c0_3, %c0_4] : memref<1x256xf32, #tpu.memory_space<vmem>>, vector<1x256xf32>
    %7 = vector.shape_cast %6 : vector<1x256xf32> to vector<1x256xf32>
    %8 = vector.broadcast %7 : vector<1x256xf32> to vector<16x256xf32>
    %cst = arith.constant 0.000000e+00 : f32
    %9 = vector.broadcast %cst : f32 to vector<16x128xf32>
    %cst_5 = arith.constant 0.000000e+00 : f32
    %10 = vector.broadcast %cst_5 : f32 to vector<16x128xf32>
    %c0_i32 = arith.constant 0 : i32
    %11 = arith.index_cast %c0_i32 : i32 to index
    %c0_6 = arith.constant 0 : index
    %c0_7 = arith.constant 0 : index
    %12 = vector.load %arg1[%11, %c0_6, %c0_7] : memref<6x16x128xbf16, #tpu.memory_space<vmem>>, vector<1x16x128xbf16>
    %13 = vector.shape_cast %12 : vector<1x16x128xbf16> to vector<16x128xbf16>
    %c0_8 = arith.constant 0 : index
    %c0_9 = arith.constant 0 : index
    %14 = vector.load %arg4[%c0_8, %c0_9] : memref<128x512xbf16, #tpu.memory_space<vmem>>, vector<128x512xbf16>
    %cst_10 = arith.constant dense<0.000000e+00> : vector<16x512xf32>
    %15 = tpu.matmul %13, %14, %cst_10 {dimension_numbers = #tpu.dot_dimension_numbers<[1], [0], [0], [1], [0, 0, 1, 1], [], []>} : vector<16x128xbf16>, vector<128x512xbf16>, vector<16x512xf32> -> vector<16x512xf32>
    %16 = arith.truncf %9 : vector<16x128xf32> to vector<16x128xbf16>
    %c0_11 = arith.constant 0 : index
    %c0_12 = arith.constant 0 : index
    %17 = vector.load %arg5[%c0_11, %c0_12] : memref<128x512xbf16, #tpu.memory_space<vmem>>, vector<128x512xbf16>
    %cst_13 = arith.constant dense<0.000000e+00> : vector<16x512xf32>
    %18 = tpu.matmul %16, %17, %cst_13 {dimension_numbers = #tpu.dot_dimension_numbers<[1], [0], [0], [1], [0, 0, 1, 1], [], []>} : vector<16x128xbf16>, vector<128x512xbf16>, vector<16x512xf32> -> vector<16x512xf32>
    %19 = arith.addf %15, %18 : vector<16x512xf32>
    %20 = arith.addf %19, %2 : vector<16x512xf32>
    %21 = vector.extract_strided_slice %20 {offsets = [0, 0], sizes = [16, 128], strides = [1, 1]} : vector<16x512xf32> to vector<16x128xf32>
    %22 = arith.negf %21 : vector<16x128xf32>
    %23 = math.exp %22 : vector<16x128xf32>
    %cst_14 = arith.constant 1.000000e+00 : f32
    %24 = vector.broadcast %cst_14 : f32 to vector<16x128xf32>
    %25 = arith.addf %24, %23 : vector<16x128xf32>
    %26 = arith.divf %24, %25 : vector<16x128xf32>
    %27 = vector.extract_strided_slice %20 {offsets = [0, 128], sizes = [16, 128], strides = [1, 1]} : vector<16x512xf32> to vector<16x128xf32>
    %28 = arith.negf %27 : vector<16x128xf32>
    %29 = math.exp %28 : vector<16x128xf32>
    %cst_15 = arith.constant 1.000000e+00 : f32
    %30 = vector.broadcast %cst_15 : f32 to vector<16x128xf32>
    %31 = arith.addf %30, %29 : vector<16x128xf32>
    %32 = arith.divf %30, %31 : vector<16x128xf32>
    %33 = vector.extract_strided_slice %20 {offsets = [0, 256], sizes = [16, 128], strides = [1, 1]} : vector<16x512xf32> to vector<16x128xf32>
    %34 = math.tanh %33 : vector<16x128xf32>
    %35 = vector.extract_strided_slice %20 {offsets = [0, 384], sizes = [16, 128], strides = [1, 1]} : vector<16x512xf32> to vector<16x128xf32>
    %36 = arith.negf %35 : vector<16x128xf32>
    %37 = math.exp %36 : vector<16x128xf32>
    %cst_16 = arith.constant 1.000000e+00 : f32
    %38 = vector.broadcast %cst_16 : f32 to vector<16x128xf32>
    %39 = arith.addf %38, %37 : vector<16x128xf32>
    %40 = arith.divf %38, %39 : vector<16x128xf32>
    %41 = arith.mulf %32, %10 : vector<16x128xf32>
    %42 = arith.mulf %26, %34 : vector<16x128xf32>
    %43 = arith.addf %41, %42 : vector<16x128xf32>
    %44 = math.tanh %43 : vector<16x128xf32>
    %45 = arith.mulf %40, %44 : vector<16x128xf32>
    %c1_i32 = arith.constant 1 : i32
    %46 = arith.index_cast %c1_i32 : i32 to index
    %c0_17 = arith.constant 0 : index
    %c0_18 = arith.constant 0 : index
    %47 = vector.load %arg1[%46, %c0_17, %c0_18] : memref<6x16x128xbf16, #tpu.memory_space<vmem>>, vector<1x16x128xbf16>
    %48 = vector.shape_cast %47 : vector<1x16x128xbf16> to vector<16x128xbf16>
    %c0_19 = arith.constant 0 : index
    %c0_20 = arith.constant 0 : index
    %49 = vector.load %arg4[%c0_19, %c0_20] : memref<128x512xbf16, #tpu.memory_space<vmem>>, vector<128x512xbf16>
    %cst_21 = arith.constant dense<0.000000e+00> : vector<16x512xf32>
    %50 = tpu.matmul %48, %49, %cst_21 {dimension_numbers = #tpu.dot_dimension_numbers<[1], [0], [0], [1], [0, 0, 1, 1], [], []>} : vector<16x128xbf16>, vector<128x512xbf16>, vector<16x512xf32> -> vector<16x512xf32>
    %51 = arith.truncf %45 : vector<16x128xf32> to vector<16x128xbf16>
    %c0_22 = arith.constant 0 : index
    %c0_23 = arith.constant 0 : index
    %52 = vector.load %arg5[%c0_22, %c0_23] : memref<128x512xbf16, #tpu.memory_space<vmem>>, vector<128x512xbf16>
    %cst_24 = arith.constant dense<0.000000e+00> : vector<16x512xf32>
    %53 = tpu.matmul %51, %52, %cst_24 {dimension_numbers = #tpu.dot_dimension_numbers<[1], [0], [0], [1], [0, 0, 1, 1], [], []>} : vector<16x128xbf16>, vector<128x512xbf16>, vector<16x512xf32> -> vector<16x512xf32>
    %54 = arith.addf %50, %53 : vector<16x512xf32>
    %55 = arith.addf %54, %2 : vector<16x512xf32>
    %56 = vector.extract_strided_slice %55 {offsets = [0, 0], sizes = [16, 128], strides = [1, 1]} : vector<16x512xf32> to vector<16x128xf32>
    %57 = arith.negf %56 : vector<16x128xf32>
    %58 = math.exp %57 : vector<16x128xf32>
    %cst_25 = arith.constant 1.000000e+00 : f32
    %59 = vector.broadcast %cst_25 : f32 to vector<16x128xf32>
    %60 = arith.addf %59, %58 : vector<16x128xf32>
    %61 = arith.divf %59, %60 : vector<16x128xf32>
    %62 = vector.extract_strided_slice %55 {offsets = [0, 128], sizes = [16, 128], strides = [1, 1]} : vector<16x512xf32> to vector<16x128xf32>
    %63 = arith.negf %62 : vector<16x128xf32>
    %64 = math.exp %63 : vector<16x128xf32>
    %cst_26 = arith.constant 1.000000e+00 : f32
    %65 = vector.broadcast %cst_26 : f32 to vector<16x128xf32>
    %66 = arith.addf %65, %64 : vector<16x128xf32>
    %67 = arith.divf %65, %66 : vector<16x128xf32>
    %68 = vector.extract_strided_slice %55 {offsets = [0, 256], sizes = [16, 128], strides = [1, 1]} : vector<16x512xf32> to vector<16x128xf32>
    %69 = math.tanh %68 : vector<16x128xf32>
    %70 = vector.extract_strided_slice %55 {offsets = [0, 384], sizes = [16, 128], strides = [1, 1]} : vector<16x512xf32> to vector<16x128xf32>
    %71 = arith.negf %70 : vector<16x128xf32>
    %72 = math.exp %71 : vector<16x128xf32>
    %cst_27 = arith.constant 1.000000e+00 : f32
    %73 = vector.broadcast %cst_27 : f32 to vector<16x128xf32>
    %74 = arith.addf %73, %72 : vector<16x128xf32>
    %75 = arith.divf %73, %74 : vector<16x128xf32>
    %76 = arith.mulf %67, %43 : vector<16x128xf32>
    %77 = arith.mulf %61, %69 : vector<16x128xf32>
    %78 = arith.addf %76, %77 : vector<16x128xf32>
    %79 = math.tanh %78 : vector<16x128xf32>
    %80 = arith.mulf %75, %79 : vector<16x128xf32>
    %c2_i32 = arith.constant 2 : i32
    %81 = arith.index_cast %c2_i32 : i32 to index
    %c0_28 = arith.constant 0 : index
    %c0_29 = arith.constant 0 : index
    %82 = vector.load %arg1[%81, %c0_28, %c0_29] : memref<6x16x128xbf16, #tpu.memory_space<vmem>>, vector<1x16x128xbf16>
    %83 = vector.shape_cast %82 : vector<1x16x128xbf16> to vector<16x128xbf16>
    %c0_30 = arith.constant 0 : index
    %c0_31 = arith.constant 0 : index
    %84 = vector.load %arg4[%c0_30, %c0_31] : memref<128x512xbf16, #tpu.memory_space<vmem>>, vector<128x512xbf16>
    %cst_32 = arith.constant dense<0.000000e+00> : vector<16x512xf32>
    %85 = tpu.matmul %83, %84, %cst_32 {dimension_numbers = #tpu.dot_dimension_numbers<[1], [0], [0], [1], [0, 0, 1, 1], [], []>} : vector<16x128xbf16>, vector<128x512xbf16>, vector<16x512xf32> -> vector<16x512xf32>
    %86 = arith.truncf %80 : vector<16x128xf32> to vector<16x128xbf16>
    %c0_33 = arith.constant 0 : index
    %c0_34 = arith.constant 0 : index
    %87 = vector.load %arg5[%c0_33, %c0_34] : memref<128x512xbf16, #tpu.memory_space<vmem>>, vector<128x512xbf16>
    %cst_35 = arith.constant dense<0.000000e+00> : vector<16x512xf32>
    %88 = tpu.matmul %86, %87, %cst_35 {dimension_numbers = #tpu.dot_dimension_numbers<[1], [0], [0], [1], [0, 0, 1, 1], [], []>} : vector<16x128xbf16>, vector<128x512xbf16>, vector<16x512xf32> -> vector<16x512xf32>
    %89 = arith.addf %85, %88 : vector<16x512xf32>
    %90 = arith.addf %89, %2 : vector<16x512xf32>
    %91 = vector.extract_strided_slice %90 {offsets = [0, 0], sizes = [16, 128], strides = [1, 1]} : vector<16x512xf32> to vector<16x128xf32>
    %92 = arith.negf %91 : vector<16x128xf32>
    %93 = math.exp %92 : vector<16x128xf32>
    %cst_36 = arith.constant 1.000000e+00 : f32
    %94 = vector.broadcast %cst_36 : f32 to vector<16x128xf32>
    %95 = arith.addf %94, %93 : vector<16x128xf32>
    %96 = arith.divf %94, %95 : vector<16x128xf32>
    %97 = vector.extract_strided_slice %90 {offsets = [0, 128], sizes = [16, 128], strides = [1, 1]} : vector<16x512xf32> to vector<16x128xf32>
    %98 = arith.negf %97 : vector<16x128xf32>
    %99 = math.exp %98 : vector<16x128xf32>
    %cst_37 = arith.constant 1.000000e+00 : f32
    %100 = vector.broadcast %cst_37 : f32 to vector<16x128xf32>
    %101 = arith.addf %100, %99 : vector<16x128xf32>
    %102 = arith.divf %100, %101 : vector<16x128xf32>
    %103 = vector.extract_strided_slice %90 {offsets = [0, 256], sizes = [16, 128], strides = [1, 1]} : vector<16x512xf32> to vector<16x128xf32>
    %104 = math.tanh %103 : vector<16x128xf32>
    %105 = vector.extract_strided_slice %90 {offsets = [0, 384], sizes = [16, 128], strides = [1, 1]} : vector<16x512xf32> to vector<16x128xf32>
    %106 = arith.negf %105 : vector<16x128xf32>
    %107 = math.exp %106 : vector<16x128xf32>
    %cst_38 = arith.constant 1.000000e+00 : f32
    %108 = vector.broadcast %cst_38 : f32 to vector<16x128xf32>
    %109 = arith.addf %108, %107 : vector<16x128xf32>
    %110 = arith.divf %108, %109 : vector<16x128xf32>
    %111 = arith.mulf %102, %78 : vector<16x128xf32>
    %112 = arith.mulf %96, %104 : vector<16x128xf32>
    %113 = arith.addf %111, %112 : vector<16x128xf32>
    %114 = math.tanh %113 : vector<16x128xf32>
    %115 = arith.mulf %110, %114 : vector<16x128xf32>
    %c3_i32 = arith.constant 3 : i32
    %116 = arith.index_cast %c3_i32 : i32 to index
    %c0_39 = arith.constant 0 : index
    %c0_40 = arith.constant 0 : index
    %117 = vector.load %arg1[%116, %c0_39, %c0_40] : memref<6x16x128xbf16, #tpu.memory_space<vmem>>, vector<1x16x128xbf16>
    %118 = vector.shape_cast %117 : vector<1x16x128xbf16> to vector<16x128xbf16>
    %c0_41 = arith.constant 0 : index
    %c0_42 = arith.constant 0 : index
    %119 = vector.load %arg4[%c0_41, %c0_42] : memref<128x512xbf16, #tpu.memory_space<vmem>>, vector<128x512xbf16>
    %cst_43 = arith.constant dense<0.000000e+00> : vector<16x512xf32>
    %120 = tpu.matmul %118, %119, %cst_43 {dimension_numbers = #tpu.dot_dimension_numbers<[1], [0], [0], [1], [0, 0, 1, 1], [], []>} : vector<16x128xbf16>, vector<128x512xbf16>, vector<16x512xf32> -> vector<16x512xf32>
    %121 = arith.truncf %115 : vector<16x128xf32> to vector<16x128xbf16>
    %c0_44 = arith.constant 0 : index
    %c0_45 = arith.constant 0 : index
    %122 = vector.load %arg5[%c0_44, %c0_45] : memref<128x512xbf16, #tpu.memory_space<vmem>>, vector<128x512xbf16>
    %cst_46 = arith.constant dense<0.000000e+00> : vector<16x512xf32>
    %123 = tpu.matmul %121, %122, %cst_46 {dimension_numbers = #tpu.dot_dimension_numbers<[1], [0], [0], [1], [0, 0, 1, 1], [], []>} : vector<16x128xbf16>, vector<128x512xbf16>, vector<16x512xf32> -> vector<16x512xf32>
    %124 = arith.addf %120, %123 : vector<16x512xf32>
    %125 = arith.addf %124, %2 : vector<16x512xf32>
    %126 = vector.extract_strided_slice %125 {offsets = [0, 0], sizes = [16, 128], strides = [1, 1]} : vector<16x512xf32> to vector<16x128xf32>
    %127 = arith.negf %126 : vector<16x128xf32>
    %128 = math.exp %127 : vector<16x128xf32>
    %cst_47 = arith.constant 1.000000e+00 : f32
    %129 = vector.broadcast %cst_47 : f32 to vector<16x128xf32>
    %130 = arith.addf %129, %128 : vector<16x128xf32>
    %131 = arith.divf %129, %130 : vector<16x128xf32>
    %132 = vector.extract_strided_slice %125 {offsets = [0, 128], sizes = [16, 128], strides = [1, 1]} : vector<16x512xf32> to vector<16x128xf32>
    %133 = arith.negf %132 : vector<16x128xf32>
    %134 = math.exp %133 : vector<16x128xf32>
    %cst_48 = arith.constant 1.000000e+00 : f32
    %135 = vector.broadcast %cst_48 : f32 to vector<16x128xf32>
    %136 = arith.addf %135, %134 : vector<16x128xf32>
    %137 = arith.divf %135, %136 : vector<16x128xf32>
    %138 = vector.extract_strided_slice %125 {offsets = [0, 256], sizes = [16, 128], strides = [1, 1]} : vector<16x512xf32> to vector<16x128xf32>
    %139 = math.tanh %138 : vector<16x128xf32>
    %140 = vector.extract_strided_slice %125 {offsets = [0, 384], sizes = [16, 128], strides = [1, 1]} : vector<16x512xf32> to vector<16x128xf32>
    %141 = arith.negf %140 : vector<16x128xf32>
    %142 = math.exp %141 : vector<16x128xf32>
    %cst_49 = arith.constant 1.000000e+00 : f32
    %143 = vector.broadcast %cst_49 : f32 to vector<16x128xf32>
    %144 = arith.addf %143, %142 : vector<16x128xf32>
    %145 = arith.divf %143, %144 : vector<16x128xf32>
    %146 = arith.mulf %137, %113 : vector<16x128xf32>
    %147 = arith.mulf %131, %139 : vector<16x128xf32>
    %148 = arith.addf %146, %147 : vector<16x128xf32>
    %149 = math.tanh %148 : vector<16x128xf32>
    %150 = arith.mulf %145, %149 : vector<16x128xf32>
    %c4_i32 = arith.constant 4 : i32
    %151 = arith.index_cast %c4_i32 : i32 to index
    %c0_50 = arith.constant 0 : index
    %c0_51 = arith.constant 0 : index
    %152 = vector.load %arg1[%151, %c0_50, %c0_51] : memref<6x16x128xbf16, #tpu.memory_space<vmem>>, vector<1x16x128xbf16>
    %153 = vector.shape_cast %152 : vector<1x16x128xbf16> to vector<16x128xbf16>
    %c0_52 = arith.constant 0 : index
    %c0_53 = arith.constant 0 : index
    %154 = vector.load %arg4[%c0_52, %c0_53] : memref<128x512xbf16, #tpu.memory_space<vmem>>, vector<128x512xbf16>
    %cst_54 = arith.constant dense<0.000000e+00> : vector<16x512xf32>
    %155 = tpu.matmul %153, %154, %cst_54 {dimension_numbers = #tpu.dot_dimension_numbers<[1], [0], [0], [1], [0, 0, 1, 1], [], []>} : vector<16x128xbf16>, vector<128x512xbf16>, vector<16x512xf32> -> vector<16x512xf32>
    %156 = arith.truncf %150 : vector<16x128xf32> to vector<16x128xbf16>
    %c0_55 = arith.constant 0 : index
    %c0_56 = arith.constant 0 : index
    %157 = vector.load %arg5[%c0_55, %c0_56] : memref<128x512xbf16, #tpu.memory_space<vmem>>, vector<128x512xbf16>
    %cst_57 = arith.constant dense<0.000000e+00> : vector<16x512xf32>
    %158 = tpu.matmul %156, %157, %cst_57 {dimension_numbers = #tpu.dot_dimension_numbers<[1], [0], [0], [1], [0, 0, 1, 1], [], []>} : vector<16x128xbf16>, vector<128x512xbf16>, vector<16x512xf32> -> vector<16x512xf32>
    %159 = arith.addf %155, %158 : vector<16x512xf32>
    %160 = arith.addf %159, %2 : vector<16x512xf32>
    %161 = vector.extract_strided_slice %160 {offsets = [0, 0], sizes = [16, 128], strides = [1, 1]} : vector<16x512xf32> to vector<16x128xf32>
    %162 = arith.negf %161 : vector<16x128xf32>
    %163 = math.exp %162 : vector<16x128xf32>
    %cst_58 = arith.constant 1.000000e+00 : f32
    %164 = vector.broadcast %cst_58 : f32 to vector<16x128xf32>
    %165 = arith.addf %164, %163 : vector<16x128xf32>
    %166 = arith.divf %164, %165 : vector<16x128xf32>
    %167 = vector.extract_strided_slice %160 {offsets = [0, 128], sizes = [16, 128], strides = [1, 1]} : vector<16x512xf32> to vector<16x128xf32>
    %168 = arith.negf %167 : vector<16x128xf32>
    %169 = math.exp %168 : vector<16x128xf32>
    %cst_59 = arith.constant 1.000000e+00 : f32
    %170 = vector.broadcast %cst_59 : f32 to vector<16x128xf32>
    %171 = arith.addf %170, %169 : vector<16x128xf32>
    %172 = arith.divf %170, %171 : vector<16x128xf32>
    %173 = vector.extract_strided_slice %160 {offsets = [0, 256], sizes = [16, 128], strides = [1, 1]} : vector<16x512xf32> to vector<16x128xf32>
    %174 = math.tanh %173 : vector<16x128xf32>
    %175 = vector.extract_strided_slice %160 {offsets = [0, 384], sizes = [16, 128], strides = [1, 1]} : vector<16x512xf32> to vector<16x128xf32>
    %176 = arith.negf %175 : vector<16x128xf32>
    %177 = math.exp %176 : vector<16x128xf32>
    %cst_60 = arith.constant 1.000000e+00 : f32
    %178 = vector.broadcast %cst_60 : f32 to vector<16x128xf32>
    %179 = arith.addf %178, %177 : vector<16x128xf32>
    %180 = arith.divf %178, %179 : vector<16x128xf32>
    %181 = arith.mulf %172, %148 : vector<16x128xf32>
    %182 = arith.mulf %166, %174 : vector<16x128xf32>
    %183 = arith.addf %181, %182 : vector<16x128xf32>
    %184 = math.tanh %183 : vector<16x128xf32>
    %185 = arith.mulf %180, %184 : vector<16x128xf32>
    %c5_i32 = arith.constant 5 : i32
    %186 = arith.index_cast %c5_i32 : i32 to index
    %c0_61 = arith.constant 0 : index
    %c0_62 = arith.constant 0 : index
    %187 = vector.load %arg1[%186, %c0_61, %c0_62] : memref<6x16x128xbf16, #tpu.memory_space<vmem>>, vector<1x16x128xbf16>
    %188 = vector.shape_cast %187 : vector<1x16x128xbf16> to vector<16x128xbf16>
    %c0_63 = arith.constant 0 : index
    %c0_64 = arith.constant 0 : index
    %189 = vector.load %arg4[%c0_63, %c0_64] : memref<128x512xbf16, #tpu.memory_space<vmem>>, vector<128x512xbf16>
    %cst_65 = arith.constant dense<0.000000e+00> : vector<16x512xf32>
    %190 = tpu.matmul %188, %189, %cst_65 {dimension_numbers = #tpu.dot_dimension_numbers<[1], [0], [0], [1], [0, 0, 1, 1], [], []>} : vector<16x128xbf16>, vector<128x512xbf16>, vector<16x512xf32> -> vector<16x512xf32>
    %191 = arith.truncf %185 : vector<16x128xf32> to vector<16x128xbf16>
    %c0_66 = arith.constant 0 : index
    %c0_67 = arith.constant 0 : index
    %192 = vector.load %arg5[%c0_66, %c0_67] : memref<128x512xbf16, #tpu.memory_space<vmem>>, vector<128x512xbf16>
    %cst_68 = arith.constant dense<0.000000e+00> : vector<16x512xf32>
    %193 = tpu.matmul %191, %192, %cst_68 {dimension_numbers = #tpu.dot_dimension_numbers<[1], [0], [0], [1], [0, 0, 1, 1], [], []>} : vector<16x128xbf16>, vector<128x512xbf16>, vector<16x512xf32> -> vector<16x512xf32>
    %194 = arith.addf %190, %193 : vector<16x512xf32>
    %195 = arith.addf %194, %2 : vector<16x512xf32>
    %196 = vector.extract_strided_slice %195 {offsets = [0, 0], sizes = [16, 128], strides = [1, 1]} : vector<16x512xf32> to vector<16x128xf32>
    %197 = arith.negf %196 : vector<16x128xf32>
    %198 = math.exp %197 : vector<16x128xf32>
    %cst_69 = arith.constant 1.000000e+00 : f32
    %199 = vector.broadcast %cst_69 : f32 to vector<16x128xf32>
    %200 = arith.addf %199, %198 : vector<16x128xf32>
    %201 = arith.divf %199, %200 : vector<16x128xf32>
    %202 = vector.extract_strided_slice %195 {offsets = [0, 128], sizes = [16, 128], strides = [1, 1]} : vector<16x512xf32> to vector<16x128xf32>
    %203 = arith.negf %202 : vector<16x128xf32>
    %204 = math.exp %203 : vector<16x128xf32>
    %cst_70 = arith.constant 1.000000e+00 : f32
    %205 = vector.broadcast %cst_70 : f32 to vector<16x128xf32>
    %206 = arith.addf %205, %204 : vector<16x128xf32>
    %207 = arith.divf %205, %206 : vector<16x128xf32>
    %208 = vector.extract_strided_slice %195 {offsets = [0, 256], sizes = [16, 128], strides = [1, 1]} : vector<16x512xf32> to vector<16x128xf32>
    %209 = math.tanh %208 : vector<16x128xf32>
    %210 = vector.extract_strided_slice %195 {offsets = [0, 384], sizes = [16, 128], strides = [1, 1]} : vector<16x512xf32> to vector<16x128xf32>
    %211 = arith.negf %210 : vector<16x128xf32>
    %212 = math.exp %211 : vector<16x128xf32>
    %cst_71 = arith.constant 1.000000e+00 : f32
    %213 = vector.broadcast %cst_71 : f32 to vector<16x128xf32>
    %214 = arith.addf %213, %212 : vector<16x128xf32>
    %215 = arith.divf %213, %214 : vector<16x128xf32>
    %216 = arith.mulf %207, %183 : vector<16x128xf32>
    %217 = arith.mulf %201, %209 : vector<16x128xf32>
    %218 = arith.addf %216, %217 : vector<16x128xf32>
    %219 = math.tanh %218 : vector<16x128xf32>
    %220 = arith.mulf %215, %219 : vector<16x128xf32>
    %c6_i32 = arith.constant 6 : i32
    %c0_72 = arith.constant 0 : index
    %c0_73 = arith.constant 0 : index
    %221 = vector.load %arg13[%c0_72, %c0_73] : memref<16x128xf32, #tpu.memory_space<vmem>>, vector<16x128xf32>
    tpu.vector_store %arg13[%c0_72, %c0_73], %220 {strides = array<i32>} : memref<16x128xf32, #tpu.memory_space<vmem>>, vector<16x128xf32>,
    %c0_74 = arith.constant 0 : index
    %c0_75 = arith.constant 0 : index
    %222 = vector.load %arg14[%c0_74, %c0_75] : memref<16x128xf32, #tpu.memory_space<vmem>>, vector<16x128xf32>
    tpu.vector_store %arg14[%c0_74, %c0_75], %218 {strides = array<i32>} : memref<16x128xf32, #tpu.memory_space<vmem>>, vector<16x128xf32>,
    %cst_76 = arith.constant 0.000000e+00 : f32
    %223 = vector.broadcast %cst_76 : f32 to vector<16x256xf32>
    %c0_77 = arith.constant 0 : index
    %c0_78 = arith.constant 0 : index
    %c0_79 = arith.constant 0 : index
    %224 = vector.load %arg12[%c0_77, %c0_78, %c0_79] : memref<8x16x256xf32, #tpu.memory_space<vmem>>, vector<1x16x256xf32>
    %225 = vector.shape_cast %224 : vector<1x16x256xf32> to vector<16x256xf32>
    %226 = vector.shape_cast %223 : vector<16x256xf32> to vector<1x16x256xf32>
    tpu.vector_store %arg12[%c0_77, %c0_78, %c0_79], %226 {strides = array<i32>} : memref<8x16x256xf32, #tpu.memory_space<vmem>>, vector<1x16x256xf32>,
    %c0_80 = arith.constant 0 : index
    %c0_81 = arith.constant 0 : index
    %c0_82 = arith.constant 0 : index
    %227 = vector.load %arg2[%c0_80, %c0_81, %c0_82] : memref<8x16x128xbf16, #tpu.memory_space<vmem>>, vector<1x16x128xbf16>
    %228 = vector.shape_cast %227 : vector<1x16x128xbf16> to vector<16x128xbf16>
    %c0_83 = arith.constant 0 : index
    %c0_84 = arith.constant 0 : index
    %229 = vector.load %arg15[%c0_83, %c0_84] : memref<16x128xbf16, #tpu.memory_space<vmem>>, vector<16x128xbf16>
    tpu.vector_store %arg15[%c0_83, %c0_84], %228 {strides = array<i32>} : memref<16x128xbf16, #tpu.memory_space<vmem>>, vector<16x128xbf16>,
    %c0_i32_85 = arith.constant 0 : i32
    %c7_i32 = arith.constant 7 : i32
    %230 = arith.addi %c0_i32_85, %c7_i32 : i32
    %c1_i32_86 = arith.constant 1 : i32
    scf.for %arg16 = %c0_i32_85 to %230 step %c1_i32_86  : i32 {
      %c1_i32_88 = arith.constant 1 : i32
      %231 = arith.muli %arg16, %c1_i32_88 : i32
      %c1_i32_89 = arith.constant 1 : i32
      %232 = arith.addi %c1_i32_89, %231 : i32
      %c0_90 = arith.constant 0 : index
      %c0_91 = arith.constant 0 : index
      %233 = vector.load %arg15[%c0_90, %c0_91] : memref<16x128xbf16, #tpu.memory_space<vmem>>, vector<16x128xbf16>
      %c0_92 = arith.constant 0 : index
      %c0_93 = arith.constant 0 : index
      %234 = vector.load %arg13[%c0_92, %c0_93] : memref<16x128xf32, #tpu.memory_space<vmem>>, vector<16x128xf32>
      %c0_94 = arith.constant 0 : index
      %c0_95 = arith.constant 0 : index
      %235 = vector.load %arg14[%c0_94, %c0_95] : memref<16x128xf32, #tpu.memory_space<vmem>>, vector<16x128xf32>
      %c0_96 = arith.constant 0 : index
      %c0_97 = arith.constant 0 : index
      %236 = vector.load %arg7[%c0_96, %c0_97] : memref<128x512xbf16, #tpu.memory_space<vmem>>, vector<128x512xbf16>
      %cst_98 = arith.constant dense<0.000000e+00> : vector<16x512xf32>
      %237 = tpu.matmul %233, %236, %cst_98 {dimension_numbers = #tpu.dot_dimension_numbers<[1], [0], [0], [1], [0, 0, 1, 1], [], []>} : vector<16x128xbf16>, vector<128x512xbf16>, vector<16x512xf32> -> vector<16x512xf32>
      %238 = arith.truncf %234 : vector<16x128xf32> to vector<16x128xbf16>
      %c0_99 = arith.constant 0 : index
      %c0_100 = arith.constant 0 : index
      %239 = vector.load %arg8[%c0_99, %c0_100] : memref<128x512xbf16, #tpu.memory_space<vmem>>, vector<128x512xbf16>
      %cst_101 = arith.constant dense<0.000000e+00> : vector<16x512xf32>
      %240 = tpu.matmul %238, %239, %cst_101 {dimension_numbers = #tpu.dot_dimension_numbers<[1], [0], [0], [1], [0, 0, 1, 1], [], []>} : vector<16x128xbf16>, vector<128x512xbf16>, vector<16x512xf32> -> vector<16x512xf32>
      %241 = arith.addf %237, %240 : vector<16x512xf32>
      %242 = arith.addf %241, %5 : vector<16x512xf32>
      %243 = vector.extract_strided_slice %242 {offsets = [0, 0], sizes = [16, 128], strides = [1, 1]} : vector<16x512xf32> to vector<16x128xf32>
      %244 = arith.negf %243 : vector<16x128xf32>
      %245 = math.exp %244 : vector<16x128xf32>
      %cst_102 = arith.constant 1.000000e+00 : f32
      %246 = vector.broadcast %cst_102 : f32 to vector<16x128xf32>
      %247 = arith.addf %246, %245 : vector<16x128xf32>
      %248 = arith.divf %246, %247 : vector<16x128xf32>
      %249 = vector.extract_strided_slice %242 {offsets = [0, 128], sizes = [16, 128], strides = [1, 1]} : vector<16x512xf32> to vector<16x128xf32>
      %250 = arith.negf %249 : vector<16x128xf32>
      %251 = math.exp %250 : vector<16x128xf32>
      %cst_103 = arith.constant 1.000000e+00 : f32
      %252 = vector.broadcast %cst_103 : f32 to vector<16x128xf32>
      %253 = arith.addf %252, %251 : vector<16x128xf32>
      %254 = arith.divf %252, %253 : vector<16x128xf32>
      %255 = vector.extract_strided_slice %242 {offsets = [0, 256], sizes = [16, 128], strides = [1, 1]} : vector<16x512xf32> to vector<16x128xf32>
      %256 = math.tanh %255 : vector<16x128xf32>
      %257 = vector.extract_strided_slice %242 {offsets = [0, 384], sizes = [16, 128], strides = [1, 1]} : vector<16x512xf32> to vector<16x128xf32>
      %258 = arith.negf %257 : vector<16x128xf32>
      %259 = math.exp %258 : vector<16x128xf32>
      %cst_104 = arith.constant 1.000000e+00 : f32
      %260 = vector.broadcast %cst_104 : f32 to vector<16x128xf32>
      %261 = arith.addf %260, %259 : vector<16x128xf32>
      %262 = arith.divf %260, %261 : vector<16x128xf32>
      %263 = arith.mulf %254, %235 : vector<16x128xf32>
      %264 = arith.mulf %248, %256 : vector<16x128xf32>
      %265 = arith.addf %263, %264 : vector<16x128xf32>
      %266 = math.tanh %265 : vector<16x128xf32>
      %267 = arith.mulf %262, %266 : vector<16x128xf32>
      %c0_105 = arith.constant 0 : index
      %c0_106 = arith.constant 0 : index
      %268 = vector.load %arg13[%c0_105, %c0_106] : memref<16x128xf32, #tpu.memory_space<vmem>>, vector<16x128xf32>
      tpu.vector_store %arg13[%c0_105, %c0_106], %267 {strides = array<i32>} : memref<16x128xf32, #tpu.memory_space<vmem>>, vector<16x128xf32>,
      %c0_107 = arith.constant 0 : index
      %c0_108 = arith.constant 0 : index
      %269 = vector.load %arg14[%c0_107, %c0_108] : memref<16x128xf32, #tpu.memory_space<vmem>>, vector<16x128xf32>
      tpu.vector_store %arg14[%c0_107, %c0_108], %265 {strides = array<i32>} : memref<16x128xf32, #tpu.memory_space<vmem>>, vector<16x128xf32>,
      %270 = arith.truncf %267 : vector<16x128xf32> to vector<16x128xbf16>
      %c0_109 = arith.constant 0 : index
      %c0_110 = arith.constant 0 : index
      %271 = vector.load %arg10[%c0_109, %c0_110] : memref<128x256xbf16, #tpu.memory_space<vmem>>, vector<128x256xbf16>
      %cst_111 = arith.constant dense<0.000000e+00> : vector<16x256xf32>
      %272 = tpu.matmul %270, %271, %cst_111 {dimension_numbers = #tpu.dot_dimension_numbers<[1], [0], [0], [1], [0, 0, 1, 1], [], []>} : vector<16x128xbf16>, vector<128x256xbf16>, vector<16x256xf32> -> vector<16x256xf32>
      %273 = arith.addf %272, %8 : vector<16x256xf32>
      %274 = arith.index_cast %232 : i32 to index
      %c0_112 = arith.constant 0 : index
      %c0_113 = arith.constant 0 : index
      %275 = vector.load %arg12[%274, %c0_112, %c0_113] : memref<8x16x256xf32, #tpu.memory_space<vmem>>, vector<1x16x256xf32>
      %276 = vector.shape_cast %275 : vector<1x16x256xf32> to vector<16x256xf32>
      %277 = vector.shape_cast %273 : vector<16x256xf32> to vector<1x16x256xf32>
      tpu.vector_store %arg12[%274, %c0_112, %c0_113], %277 {strides = array<i32>} : memref<8x16x256xf32, #tpu.memory_space<vmem>>, vector<1x16x256xf32>,
      %278 = arith.index_cast %232 : i32 to index
      %279 = memref.load %arg0[%278] : memref<8xi32, #tpu.memory_space<smem>>
      %c0_i32_114 = arith.constant 0 : i32
      %280 = arith.cmpi ne, %279, %c0_i32_114 : i32
      %281 = arith.extui %280 : i1 to i32
      %c0_i32_115 = arith.constant 0 : i32
      %282 = arith.cmpi ne, %281, %c0_i32_115 : i32
      scf.if %282 {
        %286 = arith.index_cast %232 : i32 to index
        %c0_117 = arith.constant 0 : index
        %c0_118 = arith.constant 0 : index
        %287 = vector.load %arg2[%286, %c0_117, %c0_118] : memref<8x16x128xbf16, #tpu.memory_space<vmem>>, vector<1x16x128xbf16>
        %288 = vector.shape_cast %287 : vector<1x16x128xbf16> to vector<16x128xbf16>
        %c0_119 = arith.constant 0 : index
        %c0_120 = arith.constant 0 : index
        %289 = vector.load %arg15[%c0_119, %c0_120] : memref<16x128xbf16, #tpu.memory_space<vmem>>, vector<16x128xbf16>
        tpu.vector_store %arg15[%c0_119, %c0_120], %288 {strides = array<i32>} : memref<16x128xbf16, #tpu.memory_space<vmem>>, vector<16x128xbf16>,
      } else {
      }
      %true = arith.constant true
      %283 = arith.xori %280, %true : i1
      %284 = arith.extui %283 : i1 to i32
      %c0_i32_116 = arith.constant 0 : i32
      %285 = arith.cmpi ne, %284, %c0_i32_116 : i32
      scf.if %285 {
        %cst_117 = arith.constant dense<0xFF800000> : vector<16xf32>
        %286 = vector.multi_reduction <maximumf>, %273, %cst_117 [1] : vector<16x256xf32> to vector<16xf32>
        %287 = vector.shape_cast %286 : vector<16xf32> to vector<16x1xf32>
        %288 = tpu.iota {dimensions = array<i32: 1>} : vector<16x256xi32>
        %289 = vector.broadcast %287 : vector<16x1xf32> to vector<16x256xf32>
        %290 = arith.cmpf oeq, %273, %289 : vector<16x256xf32>
        %c256_i32 = arith.constant 256 : i32
        %291 = vector.broadcast %c256_i32 : i32 to vector<16x256xi32>
        %292 = arith.select %290, %288, %291 : vector<16x256xi1>, vector<16x256xi32>
        %cst_118 = arith.constant dense<2147483647> : vector<16xi32>
        %293 = vector.multi_reduction <minsi>, %292, %cst_118 [1] : vector<16x256xi32> to vector<16xi32>
        %294 = vector.shape_cast %293 : vector<16xi32> to vector<16x1xi32>
        %295 = tpu.iota {dimensions = array<i32: 1>} : vector<16x256xi32>
        %296 = vector.broadcast %294 : vector<16x1xi32> to vector<16x256xi32>
        %297 = arith.cmpi eq, %295, %296 : vector<16x256xi32>
        %298 = arith.extui %297 : vector<16x256xi1> to vector<16x256xi32>
        %299 = arith.sitofp %298 : vector<16x256xi32> to vector<16x256xf32>
        %300 = arith.truncf %299 : vector<16x256xf32> to vector<16x256xbf16>
        %c0_119 = arith.constant 0 : index
        %c0_120 = arith.constant 0 : index
        %301 = vector.load %arg3[%c0_119, %c0_120] : memref<256x128xbf16, #tpu.memory_space<vmem>>, vector<256x128xbf16>
        %cst_121 = arith.constant dense<0.000000e+00> : vector<16x128xf32>
        %302 = tpu.matmul %300, %301, %cst_121 {dimension_numbers = #tpu.dot_dimension_numbers<[1], [0], [0], [1], [0, 0, 1, 1], [], []>} : vector<16x256xbf16>, vector<256x128xbf16>, vector<16x128xf32> -> vector<16x128xf32>
        %303 = arith.truncf %302 : vector<16x128xf32> to vector<16x128xbf16>
        %c0_122 = arith.constant 0 : index
        %c0_123 = arith.constant 0 : index
        %304 = vector.load %arg15[%c0_122, %c0_123] : memref<16x128xbf16, #tpu.memory_space<vmem>>, vector<16x128xbf16>
        tpu.vector_store %arg15[%c0_122, %c0_123], %303 {strides = array<i32>} : memref<16x128xbf16, #tpu.memory_space<vmem>>, vector<16x128xbf16>,
      } else {
      }
    }
    %c7_i32_87 = arith.constant 7 : i32
    return
  }
}

</mosaic_0001>

<llo_original>
// kernel: seq2seq_forward.1
$region0: #{seq2seq_forward.1}
  #allocation0 [shape = 'u32[]', space=smem, size = 0x4, offset = 0x4, fixed_abs, tag = 'smem constant byte address 0x4 - core index']
  #allocation1 [shape = 'u32[144,128]{1,0:T(1,128)}', space=vmem, size = 0x12000, scoped, tag = 'internal scratch']
  #allocation2 [shape = 'f32[16,128]{1,0:T(8,128)}', space=vmem, size = 0x2000, scoped, tag = 'scratch operand']
  #allocation3 [shape = 'f32[16,128]{1,0:T(8,128)}', space=vmem, size = 0x2000, scoped, tag = 'scratch operand']
  #allocation4 [shape = 'bf16[16,128]{1,0:T(8,128)(2,1)}', space=vmem, size = 0x1000, scoped, tag = 'scratch operand']
  %s0 = inlined_call_operand.vmem [shape: s32[8], index: 0, kind: input, shape index: {}]
  %s1 = inlined_call_operand.vmem [shape: bf16[6,16,128], index: 1, kind: input, shape index: {}]
  %s2 = inlined_call_operand.vmem [shape: bf16[8,16,128], index: 2, kind: input, shape index: {}]
  %s3 = inlined_call_operand.vmem [shape: bf16[256,128], index: 3, kind: input, shape index: {}]
  %s4 = inlined_call_operand.vmem [shape: bf16[128,512], index: 4, kind: input, shape index: {}]
  %s5 = inlined_call_operand.vmem [shape: bf16[128,512], index: 5, kind: input, shape index: {}]
  %s6 = inlined_call_operand.vmem [shape: f32[1,512], index: 6, kind: input, shape index: {}]
  %s7 = inlined_call_operand.vmem [shape: bf16[128,512], index: 7, kind: input, shape index: {}]
  %s8 = inlined_call_operand.vmem [shape: bf16[128,512], index: 8, kind: input, shape index: {}]
  %s9 = inlined_call_operand.vmem [shape: f32[1,512], index: 9, kind: input, shape index: {}]
  %s10 = inlined_call_operand.vmem [shape: bf16[128,256], index: 10, kind: input, shape index: {}]
  %s11 = inlined_call_operand.vmem [shape: f32[1,256], index: 11, kind: input, shape index: {}]
  %s12 = inlined_call_operand.hbm [shape: f32[8,16,256], index: 12, kind: output, shape index: {}]
  %s13 = sld [smem:[#allocation0]]
  $region77: #{seq2seq_forward.1} parent=0
    _
  %s15 = ssub.s32 1, %s13
  %s16 = scalar_select 0, %s15, %s13
  $region1: #{seq2seq_forward.1} parent=0
    #allocation5 [shape = 'u8[512]{0}', space=smem, size = 0x200, scoped, tag = 'input window, operand 0, single buffered']
    #allocation6 [shape = 's32[1]{0}', space=sflag, size = 0x4, scoped, tag = 'scoped memory for seq2seq_forward.1']
    #allocation7 [shape = 's32[1]{0}', space=sflag, size = 0x4, scoped, tag = 'scoped memory for seq2seq_forward.1']
    #allocation8 [shape = 'u8[131072]{0}', space=vmem, size = 0x20000, scoped, tag = 'output window, operand 0, single buffered']
    %17 = vsyncpa [#allocation7], 0
    %18 = vsyncpa [#allocation6], 0
    // Predicated region
    $region2: #{seq2seq_forward.1} parent=1 // pred_check
      _
    $region3: #{seq2seq_forward.1} parent=1 // pred_check_branch
      %20 = sbr.rel (0) target = $region5
    $region4: #{seq2seq_forward.1} parent=1 // pred_region
      %s22 = ssub.s32 16, 16
      %23 = vsyncadd [#allocation7], %s22
      %s25 = sshll.u32 %s0, 4
      %s26 = int_to_ptr.vmem [resolvable:$true] %s25
      %28 = dma.vmem_to_smem %s26, 16, [#allocation5], [#allocation7]
    $region5: #{seq2seq_forward.1} parent=1 // pred_fallthru
      _
    // Predicated region
    $region6: #{seq2seq_forward.1} parent=1 // pred_check
      _
    $region7: #{seq2seq_forward.1} parent=1 // pred_check_branch
      %30 = sbr.rel (0) target = $region9
    $region8: #{seq2seq_forward.1} parent=1 // pred_region
      _
    $region9: #{seq2seq_forward.1} parent=1 // pred_fallthru
      _
    // Predicated region
    $region10: #{seq2seq_forward.1} parent=1 // pred_check
      _
    $region11: #{seq2seq_forward.1} parent=1 // pred_check_branch
      %32 = sbr.rel (0) target = $region13
    $region12: #{seq2seq_forward.1} parent=1 // pred_region
      _
    $region13: #{seq2seq_forward.1} parent=1 // pred_fallthru
      _
    // Predicated region
    $region14: #{seq2seq_forward.1} parent=1 // pred_check
      _
    $region15: #{seq2seq_forward.1} parent=1 // pred_check_branch
      %34 = sbr.rel (0) target = $region17
    $region16: #{seq2seq_forward.1} parent=1 // pred_region
      _
    $region17: #{seq2seq_forward.1} parent=1 // pred_fallthru
      _
    // Predicated region
    $region18: #{seq2seq_forward.1} parent=1 // pred_check
      _
    $region19: #{seq2seq_forward.1} parent=1 // pred_check_branch
      %36 = sbr.rel (0) target = $region21
    $region20: #{seq2seq_forward.1} parent=1 // pred_region
      _
    $region21: #{seq2seq_forward.1} parent=1 // pred_fallthru
      _
    // Predicated region
    $region22: #{seq2seq_forward.1} parent=1 // pred_check
      _
    $region23: #{seq2seq_forward.1} parent=1 // pred_check_branch
      %38 = sbr.rel (0) target = $region25
    $region24: #{seq2seq_forward.1} parent=1 // pred_region
      _
    $region25: #{seq2seq_forward.1} parent=1 // pred_fallthru
      _
    // Predicated region
    $region26: #{seq2seq_forward.1} parent=1 // pred_check
      _
    $region27: #{seq2seq_forward.1} parent=1 // pred_check_branch
      %40 = sbr.rel (0) target = $region29
    $region28: #{seq2seq_forward.1} parent=1 // pred_region
      _
    $region29: #{seq2seq_forward.1} parent=1 // pred_fallthru
      _
    // Predicated region
    $region30: #{seq2seq_forward.1} parent=1 // pred_check
      _
    $region31: #{seq2seq_forward.1} parent=1 // pred_check_branch
      %42 = sbr.rel (0) target = $region33
    $region32: #{seq2seq_forward.1} parent=1 // pred_region
      _
    $region33: #{seq2seq_forward.1} parent=1 // pred_fallthru
      _
    // Predicated region
    $region34: #{seq2seq_forward.1} parent=1 // pred_check
      _
    $region35: #{seq2seq_forward.1} parent=1 // pred_check_branch
      %44 = sbr.rel (0) target = $region37
    $region36: #{seq2seq_forward.1} parent=1 // pred_region
      _
    $region37: #{seq2seq_forward.1} parent=1 // pred_fallthru
      _
    // Predicated region
    $region38: #{seq2seq_forward.1} parent=1 // pred_check
      _
    $region39: #{seq2seq_forward.1} parent=1 // pred_check_branch
      %46 = sbr.rel (0) target = $region41
    $region40: #{seq2seq_forward.1} parent=1 // pred_region
      _
    $region41: #{seq2seq_forward.1} parent=1 // pred_fallthru
      _
    // Predicated region
    $region42: #{seq2seq_forward.1} parent=1 // pred_check
      _
    $region43: #{seq2seq_forward.1} parent=1 // pred_check_branch
      %48 = sbr.rel (0) target = $region45
    $region44: #{seq2seq_forward.1} parent=1 // pred_region
      _
    $region45: #{seq2seq_forward.1} parent=1 // pred_fallthru
      _
    // Predicated region
    $region46: #{seq2seq_forward.1} parent=1 // pred_check
      _
    $region47: #{seq2seq_forward.1} parent=1 // pred_check_branch
      %50 = sbr.rel (0) target = $region49
    $region48: #{seq2seq_forward.1} parent=1 // pred_region
      _
    $region49: #{seq2seq_forward.1} parent=1 // pred_fallthru
      _
    // Predicated region
    $region50: #{seq2seq_forward.1} parent=1 // pred_check
      _
    $region51: #{seq2seq_forward.1} parent=1 // pred_check_branch
      %52 = sbr.rel (0) target = $region53
    $region52: #{seq2seq_forward.1} parent=1 // pred_region
      %53 = dma.done [#allocation7], 16
    $region53: #{seq2seq_forward.1} parent=1 // pred_fallthru
      _
    %54 = sfence
    %v56 = vld [vmem:[%s6] sm:$0xf]
    %v58 = vlaneseq
    %v59 = vshrl.u32 %v58, 7
    %v60 = vsub.s32 0, %v59
    %v61 = vrot.slane %v56, %v60
    %v62 = vlaneseq
    %v63 = vshrl.u32 %v62, 7
    %v64 = vsub.s32 1, %v63
    %v65 = vrot.slane %v56, %v64
    %v66 = vlaneseq
    %v67 = vshrl.u32 %v66, 7
    %v68 = vsub.s32 2, %v67
    %v69 = vrot.slane %v56, %v68
    %v70 = vlaneseq
    %v71 = vshrl.u32 %v70, 7
    %v72 = vsub.s32 3, %v71
    %v73 = vrot.slane %v56, %v72
    %v78 = vld [vmem:[%s9] sm:$0xf]
    %v80 = vlaneseq
    %v81 = vshrl.u32 %v80, 7
    %v82 = vsub.s32 0, %v81
    %v83 = vrot.slane %v78, %v82
    %v84 = vlaneseq
    %v85 = vshrl.u32 %v84, 7
    %v86 = vsub.s32 1, %v85
    %v87 = vrot.slane %v78, %v86
    %v88 = vlaneseq
    %v89 = vshrl.u32 %v88, 7
    %v90 = vsub.s32 2, %v89
    %v91 = vrot.slane %v78, %v90
    %v92 = vlaneseq
    %v93 = vshrl.u32 %v92, 7
    %v94 = vsub.s32 3, %v93
    %v95 = vrot.slane %v78, %v94
    %v100 = vld [vmem:[%s11] sm:$0x3]
    %v102 = vlaneseq
    %v103 = vshrl.u32 %v102, 7
    %v104 = vsub.s32 0, %v103
    %v105 = vrot.slane %v100, %v104
    %v106 = vlaneseq
    %v107 = vshrl.u32 %v106, 7
    %v108 = vsub.s32 1, %v107
    %v109 = vrot.slane %v100, %v108
    %v112 = vld [vmem:[%s1] sm:$0xf]
    %v113 = vld [vmem:[%s1 + $0x4] sm:$0xf]
    %v114 = vld [vmem:[%s4] sm:$0xff]
    %v115 = vld [vmem:[%s4 + $0x8] sm:$0xff]
    %v116 = vld [vmem:[%s4 + $0x10] sm:$0xff]
    %v117 = vld [vmem:[%s4 + $0x18] sm:$0xff]
    %v118 = vld [vmem:[%s4 + $0x20] sm:$0xff]
    %v119 = vld [vmem:[%s4 + $0x28] sm:$0xff]
    %v120 = vld [vmem:[%s4 + $0x30] sm:$0xff]
    %v121 = vld [vmem:[%s4 + $0x38] sm:$0xff]
    %v122 = vld [vmem:[%s4 + $0x40] sm:$0xff]
    %v123 = vld [vmem:[%s4 + $0x48] sm:$0xff]
    %v124 = vld [vmem:[%s4 + $0x50] sm:$0xff]
    %v125 = vld [vmem:[%s4 + $0x58] sm:$0xff]
    %v126 = vld [vmem:[%s4 + $0x60] sm:$0xff]
    %v127 = vld [vmem:[%s4 + $0x68] sm:$0xff]
    %v128 = vld [vmem:[%s4 + $0x70] sm:$0xff]
    %v129 = vld [vmem:[%s4 + $0x78] sm:$0xff]
    %v130 = vld [vmem:[%s4 + $0x80] sm:$0xff]
    %v131 = vld [vmem:[%s4 + $0x88] sm:$0xff]
    %v132 = vld [vmem:[%s4 + $0x90] sm:$0xff]
    %v133 = vld [vmem:[%s4 + $0x98] sm:$0xff]
    %v134 = vld [vmem:[%s4 + $0xa0] sm:$0xff]
    %v135 = vld [vmem:[%s4 + $0xa8] sm:$0xff]
    %v136 = vld [vmem:[%s4 + $0xb0] sm:$0xff]
    %v137 = vld [vmem:[%s4 + $0xb8] sm:$0xff]
    %v138 = vld [vmem:[%s4 + $0xc0] sm:$0xff]
    %v139 = vld [vmem:[%s4 + $0xc8] sm:$0xff]
    %v140 = vld [vmem:[%s4 + $0xd0] sm:$0xff]
    %v141 = vld [vmem:[%s4 + $0xd8] sm:$0xff]
    %v142 = vld [vmem:[%s4 + $0xe0] sm:$0xff]
    %v143 = vld [vmem:[%s4 + $0xe8] sm:$0xff]
    %v144 = vld [vmem:[%s4 + $0xf0] sm:$0xff]
    %v145 = vld [vmem:[%s4 + $0xf8] sm:$0xff]
    %v146 = vld [vmem:[%s5] sm:$0xff]
    %v147 = vld [vmem:[%s5 + $0x8] sm:$0xff]
    %v148 = vld [vmem:[%s5 + $0x10] sm:$0xff]
    %v149 = vld [vmem:[%s5 + $0x18] sm:$0xff]
    %v150 = vld [vmem:[%s5 + $0x20] sm:$0xff]
    %v151 = vld [vmem:[%s5 + $0x28] sm:$0xff]
    %v152 = vld [vmem:[%s5 + $0x30] sm:$0xff]
    %v153 = vld [vmem:[%s5 + $0x38] sm:$0xff]
    %v154 = vld [vmem:[%s5 + $0x40] sm:$0xff]
    %v155 = vld [vmem:[%s5 + $0x48] sm:$0xff]
    %v156 = vld [vmem:[%s5 + $0x50] sm:$0xff]
    %v157 = vld [vmem:[%s5 + $0x58] sm:$0xff]
    %v158 = vld [vmem:[%s5 + $0x60] sm:$0xff]
    %v159 = vld [vmem:[%s5 + $0x68] sm:$0xff]
    %v160 = vld [vmem:[%s5 + $0x70] sm:$0xff]
    %v161 = vld [vmem:[%s5 + $0x78] sm:$0xff]
    %v162 = vld [vmem:[%s5 + $0x80] sm:$0xff]
    %v163 = vld [vmem:[%s5 + $0x88] sm:$0xff]
    %v164 = vld [vmem:[%s5 + $0x90] sm:$0xff]
    %v165 = vld [vmem:[%s5 + $0x98] sm:$0xff]
    %v166 = vld [vmem:[%s5 + $0xa0] sm:$0xff]
    %v167 = vld [vmem:[%s5 + $0xa8] sm:$0xff]
    %v168 = vld [vmem:[%s5 + $0xb0] sm:$0xff]
    %v169 = vld [vmem:[%s5 + $0xb8] sm:$0xff]
    %v170 = vld [vmem:[%s5 + $0xc0] sm:$0xff]
    %v171 = vld [vmem:[%s5 + $0xc8] sm:$0xff]
    %v172 = vld [vmem:[%s5 + $0xd0] sm:$0xff]
    %v173 = vld [vmem:[%s5 + $0xd8] sm:$0xff]
    %v174 = vld [vmem:[%s5 + $0xe0] sm:$0xff]
    %v175 = vld [vmem:[%s5 + $0xe8] sm:$0xff]
    %v176 = vld [vmem:[%s5 + $0xf0] sm:$0xff]
    %v177 = vld [vmem:[%s5 + $0xf8] sm:$0xff]
    %v210 = vunpack.c.l.b16 %v146
    %v211 = vunpack.c.h.b16 %v146
    %v212 = vunpack.c.l.b16 %v147
    %v213 = vunpack.c.h.b16 %v147
    %v214 = vunpack.c.l.b16 %v148
    %v215 = vunpack.c.h.b16 %v148
    %v216 = vunpack.c.l.b16 %v149
    %v217 = vunpack.c.h.b16 %v149
    %v218 = vunpack.c.l.b16 %v150
    %v219 = vunpack.c.h.b16 %v150
    %v220 = vunpack.c.l.b16 %v151
    %v221 = vunpack.c.h.b16 %v151
    %v222 = vunpack.c.l.b16 %v152
    %v223 = vunpack.c.h.b16 %v152
    %v224 = vunpack.c.l.b16 %v153
    %v225 = vunpack.c.h.b16 %v153
    %v226 = vunpack.c.l.b16 %v154
    %v227 = vunpack.c.h.b16 %v154
    %v228 = vunpack.c.l.b16 %v155
    %v229 = vunpack.c.h.b16 %v155
    %v230 = vunpack.c.l.b16 %v156
    %v231 = vunpack.c.h.b16 %v156
    %v232 = vunpack.c.l.b16 %v157
    %v233 = vunpack.c.h.b16 %v157
    %v234 = vunpack.c.l.b16 %v158
    %v235 = vunpack.c.h.b16 %v158
    %v236 = vunpack.c.l.b16 %v159
    %v237 = vunpack.c.h.b16 %v159
    %v238 = vunpack.c.l.b16 %v160
    %v239 = vunpack.c.h.b16 %v160
    %v240 = vunpack.c.l.b16 %v161
    %v241 = vunpack.c.h.b16 %v161
    %v242 = vunpack.c.l.b16 %v162
    %v243 = vunpack.c.h.b16 %v162
    %v244 = vunpack.c.l.b16 %v163
    %v245 = vunpack.c.h.b16 %v163
    %v246 = vunpack.c.l.b16 %v164
    %v247 = vunpack.c.h.b16 %v164
    %v248 = vunpack.c.l.b16 %v165
    %v249 = vunpack.c.h.b16 %v165
    %v250 = vunpack.c.l.b16 %v166
    %v251 = vunpack.c.h.b16 %v166
    %v252 = vunpack.c.l.b16 %v167
    %v253 = vunpack.c.h.b16 %v167
    %v254 = vunpack.c.l.b16 %v168
    %v255 = vunpack.c.h.b16 %v168
    %v256 = vunpack.c.l.b16 %v169
    %v257 = vunpack.c.h.b16 %v169
    %v258 = vunpack.c.l.b16 %v170
    %v259 = vunpack.c.h.b16 %v170
    %v260 = vunpack.c.l.b16 %v171
    %v261 = vunpack.c.h.b16 %v171
    %v262 = vunpack.c.l.b16 %v172
    %v263 = vunpack.c.h.b16 %v172
    %v264 = vunpack.c.l.b16 %v173
    %v265 = vunpack.c.h.b16 %v173
    %v266 = vunpack.c.l.b16 %v174
    %v267 = vunpack.c.h.b16 %v174
    %v268 = vunpack.c.l.b16 %v175
    %v269 = vunpack.c.h.b16 %v175
    %v270 = vunpack.c.l.b16 %v176
    %v271 = vunpack.c.h.b16 %v176
    %v272 = vunpack.c.l.b16 %v177
    %v273 = vunpack.c.h.b16 %v177
    %v274 = vpack.c.b16 %v214, %v210
    %v275 = vpack.c.b16 %v215, %v211
    %v276 = vpack.c.b16 %v216, %v212
    %v277 = vpack.c.b16 %v217, %v213
    %v278 = vpack.c.b16 %v222, %v218
    %v279 = vpack.c.b16 %v223, %v219
    %v280 = vpack.c.b16 %v224, %v220
    %v281 = vpack.c.b16 %v225, %v221
    %v282 = vpack.c.b16 %v230, %v226
    %v283 = vpack.c.b16 %v231, %v227
    %v284 = vpack.c.b16 %v232, %v228
    %v285 = vpack.c.b16 %v233, %v229
    %v286 = vpack.c.b16 %v238, %v234
    %v287 = vpack.c.b16 %v239, %v235
    %v288 = vpack.c.b16 %v240, %v236
    %v289 = vpack.c.b16 %v241, %v237
    %v290 = vpack.c.b16 %v246, %v242
    %v291 = vpack.c.b16 %v247, %v243
    %v292 = vpack.c.b16 %v248, %v244
    %v293 = vpack.c.b16 %v249, %v245
    %v294 = vpack.c.b16 %v254, %v250
    %v295 = vpack.c.b16 %v255, %v251
    %v296 = vpack.c.b16 %v256, %v252
    %v297 = vpack.c.b16 %v257, %v253
    %v298 = vpack.c.b16 %v262, %v258
    %v299 = vpack.c.b16 %v263, %v259
    %v300 = vpack.c.b16 %v264, %v260
    %v301 = vpack.c.b16 %v265, %v261
    %v302 = vpack.c.b16 %v270, %v266
    %v303 = vpack.c.b16 %v271, %v267
    %v304 = vpack.c.b16 %v272, %v268
    %v305 = vpack.c.b16 %v273, %v269
    %338 = vmatprep.subr.bf16.mxu0 %v303
    %339 = vmatpush1.bf16.msra.mxu0 %v302
    %340 = vmatprep.subr.bf16.mxu0 %v299
    %341 = vmatpush1.bf16.msra.mxu0 %v298
    %342 = vmatprep.subr.bf16.mxu0 %v295
    %343 = vmatpush1.bf16.msra.mxu0 %v294
    %344 = vmatprep.subr.bf16.mxu0 %v291
    %345 = vmatpush1.bf16.msra.mxu0 %v290
    %346 = vmatprep.subr.bf16.mxu0 %v287
    %347 = vmatpush1.bf16.msra.mxu0 %v286
    %348 = vmatprep.subr.bf16.mxu0 %v283
    %349 = vmatpush1.bf16.msra.mxu0 %v282
    %350 = vmatprep.subr.bf16.mxu0 %v279
    %351 = vmatpush1.bf16.msra.mxu0 %v278
    %352 = vmatprep.subr.bf16.mxu0 %v275
    %353 = vmatpush1.bf16.msra.mxu0 %v274
    %354 = vmatprep.subr.bf16.mxu0 0
    %355 = vmatpush2.bf16.msra.mxu0 0
    %356 = vmatprep.subr.bf16.mxu0 0
    %357 = vmatpush2.bf16.msra.mxu0 0
    %358 = vmatprep.subr.bf16.mxu0 0
    %359 = vmatpush2.bf16.msra.mxu0 0
    %360 = vmatprep.subr.bf16.mxu0 0
    %361 = vmatpush2.bf16.msra.mxu0 0
    %362 = vmatprep.subr.bf16.mxu0 0
    %363 = vmatpush2.bf16.msra.mxu0 0
    %364 = vmatprep.subr.bf16.mxu0 0
    %365 = vmatpush2.bf16.msra.mxu0 0
    %366 = vmatprep.subr.bf16.mxu0 0
    %367 = vmatpush2.bf16.msra.mxu0 0
    %368 = vmatprep.subr.bf16.mxu0 0
    %369 = vmatpush2.bf16.msra.mxu0 0
    %370 = vmatprep.mubr.bf16.mxu0 0
    %371 = vmatmul.mubr.bf16.gmra.mxu0 0
    %v372 = vpop.f32.mrf.mxu0
    %v373 = vadd.f32 0.0, %v372
    %v374 = vpop.f32.mrf.mxu0
    %v375 = vadd.f32 0.0, %v374
    %v376 = vpop.f32.mrf.mxu0
    %v377 = vadd.f32 0.0, %v376
    %v378 = vpop.f32.mrf.mxu0
    %v379 = vadd.f32 0.0, %v378
    %380 = vdwg.mxu0
    %381 = vmatprep.subr.bf16.mxu0 %v305
    %382 = vmatpush1.bf16.msra.mxu0 %v304
    %383 = vmatprep.subr.bf16.mxu0 %v301
    %384 = vmatpush1.bf16.msra.mxu0 %v300
    %385 = vmatprep.subr.bf16.mxu0 %v297
    %386 = vmatpush1.bf16.msra.mxu0 %v296
    %387 = vmatprep.subr.bf16.mxu0 %v293
    %388 = vmatpush1.bf16.msra.mxu0 %v292
    %389 = vmatprep.subr.bf16.mxu0 %v289
    %390 = vmatpush1.bf16.msra.mxu0 %v288
    %391 = vmatprep.subr.bf16.mxu0 %v285
    %392 = vmatpush1.bf16.msra.mxu0 %v284
    %393 = vmatprep.subr.bf16.mxu0 %v281
    %394 = vmatpush1.bf16.msra.mxu0 %v280
    %395 = vmatprep.subr.bf16.mxu0 %v277
    %396 = vmatpush1.bf16.msra.mxu0 %v276
    %397 = vmatprep.subr.bf16.mxu0 0
    %398 = vmatpush2.bf16.msra.mxu0 0
    %399 = vmatprep.subr.bf16.mxu0 0
    %400 = vmatpush2.bf16.msra.mxu0 0
    %401 = vmatprep.subr.bf16.mxu0 0
    %402 = vmatpush2.bf16.msra.mxu0 0
    %403 = vmatprep.subr.bf16.mxu0 0
    %404 = vmatpush2.bf16.msra.mxu0 0
    %405 = vmatprep.subr.bf16.mxu0 0
    %406 = vmatpush2.bf16.msra.mxu0 0
    %407 = vmatprep.subr.bf16.mxu0 0
    %408 = vmatpush2.bf16.msra.mxu0 0
    %409 = vmatprep.subr.bf16.mxu0 0
    %410 = vmatpush2.bf16.msra.mxu0 0
    %411 = vmatprep.subr.bf16.mxu0 0
    %412 = vmatpush2.bf16.msra.mxu0 0
    %413 = vmatprep.mubr.bf16.mxu0 0
    %414 = vmatmul.mubr.bf16.gmra.mxu0 0
    %v415 = vpop.f32.mrf.mxu0
    %v416 = vadd.f32 0.0, %v415
    %v417 = vpop.f32.mrf.mxu0
    %v418 = vadd.f32 0.0, %v417
    %v419 = vpop.f32.mrf.mxu0
    %v420 = vadd.f32 0.0, %v419
    %v421 = vpop.f32.mrf.mxu0
    %v422 = vadd.f32 0.0, %v421
    %423 = vdwg.mxu0
    %v426 = vunpack.c.l.b16 %v112
    %v427 = vunpack.c.l.b16 %v113
    %v428 = vpack.c.b16 %v427, %v426
    %v462 = vunpack.c.l.b16 %v114
    %v463 = vunpack.c.h.b16 %v114
    %v464 = vunpack.c.l.b16 %v115
    %v465 = vunpack.c.h.b16 %v115
    %v466 = vunpack.c.l.b16 %v116
    %v467 = vunpack.c.h.b16 %v116
    %v468 = vunpack.c.l.b16 %v117
    %v469 = vunpack.c.h.b16 %v117
    %v470 = vunpack.c.l.b16 %v118
    %v471 = vunpack.c.h.b16 %v118
    %v472 = vunpack.c.l.b16 %v119
    %v473 = vunpack.c.h.b16 %v119
    %v474 = vunpack.c.l.b16 %v120
    %v475 = vunpack.c.h.b16 %v120
    %v476 = vunpack.c.l.b16 %v121
    %v477 = vunpack.c.h.b16 %v121
    %v478 = vunpack.c.l.b16 %v122
    %v479 = vunpack.c.h.b16 %v122
    %v480 = vunpack.c.l.b16 %v123
    %v481 = vunpack.c.h.b16 %v123
    %v482 = vunpack.c.l.b16 %v124
    %v483 = vunpack.c.h.b16 %v124
    %v484 = vunpack.c.l.b16 %v125
    %v485 = vunpack.c.h.b16 %v125
    %v486 = vunpack.c.l.b16 %v126
    %v487 = vunpack.c.h.b16 %v126
    %v488 = vunpack.c.l.b16 %v127
    %v489 = vunpack.c.h.b16 %v127
    %v490 = vunpack.c.l.b16 %v128
    %v491 = vunpack.c.h.b16 %v128
    %v492 = vunpack.c.l.b16 %v129
    %v493 = vunpack.c.h.b16 %v129
    %v494 = vunpack.c.l.b16 %v130
    %v495 = vunpack.c.h.b16 %v130
    %v496 = vunpack.c.l.b16 %v131
    %v497 = vunpack.c.h.b16 %v131
    %v498 = vunpack.c.l.b16 %v132
    %v499 = vunpack.c.h.b16 %v132
    %v500 = vunpack.c.l.b16 %v133
    %v501 = vunpack.c.h.b16 %v133
    %v502 = vunpack.c.l.b16 %v134
    %v503 = vunpack.c.h.b16 %v134
    %v504 = vunpack.c.l.b16 %v135
    %v505 = vunpack.c.h.b16 %v135
    %v506 = vunpack.c.l.b16 %v136
    %v507 = vunpack.c.h.b16 %v136
    %v508 = vunpack.c.l.b16 %v137
    %v509 = vunpack.c.h.b16 %v137
    %v510 = vunpack.c.l.b16 %v138
    %v511 = vunpack.c.h.b16 %v138
    %v512 = vunpack.c.l.b16 %v139
    %v513 = vunpack.c.h.b16 %v139
    %v514 = vunpack.c.l.b16 %v140
    %v515 = vunpack.c.h.b16 %v140
    %v516 = vunpack.c.l.b16 %v141
    %v517 = vunpack.c.h.b16 %v141
    %v518 = vunpack.c.l.b16 %v142
    %v519 = vunpack.c.h.b16 %v142
    %v520 = vunpack.c.l.b16 %v143
    %v521 = vunpack.c.h.b16 %v143
    %v522 = vunpack.c.l.b16 %v144
    %v523 = vunpack.c.h.b16 %v144
    %v524 = vunpack.c.l.b16 %v145
    %v525 = vunpack.c.h.b16 %v145
    %v526 = vpack.c.b16 %v466, %v462
    %v527 = vpack.c.b16 %v467, %v463
    %v528 = vpack.c.b16 %v468, %v464
    %v529 = vpack.c.b16 %v469, %v465
    %v530 = vpack.c.b16 %v474, %v470
    %v531 = vpack.c.b16 %v475, %v471
    %v532 = vpack.c.b16 %v476, %v472
    %v533 = vpack.c.b16 %v477, %v473
    %v534 = vpack.c.b16 %v482, %v478
    %v535 = vpack.c.b16 %v483, %v479
    %v536 = vpack.c.b16 %v484, %v480
    %v537 = vpack.c.b16 %v485, %v481
    %v538 = vpack.c.b16 %v490, %v486
    %v539 = vpack.c.b16 %v491, %v487
    %v540 = vpack.c.b16 %v492, %v488
    %v541 = vpack.c.b16 %v493, %v489
    %v542 = vpack.c.b16 %v498, %v494
    %v543 = vpack.c.b16 %v499, %v495
    %v544 = vpack.c.b16 %v500, %v496
    %v545 = vpack.c.b16 %v501, %v497
    %v546 = vpack.c.b16 %v506, %v502
    %v547 = vpack.c.b16 %v507, %v503
    %v548 = vpack.c.b16 %v508, %v504
    %v549 = vpack.c.b16 %v509, %v505
    %v550 = vpack.c.b16 %v514, %v510
    %v551 = vpack.c.b16 %v515, %v511
    %v552 = vpack.c.b16 %v516, %v512
    %v553 = vpack.c.b16 %v517, %v513
    %v554 = vpack.c.b16 %v522, %v518
    %v555 = vpack.c.b16 %v523, %v519
    %v556 = vpack.c.b16 %v524, %v520
    %v557 = vpack.c.b16 %v525, %v521
    %590 = vmatprep.subr.bf16.mxu0 %v555
    %591 = vmatpush1.bf16.msra.mxu0 %v554
    %592 = vmatprep.subr.bf16.mxu0 %v551
    %593 = vmatpush1.bf16.msra.mxu0 %v550
    %594 = vmatprep.subr.bf16.mxu0 %v547
    %595 = vmatpush1.bf16.msra.mxu0 %v546
    %596 = vmatprep.subr.bf16.mxu0 %v543
    %597 = vmatpush1.bf16.msra.mxu0 %v542
    %598 = vmatprep.subr.bf16.mxu0 %v539
    %599 = vmatpush1.bf16.msra.mxu0 %v538
    %600 = vmatprep.subr.bf16.mxu0 %v535
    %601 = vmatpush1.bf16.msra.mxu0 %v534
    %602 = vmatprep.subr.bf16.mxu0 %v531
    %603 = vmatpush1.bf16.msra.mxu0 %v530
    %604 = vmatprep.subr.bf16.mxu0 %v527
    %605 = vmatpush1.bf16.msra.mxu0 %v526
    %606 = vmatprep.subr.bf16.mxu0 0
    %607 = vmatpush2.bf16.msra.mxu0 0
    %608 = vmatprep.subr.bf16.mxu0 0
    %609 = vmatpush2.bf16.msra.mxu0 0
    %610 = vmatprep.subr.bf16.mxu0 0
    %611 = vmatpush2.bf16.msra.mxu0 0
    %612 = vmatprep.subr.bf16.mxu0 0
    %613 = vmatpush2.bf16.msra.mxu0 0
    %614 = vmatprep.subr.bf16.mxu0 0
    %615 = vmatpush2.bf16.msra.mxu0 0
    %616 = vmatprep.subr.bf16.mxu0 0
    %617 = vmatpush2.bf16.msra.mxu0 0
    %618 = vmatprep.subr.bf16.mxu0 0
    %619 = vmatpush2.bf16.msra.mxu0 0
    %620 = vmatprep.subr.bf16.mxu0 0
    %621 = vmatpush2.bf16.msra.mxu0 0
    %622 = vmatprep.mubr.bf16.mxu0 0
    %623 = vmatmul.mubr.bf16.gmra.mxu0 %v428
    %v624 = vpop.f32.mrf.mxu0
    %v625 = vadd.f32 %v373, %v624
    %v626 = vpop.f32.mrf.mxu0
    %v627 = vadd.f32 %v375, %v626
    %v628 = vpop.f32.mrf.mxu0
    %v629 = vadd.f32 %v377, %v628
    %v630 = vpop.f32.mrf.mxu0
    %v631 = vadd.f32 %v379, %v630
    %632 = vdwg.mxu0
    %633 = vmatprep.subr.bf16.mxu0 %v557
    %634 = vmatpush1.bf16.msra.mxu0 %v556
    %635 = vmatprep.subr.bf16.mxu0 %v553
    %636 = vmatpush1.bf16.msra.mxu0 %v552
    %637 = vmatprep.subr.bf16.mxu0 %v549
    %638 = vmatpush1.bf16.msra.mxu0 %v548
    %639 = vmatprep.subr.bf16.mxu0 %v545
    %640 = vmatpush1.bf16.msra.mxu0 %v544
    %641 = vmatprep.subr.bf16.mxu0 %v541
    %642 = vmatpush1.bf16.msra.mxu0 %v540
    %643 = vmatprep.subr.bf16.mxu0 %v537
    %644 = vmatpush1.bf16.msra.mxu0 %v536
    %645 = vmatprep.subr.bf16.mxu0 %v533
    %646 = vmatpush1.bf16.msra.mxu0 %v532
    %647 = vmatprep.subr.bf16.mxu0 %v529
    %648 = vmatpush1.bf16.msra.mxu0 %v528
    %649 = vmatprep.subr.bf16.mxu0 0
    %650 = vmatpush2.bf16.msra.mxu0 0
    %651 = vmatprep.subr.bf16.mxu0 0
    %652 = vmatpush2.bf16.msra.mxu0 0
    %653 = vmatprep.subr.bf16.mxu0 0
    %654 = vmatpush2.bf16.msra.mxu0 0
    %655 = vmatprep.subr.bf16.mxu0 0
    %656 = vmatpush2.bf16.msra.mxu0 0
    %657 = vmatprep.subr.bf16.mxu0 0
    %658 = vmatpush2.bf16.msra.mxu0 0
    %659 = vmatprep.subr.bf16.mxu0 0
    %660 = vmatpush2.bf16.msra.mxu0 0
    %661 = vmatprep.subr.bf16.mxu0 0
    %662 = vmatpush2.bf16.msra.mxu0 0
    %663 = vmatprep.subr.bf16.mxu0 0
    %664 = vmatpush2.bf16.msra.mxu0 0
    %665 = vmatprep.mubr.bf16.mxu0 0
    %666 = vmatmul.mubr.bf16.gmra.mxu0 %v428
    %v667 = vpop.f32.mrf.mxu0
    %v668 = vadd.f32 %v416, %v667
    %v669 = vpop.f32.mrf.mxu0
    %v670 = vadd.f32 %v418, %v669
    %v671 = vpop.f32.mrf.mxu0
    %v672 = vadd.f32 %v420, %v671
    %v673 = vpop.f32.mrf.mxu0
    %v674 = vadd.f32 %v422, %v673
    %675 = vdwg.mxu0
    %v676 = vadd.f32 %v625, %v61
    %v677 = vadd.f32 %v627, %v65
    %v678 = vadd.f32 %v668, %v69
    %v679 = vadd.f32 %v670, %v73
    %v680 = vadd.f32 %v629, %v61
    %v681 = vadd.f32 %v631, %v65
    %v682 = vadd.f32 %v672, %v69
    %v683 = vadd.f32 %v674, %v73
    %v684 = vxor.u32 %v676, 2147483648
    %v685 = vxor.u32 %v680, 2147483648
    %v686 = vmul.f32 %v684, 1.442695
    %v687 = vpow.pop %v686
    %v688 = vmul.f32 %v685, 1.442695
    %v689 = vpow.pop %v688
    %v690 = vadd.f32 %v687, 1.0
    %v691 = vadd.f32 %v689, 1.0
    %v692 = vrcp.pop %v690
    %v693 = vmul.f32 1.0, %v692
    %v694 = vrcp.pop %v691
    %v695 = vmul.f32 1.0, %v694
    %v696 = vxor.u32 %v677, 2147483648
    %v697 = vxor.u32 %v681, 2147483648
    %v698 = vmul.f32 %v696, 1.442695
    %v699 = vpow.pop %v698
    %v700 = vmul.f32 %v697, 1.442695
    %v701 = vpow.pop %v700
    %v702 = vadd.f32 %v699, 1.0
    %v703 = vadd.f32 %v701, 1.0
    %v704 = vrcp.pop %v702
    %v705 = vmul.f32 1.0, %v704
    %v706 = vrcp.pop %v703
    %v707 = vmul.f32 1.0, %v706
    %v708 = vtanh.pop %v678
    %v709 = vtanh.pop %v682
    %v710 = vxor.u32 %v679, 2147483648
    %v711 = vxor.u32 %v683, 2147483648
    %v712 = vmul.f32 %v710, 1.442695
    %v713 = vpow.pop %v712
    %v714 = vmul.f32 %v711, 1.442695
    %v715 = vpow.pop %v714
    %v716 = vadd.f32 %v713, 1.0
    %v717 = vadd.f32 %v715, 1.0
    %v718 = vrcp.pop %v716
    %v719 = vmul.f32 1.0, %v718
    %v720 = vrcp.pop %v717
    %v721 = vmul.f32 1.0, %v720
    %v722 = vmul.f32 %v705, 0.0
    %v723 = vmul.f32 %v707, 0.0
    %v724 = vmul.f32 %v693, %v708
    %v725 = vmul.f32 %v695, %v709
    %v726 = vadd.f32 %v722, %v724
    %v727 = vadd.f32 %v723, %v725
    %v728 = vtanh.pop %v726
    %v729 = vtanh.pop %v727
    %v730 = vmul.f32 %v719, %v728
    %v731 = vmul.f32 %v721, %v729
    %s732 = scalar_lea.vmem %s1, 8
    %v733 = vld [vmem:[%s732] sm:$0xf]
    %v734 = vld [vmem:[%s732 + $0x4] sm:$0xf]
    %v735 = vpack.c.bf16 %v731, %v730
    %736 = vmatprep.subr.bf16.mxu0 %v303
    %737 = vmatpush1.bf16.msra.mxu0 %v302
    %738 = vmatprep.subr.bf16.mxu0 %v299
    %739 = vmatpush1.bf16.msra.mxu0 %v298
    %740 = vmatprep.subr.bf16.mxu0 %v295
    %741 = vmatpush1.bf16.msra.mxu0 %v294
    %742 = vmatprep.subr.bf16.mxu0 %v291
    %743 = vmatpush1.bf16.msra.mxu0 %v290
    %744 = vmatprep.subr.bf16.mxu0 %v287
    %745 = vmatpush1.bf16.msra.mxu0 %v286
    %746 = vmatprep.subr.bf16.mxu0 %v283
    %747 = vmatpush1.bf16.msra.mxu0 %v282
    %748 = vmatprep.subr.bf16.mxu0 %v279
    %749 = vmatpush1.bf16.msra.mxu0 %v278
    %750 = vmatprep.subr.bf16.mxu0 %v275
    %751 = vmatpush1.bf16.msra.mxu0 %v274
    %752 = vmatprep.subr.bf16.mxu0 0
    %753 = vmatpush2.bf16.msra.mxu0 0
    %754 = vmatprep.subr.bf16.mxu0 0
    %755 = vmatpush2.bf16.msra.mxu0 0
    %756 = vmatprep.subr.bf16.mxu0 0
    %757 = vmatpush2.bf16.msra.mxu0 0
    %758 = vmatprep.subr.bf16.mxu0 0
    %759 = vmatpush2.bf16.msra.mxu0 0
    %760 = vmatprep.subr.bf16.mxu0 0
    %761 = vmatpush2.bf16.msra.mxu0 0
    %762 = vmatprep.subr.bf16.mxu0 0
    %763 = vmatpush2.bf16.msra.mxu0 0
    %764 = vmatprep.subr.bf16.mxu0 0
    %765 = vmatpush2.bf16.msra.mxu0 0
    %766 = vmatprep.subr.bf16.mxu0 0
    %767 = vmatpush2.bf16.msra.mxu0 0
    %768 = vmatprep.mubr.bf16.mxu0 0
    %769 = vmatmul.mubr.bf16.gmra.mxu0 %v735
    %v770 = vpop.f32.mrf.mxu0
    %v771 = vadd.f32 0.0, %v770
    %v772 = vpop.f32.mrf.mxu0
    %v773 = vadd.f32 0.0, %v772
    %v774 = vpop.f32.mrf.mxu0
    %v775 = vadd.f32 0.0, %v774
    %v776 = vpop.f32.mrf.mxu0
    %v777 = vadd.f32 0.0, %v776
    %778 = vdwg.mxu0
    %779 = vmatprep.subr.bf16.mxu0 %v305
    %780 = vmatpush1.bf16.msra.mxu0 %v304
    %781 = vmatprep.subr.bf16.mxu0 %v301
    %782 = vmatpush1.bf16.msra.mxu0 %v300
    %783 = vmatprep.subr.bf16.mxu0 %v297
    %784 = vmatpush1.bf16.msra.mxu0 %v296
    %785 = vmatprep.subr.bf16.mxu0 %v293
    %786 = vmatpush1.bf16.msra.mxu0 %v292
    %787 = vmatprep.subr.bf16.mxu0 %v289
    %788 = vmatpush1.bf16.msra.mxu0 %v288
    %789 = vmatprep.subr.bf16.mxu0 %v285
    %790 = vmatpush1.bf16.msra.mxu0 %v284
    %791 = vmatprep.subr.bf16.mxu0 %v281
    %792 = vmatpush1.bf16.msra.mxu0 %v280
    %793 = vmatprep.subr.bf16.mxu0 %v277
    %794 = vmatpush1.bf16.msra.mxu0 %v276
    %795 = vmatprep.subr.bf16.mxu0 0
    %796 = vmatpush2.bf16.msra.mxu0 0
    %797 = vmatprep.subr.bf16.mxu0 0
    %798 = vmatpush2.bf16.msra.mxu0 0
    %799 = vmatprep.subr.bf16.mxu0 0
    %800 = vmatpush2.bf16.msra.mxu0 0
    %801 = vmatprep.subr.bf16.mxu0 0
    %802 = vmatpush2.bf16.msra.mxu0 0
    %803 = vmatprep.subr.bf16.mxu0 0
    %804 = vmatpush2.bf16.msra.mxu0 0
    %805 = vmatprep.subr.bf16.mxu0 0
    %806 = vmatpush2.bf16.msra.mxu0 0
    %807 = vmatprep.subr.bf16.mxu0 0
    %808 = vmatpush2.bf16.msra.mxu0 0
    %809 = vmatprep.subr.bf16.mxu0 0
    %810 = vmatpush2.bf16.msra.mxu0 0
    %811 = vmatprep.mubr.bf16.mxu0 0
    %812 = vmatmul.mubr.bf16.gmra.mxu0 %v735
    %v813 = vpop.f32.mrf.mxu0
    %v814 = vadd.f32 0.0, %v813
    %v815 = vpop.f32.mrf.mxu0
    %v816 = vadd.f32 0.0, %v815
    %v817 = vpop.f32.mrf.mxu0
    %v818 = vadd.f32 0.0, %v817
    %v819 = vpop.f32.mrf.mxu0
    %v820 = vadd.f32 0.0, %v819
    %821 = vdwg.mxu0
    %v824 = vunpack.c.l.b16 %v733
    %v825 = vunpack.c.l.b16 %v734
    %v826 = vpack.c.b16 %v825, %v824
    %828 = vmatprep.subr.bf16.mxu0 %v555
    %829 = vmatpush1.bf16.msra.mxu0 %v554
    %830 = vmatprep.subr.bf16.mxu0 %v551
    %831 = vmatpush1.bf16.msra.mxu0 %v550
    %832 = vmatprep.subr.bf16.mxu0 %v547
    %833 = vmatpush1.bf16.msra.mxu0 %v546
    %834 = vmatprep.subr.bf16.mxu0 %v543
    %835 = vmatpush1.bf16.msra.mxu0 %v542
    %836 = vmatprep.subr.bf16.mxu0 %v539
    %837 = vmatpush1.bf16.msra.mxu0 %v538
    %838 = vmatprep.subr.bf16.mxu0 %v535
    %839 = vmatpush1.bf16.msra.mxu0 %v534
    %840 = vmatprep.subr.bf16.mxu0 %v531
    %841 = vmatpush1.bf16.msra.mxu0 %v530
    %842 = vmatprep.subr.bf16.mxu0 %v527
    %843 = vmatpush1.bf16.msra.mxu0 %v526
    %844 = vmatprep.subr.bf16.mxu0 0
    %845 = vmatpush2.bf16.msra.mxu0 0
    %846 = vmatprep.subr.bf16.mxu0 0
    %847 = vmatpush2.bf16.msra.mxu0 0
    %848 = vmatprep.subr.bf16.mxu0 0
    %849 = vmatpush2.bf16.msra.mxu0 0
    %850 = vmatprep.subr.bf16.mxu0 0
    %851 = vmatpush2.bf16.msra.mxu0 0
    %852 = vmatprep.subr.bf16.mxu0 0
    %853 = vmatpush2.bf16.msra.mxu0 0
    %854 = vmatprep.subr.bf16.mxu0 0
    %855 = vmatpush2.bf16.msra.mxu0 0
    %856 = vmatprep.subr.bf16.mxu0 0
    %857 = vmatpush2.bf16.msra.mxu0 0
    %858 = vmatprep.subr.bf16.mxu0 0
    %859 = vmatpush2.bf16.msra.mxu0 0
    %860 = vmatprep.mubr.bf16.mxu0 0
    %861 = vmatmul.mubr.bf16.gmra.mxu0 %v826
    %v862 = vpop.f32.mrf.mxu0
    %v863 = vadd.f32 %v771, %v862
    %v864 = vpop.f32.mrf.mxu0
    %v865 = vadd.f32 %v773, %v864
    %v866 = vpop.f32.mrf.mxu0
    %v867 = vadd.f32 %v775, %v866
    %v868 = vpop.f32.mrf.mxu0
    %v869 = vadd.f32 %v777, %v868
    %870 = vdwg.mxu0
    %871 = vmatprep.subr.bf16.mxu0 %v557
    %872 = vmatpush1.bf16.msra.mxu0 %v556
    %873 = vmatprep.subr.bf16.mxu0 %v553
    %874 = vmatpush1.bf16.msra.mxu0 %v552
    %875 = vmatprep.subr.bf16.mxu0 %v549
    %876 = vmatpush1.bf16.msra.mxu0 %v548
    %877 = vmatprep.subr.bf16.mxu0 %v545
    %878 = vmatpush1.bf16.msra.mxu0 %v544
    %879 = vmatprep.subr.bf16.mxu0 %v541
    %880 = vmatpush1.bf16.msra.mxu0 %v540
    %881 = vmatprep.subr.bf16.mxu0 %v537
    %882 = vmatpush1.bf16.msra.mxu0 %v536
    %883 = vmatprep.subr.bf16.mxu0 %v533
    %884 = vmatpush1.bf16.msra.mxu0 %v532
    %885 = vmatprep.subr.bf16.mxu0 %v529
    %886 = vmatpush1.bf16.msra.mxu0 %v528
    %887 = vmatprep.subr.bf16.mxu0 0
    %888 = vmatpush2.bf16.msra.mxu0 0
    %889 = vmatprep.subr.bf16.mxu0 0
    %890 = vmatpush2.bf16.msra.mxu0 0
    %891 = vmatprep.subr.bf16.mxu0 0
    %892 = vmatpush2.bf16.msra.mxu0 0
    %893 = vmatprep.subr.bf16.mxu0 0
    %894 = vmatpush2.bf16.msra.mxu0 0
    %895 = vmatprep.subr.bf16.mxu0 0
    %896 = vmatpush2.bf16.msra.mxu0 0
    %897 = vmatprep.subr.bf16.mxu0 0
    %898 = vmatpush2.bf16.msra.mxu0 0
    %899 = vmatprep.subr.bf16.mxu0 0
    %900 = vmatpush2.bf16.msra.mxu0 0
    %901 = vmatprep.subr.bf16.mxu0 0
    %902 = vmatpush2.bf16.msra.mxu0 0
    %903 = vmatprep.mubr.bf16.mxu0 0
    %904 = vmatmul.mubr.bf16.gmra.mxu0 %v826
    %v905 = vpop.f32.mrf.mxu0
    %v906 = vadd.f32 %v814, %v905
    %v907 = vpop.f32.mrf.mxu0
    %v908 = vadd.f32 %v816, %v907
    %v909 = vpop.f32.mrf.mxu0
    %v910 = vadd.f32 %v818, %v909
    %v911 = vpop.f32.mrf.mxu0
    %v912 = vadd.f32 %v820, %v911
    %913 = vdwg.mxu0
    %v914 = vadd.f32 %v863, %v61
    %v915 = vadd.f32 %v865, %v65
    %v916 = vadd.f32 %v906, %v69
    %v917 = vadd.f32 %v908, %v73
    %v918 = vadd.f32 %v867, %v61
    %v919 = vadd.f32 %v869, %v65
    %v920 = vadd.f32 %v910, %v69
    %v921 = vadd.f32 %v912, %v73
    %v922 = vxor.u32 %v914, 2147483648
    %v923 = vxor.u32 %v918, 2147483648
    %v924 = vmul.f32 %v922, 1.442695
    %v925 = vpow.pop %v924
    %v926 = vmul.f32 %v923, 1.442695
    %v927 = vpow.pop %v926
    %v928 = vadd.f32 %v925, 1.0
    %v929 = vadd.f32 %v927, 1.0
    %v930 = vrcp.pop %v928
    %v931 = vmul.f32 1.0, %v930
    %v932 = vrcp.pop %v929
    %v933 = vmul.f32 1.0, %v932
    %v934 = vxor.u32 %v915, 2147483648
    %v935 = vxor.u32 %v919, 2147483648
    %v936 = vmul.f32 %v934, 1.442695
    %v937 = vpow.pop %v936
    %v938 = vmul.f32 %v935, 1.442695
    %v939 = vpow.pop %v938
    %v940 = vadd.f32 %v937, 1.0
    %v941 = vadd.f32 %v939, 1.0
    %v942 = vrcp.pop %v940
    %v943 = vmul.f32 1.0, %v942
    %v944 = vrcp.pop %v941
    %v945 = vmul.f32 1.0, %v944
    %v946 = vtanh.pop %v916
    %v947 = vtanh.pop %v920
    %v948 = vxor.u32 %v917, 2147483648
    %v949 = vxor.u32 %v921, 2147483648
    %v950 = vmul.f32 %v948, 1.442695
    %v951 = vpow.pop %v950
    %v952 = vmul.f32 %v949, 1.442695
    %v953 = vpow.pop %v952
    %v954 = vadd.f32 %v951, 1.0
    %v955 = vadd.f32 %v953, 1.0
    %v956 = vrcp.pop %v954
    %v957 = vmul.f32 1.0, %v956
    %v958 = vrcp.pop %v955
    %v959 = vmul.f32 1.0, %v958
    %v960 = vmul.f32 %v943, %v726
    %v961 = vmul.f32 %v945, %v727
    %v962 = vmul.f32 %v931, %v946
    %v963 = vmul.f32 %v933, %v947
    %v964 = vadd.f32 %v960, %v962
    %v965 = vadd.f32 %v961, %v963
    %v966 = vtanh.pop %v964
    %v967 = vtanh.pop %v965
    %v968 = vmul.f32 %v957, %v966
    %v969 = vmul.f32 %v959, %v967
    %s970 = scalar_lea.vmem %s1, 16
    %v971 = vld [vmem:[%s970] sm:$0xf]
    %v972 = vld [vmem:[%s970 + $0x4] sm:$0xf]
    %v973 = vpack.c.bf16 %v969, %v968
    %974 = vmatprep.subr.bf16.mxu0 %v303
    %975 = vmatpush1.bf16.msra.mxu0 %v302
    %976 = vmatprep.subr.bf16.mxu0 %v299
    %977 = vmatpush1.bf16.msra.mxu0 %v298
    %978 = vmatprep.subr.bf16.mxu0 %v295
    %979 = vmatpush1.bf16.msra.mxu0 %v294
    %980 = vmatprep.subr.bf16.mxu0 %v291
    %981 = vmatpush1.bf16.msra.mxu0 %v290
    %982 = vmatprep.subr.bf16.mxu0 %v287
    %983 = vmatpush1.bf16.msra.mxu0 %v286
    %984 = vmatprep.subr.bf16.mxu0 %v283
    %985 = vmatpush1.bf16.msra.mxu0 %v282
    %986 = vmatprep.subr.bf16.mxu0 %v279
    %987 = vmatpush1.bf16.msra.mxu0 %v278
    %988 = vmatprep.subr.bf16.mxu0 %v275
    %989 = vmatpush1.bf16.msra.mxu0 %v274
    %990 = vmatprep.subr.bf16.mxu0 0
    %991 = vmatpush2.bf16.msra.mxu0 0
    %992 = vmatprep.subr.bf16.mxu0 0
    %993 = vmatpush2.bf16.msra.mxu0 0
    %994 = vmatprep.subr.bf16.mxu0 0
    %995 = vmatpush2.bf16.msra.mxu0 0
    %996 = vmatprep.subr.bf16.mxu0 0
    %997 = vmatpush2.bf16.msra.mxu0 0
    %998 = vmatprep.subr.bf16.mxu0 0
    %999 = vmatpush2.bf16.msra.mxu0 0
    %1000 = vmatprep.subr.bf16.mxu0 0
    %1001 = vmatpush2.bf16.msra.mxu0 0
    %1002 = vmatprep.subr.bf16.mxu0 0
    %1003 = vmatpush2.bf16.msra.mxu0 0
    %1004 = vmatprep.subr.bf16.mxu0 0
    %1005 = vmatpush2.bf16.msra.mxu0 0
    %1006 = vmatprep.mubr.bf16.mxu0 0
    %1007 = vmatmul.mubr.bf16.gmra.mxu0 %v973
    %v1008 = vpop.f32.mrf.mxu0
    %v1009 = vadd.f32 0.0, %v1008
    %v1010 = vpop.f32.mrf.mxu0
    %v1011 = vadd.f32 0.0, %v1010
    %v1012 = vpop.f32.mrf.mxu0
    %v1013 = vadd.f32 0.0, %v1012
    %v1014 = vpop.f32.mrf.mxu0
    %v1015 = vadd.f32 0.0, %v1014
    %1016 = vdwg.mxu0
    %1017 = vmatprep.subr.bf16.mxu0 %v305
    %1018 = vmatpush1.bf16.msra.mxu0 %v304
    %1019 = vmatprep.subr.bf16.mxu0 %v301
    %1020 = vmatpush1.bf16.msra.mxu0 %v300
    %1021 = vmatprep.subr.bf16.mxu0 %v297
    %1022 = vmatpush1.bf16.msra.mxu0 %v296
    %1023 = vmatprep.subr.bf16.mxu0 %v293
    %1024 = vmatpush1.bf16.msra.mxu0 %v292
    %1025 = vmatprep.subr.bf16.mxu0 %v289
    %1026 = vmatpush1.bf16.msra.mxu0 %v288
    %1027 = vmatprep.subr.bf16.mxu0 %v285
    %1028 = vmatpush1.bf16.msra.mxu0 %v284
    %1029 = vmatprep.subr.bf16.mxu0 %v281
    %1030 = vmatpush1.bf16.msra.mxu0 %v280
    %1031 = vmatprep.subr.bf16.mxu0 %v277
    %1032 = vmatpush1.bf16.msra.mxu0 %v276
    %1033 = vmatprep.subr.bf16.mxu0 0
    %1034 = vmatpush2.bf16.msra.mxu0 0
    %1035 = vmatprep.subr.bf16.mxu0 0
    %1036 = vmatpush2.bf16.msra.mxu0 0
    %1037 = vmatprep.subr.bf16.mxu0 0
    %1038 = vmatpush2.bf16.msra.mxu0 0
    %1039 = vmatprep.subr.bf16.mxu0 0
    %1040 = vmatpush2.bf16.msra.mxu0 0
    %1041 = vmatprep.subr.bf16.mxu0 0
    %1042 = vmatpush2.bf16.msra.mxu0 0
    %1043 = vmatprep.subr.bf16.mxu0 0
    %1044 = vmatpush2.bf16.msra.mxu0 0
    %1045 = vmatprep.subr.bf16.mxu0 0
    %1046 = vmatpush2.bf16.msra.mxu0 0
    %1047 = vmatprep.subr.bf16.mxu0 0
    %1048 = vmatpush2.bf16.msra.mxu0 0
    %1049 = vmatprep.mubr.bf16.mxu0 0
    %1050 = vmatmul.mubr.bf16.gmra.mxu0 %v973
    %v1051 = vpop.f32.mrf.mxu0
    %v1052 = vadd.f32 0.0, %v1051
    %v1053 = vpop.f32.mrf.mxu0
    %v1054 = vadd.f32 0.0, %v1053
    %v1055 = vpop.f32.mrf.mxu0
    %v1056 = vadd.f32 0.0, %v1055
    %v1057 = vpop.f32.mrf.mxu0
    %v1058 = vadd.f32 0.0, %v1057
    %1059 = vdwg.mxu0
    %v1062 = vunpack.c.l.b16 %v971
    %v1063 = vunpack.c.l.b16 %v972
    %v1064 = vpack.c.b16 %v1063, %v1062
    %1066 = vmatprep.subr.bf16.mxu0 %v555
    %1067 = vmatpush1.bf16.msra.mxu0 %v554
    %1068 = vmatprep.subr.bf16.mxu0 %v551
    %1069 = vmatpush1.bf16.msra.mxu0 %v550
    %1070 = vmatprep.subr.bf16.mxu0 %v547
    %1071 = vmatpush1.bf16.msra.mxu0 %v546
    %1072 = vmatprep.subr.bf16.mxu0 %v543
    %1073 = vmatpush1.bf16.msra.mxu0 %v542
    %1074 = vmatprep.subr.bf16.mxu0 %v539
    %1075 = vmatpush1.bf16.msra.mxu0 %v538
    %1076 = vmatprep.subr.bf16.mxu0 %v535
    %1077 = vmatpush1.bf16.msra.mxu0 %v534
    %1078 = vmatprep.subr.bf16.mxu0 %v531
    %1079 = vmatpush1.bf16.msra.mxu0 %v530
    %1080 = vmatprep.subr.bf16.mxu0 %v527
    %1081 = vmatpush1.bf16.msra.mxu0 %v526
    %1082 = vmatprep.subr.bf16.mxu0 0
    %1083 = vmatpush2.bf16.msra.mxu0 0
    %1084 = vmatprep.subr.bf16.mxu0 0
    %1085 = vmatpush2.bf16.msra.mxu0 0
    %1086 = vmatprep.subr.bf16.mxu0 0
    %1087 = vmatpush2.bf16.msra.mxu0 0
    %1088 = vmatprep.subr.bf16.mxu0 0
    %1089 = vmatpush2.bf16.msra.mxu0 0
    %1090 = vmatprep.subr.bf16.mxu0 0
    %1091 = vmatpush2.bf16.msra.mxu0 0
    %1092 = vmatprep.subr.bf16.mxu0 0
    %1093 = vmatpush2.bf16.msra.mxu0 0
    %1094 = vmatprep.subr.bf16.mxu0 0
    %1095 = vmatpush2.bf16.msra.mxu0 0
    %1096 = vmatprep.subr.bf16.mxu0 0
    %1097 = vmatpush2.bf16.msra.mxu0 0
    %1098 = vmatprep.mubr.bf16.mxu0 0
    %1099 = vmatmul.mubr.bf16.gmra.mxu0 %v1064
    %v1100 = vpop.f32.mrf.mxu0
    %v1101 = vadd.f32 %v1009, %v1100
    %v1102 = vpop.f32.mrf.mxu0
    %v1103 = vadd.f32 %v1011, %v1102
    %v1104 = vpop.f32.mrf.mxu0
    %v1105 = vadd.f32 %v1013, %v1104
    %v1106 = vpop.f32.mrf.mxu0
    %v1107 = vadd.f32 %v1015, %v1106
    %1108 = vdwg.mxu0
    %1109 = vmatprep.subr.bf16.mxu0 %v557
    %1110 = vmatpush1.bf16.msra.mxu0 %v556
    %1111 = vmatprep.subr.bf16.mxu0 %v553
    %1112 = vmatpush1.bf16.msra.mxu0 %v552
    %1113 = vmatprep.subr.bf16.mxu0 %v549
    %1114 = vmatpush1.bf16.msra.mxu0 %v548
    %1115 = vmatprep.subr.bf16.mxu0 %v545
    %1116 = vmatpush1.bf16.msra.mxu0 %v544
    %1117 = vmatprep.subr.bf16.mxu0 %v541
    %1118 = vmatpush1.bf16.msra.mxu0 %v540
    %1119 = vmatprep.subr.bf16.mxu0 %v537
    %1120 = vmatpush1.bf16.msra.mxu0 %v536
    %1121 = vmatprep.subr.bf16.mxu0 %v533
    %1122 = vmatpush1.bf16.msra.mxu0 %v532
    %1123 = vmatprep.subr.bf16.mxu0 %v529
    %1124 = vmatpush1.bf16.msra.mxu0 %v528
    %1125 = vmatprep.subr.bf16.mxu0 0
    %1126 = vmatpush2.bf16.msra.mxu0 0
    %1127 = vmatprep.subr.bf16.mxu0 0
    %1128 = vmatpush2.bf16.msra.mxu0 0
    %1129 = vmatprep.subr.bf16.mxu0 0
    %1130 = vmatpush2.bf16.msra.mxu0 0
    %1131 = vmatprep.subr.bf16.mxu0 0
    %1132 = vmatpush2.bf16.msra.mxu0 0
    %1133 = vmatprep.subr.bf16.mxu0 0
    %1134 = vmatpush2.bf16.msra.mxu0 0
    %1135 = vmatprep.subr.bf16.mxu0 0
    %1136 = vmatpush2.bf16.msra.mxu0 0
    %1137 = vmatprep.subr.bf16.mxu0 0
    %1138 = vmatpush2.bf16.msra.mxu0 0
    %1139 = vmatprep.subr.bf16.mxu0 0
    %1140 = vmatpush2.bf16.msra.mxu0 0
    %1141 = vmatprep.mubr.bf16.mxu0 0
    %1142 = vmatmul.mubr.bf16.gmra.mxu0 %v1064
    %v1143 = vpop.f32.mrf.mxu0
    %v1144 = vadd.f32 %v1052, %v1143
    %v1145 = vpop.f32.mrf.mxu0
    %v1146 = vadd.f32 %v1054, %v1145
    %v1147 = vpop.f32.mrf.mxu0
    %v1148 = vadd.f32 %v1056, %v1147
    %v1149 = vpop.f32.mrf.mxu0
    %v1150 = vadd.f32 %v1058, %v1149
    %1151 = vdwg.mxu0
    %v1152 = vadd.f32 %v1101, %v61
    %v1153 = vadd.f32 %v1103, %v65
    %v1154 = vadd.f32 %v1144, %v69
    %v1155 = vadd.f32 %v1146, %v73
    %v1156 = vadd.f32 %v1105, %v61
    %v1157 = vadd.f32 %v1107, %v65
    %v1158 = vadd.f32 %v1148, %v69
    %v1159 = vadd.f32 %v1150, %v73
    %v1160 = vxor.u32 %v1152, 2147483648
    %v1161 = vxor.u32 %v1156, 2147483648
    %v1162 = vmul.f32 %v1160, 1.442695
    %v1163 = vpow.pop %v1162
    %v1164 = vmul.f32 %v1161, 1.442695
    %v1165 = vpow.pop %v1164
    %v1166 = vadd.f32 %v1163, 1.0
    %v1167 = vadd.f32 %v1165, 1.0
    %v1168 = vrcp.pop %v1166
    %v1169 = vmul.f32 1.0, %v1168
    %v1170 = vrcp.pop %v1167
    %v1171 = vmul.f32 1.0, %v1170
    %v1172 = vxor.u32 %v1153, 2147483648
    %v1173 = vxor.u32 %v1157, 2147483648
    %v1174 = vmul.f32 %v1172, 1.442695
    %v1175 = vpow.pop %v1174
    %v1176 = vmul.f32 %v1173, 1.442695
    %v1177 = vpow.pop %v1176
    %v1178 = vadd.f32 %v1175, 1.0
    %v1179 = vadd.f32 %v1177, 1.0
    %v1180 = vrcp.pop %v1178
    %v1181 = vmul.f32 1.0, %v1180
    %v1182 = vrcp.pop %v1179
    %v1183 = vmul.f32 1.0, %v1182
    %v1184 = vtanh.pop %v1154
    %v1185 = vtanh.pop %v1158
    %v1186 = vxor.u32 %v1155, 2147483648
    %v1187 = vxor.u32 %v1159, 2147483648
    %v1188 = vmul.f32 %v1186, 1.442695
    %v1189 = vpow.pop %v1188
    %v1190 = vmul.f32 %v1187, 1.442695
    %v1191 = vpow.pop %v1190
    %v1192 = vadd.f32 %v1189, 1.0
    %v1193 = vadd.f32 %v1191, 1.0
    %v1194 = vrcp.pop %v1192
    %v1195 = vmul.f32 1.0, %v1194
    %v1196 = vrcp.pop %v1193
    %v1197 = vmul.f32 1.0, %v1196
    %v1198 = vmul.f32 %v1181, %v964
    %v1199 = vmul.f32 %v1183, %v965
    %v1200 = vmul.f32 %v1169, %v1184
    %v1201 = vmul.f32 %v1171, %v1185
    %v1202 = vadd.f32 %v1198, %v1200
    %v1203 = vadd.f32 %v1199, %v1201
    %v1204 = vtanh.pop %v1202
    %v1205 = vtanh.pop %v1203
    %v1206 = vmul.f32 %v1195, %v1204
    %v1207 = vmul.f32 %v1197, %v1205
    %s1208 = scalar_lea.vmem %s1, 24
    %v1209 = vld [vmem:[%s1208] sm:$0xf]
    %v1210 = vld [vmem:[%s1208 + $0x4] sm:$0xf]
    %v1211 = vpack.c.bf16 %v1207, %v1206
    %1212 = vmatprep.subr.bf16.mxu0 %v303
    %1213 = vmatpush1.bf16.msra.mxu0 %v302
    %1214 = vmatprep.subr.bf16.mxu0 %v299
    %1215 = vmatpush1.bf16.msra.mxu0 %v298
    %1216 = vmatprep.subr.bf16.mxu0 %v295
    %1217 = vmatpush1.bf16.msra.mxu0 %v294
    %1218 = vmatprep.subr.bf16.mxu0 %v291
    %1219 = vmatpush1.bf16.msra.mxu0 %v290
    %1220 = vmatprep.subr.bf16.mxu0 %v287
    %1221 = vmatpush1.bf16.msra.mxu0 %v286
    %1222 = vmatprep.subr.bf16.mxu0 %v283
    %1223 = vmatpush1.bf16.msra.mxu0 %v282
    %1224 = vmatprep.subr.bf16.mxu0 %v279
    %1225 = vmatpush1.bf16.msra.mxu0 %v278
    %1226 = vmatprep.subr.bf16.mxu0 %v275
    %1227 = vmatpush1.bf16.msra.mxu0 %v274
    %1228 = vmatprep.subr.bf16.mxu0 0
    %1229 = vmatpush2.bf16.msra.mxu0 0
    %1230 = vmatprep.subr.bf16.mxu0 0
    %1231 = vmatpush2.bf16.msra.mxu0 0
    %1232 = vmatprep.subr.bf16.mxu0 0
    %1233 = vmatpush2.bf16.msra.mxu0 0
    %1234 = vmatprep.subr.bf16.mxu0 0
    %1235 = vmatpush2.bf16.msra.mxu0 0
    %1236 = vmatprep.subr.bf16.mxu0 0
    %1237 = vmatpush2.bf16.msra.mxu0 0
    %1238 = vmatprep.subr.bf16.mxu0 0
    %1239 = vmatpush2.bf16.msra.mxu0 0
    %1240 = vmatprep.subr.bf16.mxu0 0
    %1241 = vmatpush2.bf16.msra.mxu0 0
    %1242 = vmatprep.subr.bf16.mxu0 0
    %1243 = vmatpush2.bf16.msra.mxu0 0
    %1244 = vmatprep.mubr.bf16.mxu0 0
    %1245 = vmatmul.mubr.bf16.gmra.mxu0 %v1211
    %v1246 = vpop.f32.mrf.mxu0
    %v1247 = vadd.f32 0.0, %v1246
    %v1248 = vpop.f32.mrf.mxu0
    %v1249 = vadd.f32 0.0, %v1248
    %v1250 = vpop.f32.mrf.mxu0
    %v1251 = vadd.f32 0.0, %v1250
    %v1252 = vpop.f32.mrf.mxu0
    %v1253 = vadd.f32 0.0, %v1252
    %1254 = vdwg.mxu0
    %1255 = vmatprep.subr.bf16.mxu0 %v305
    %1256 = vmatpush1.bf16.msra.mxu0 %v304
    %1257 = vmatprep.subr.bf16.mxu0 %v301
    %1258 = vmatpush1.bf16.msra.mxu0 %v300
    %1259 = vmatprep.subr.bf16.mxu0 %v297
    %1260 = vmatpush1.bf16.msra.mxu0 %v296
    %1261 = vmatprep.subr.bf16.mxu0 %v293
    %1262 = vmatpush1.bf16.msra.mxu0 %v292
    %1263 = vmatprep.subr.bf16.mxu0 %v289
    %1264 = vmatpush1.bf16.msra.mxu0 %v288
    %1265 = vmatprep.subr.bf16.mxu0 %v285
    %1266 = vmatpush1.bf16.msra.mxu0 %v284
    %1267 = vmatprep.subr.bf16.mxu0 %v281
    %1268 = vmatpush1.bf16.msra.mxu0 %v280
    %1269 = vmatprep.subr.bf16.mxu0 %v277
    %1270 = vmatpush1.bf16.msra.mxu0 %v276
    %1271 = vmatprep.subr.bf16.mxu0 0
    %1272 = vmatpush2.bf16.msra.mxu0 0
    %1273 = vmatprep.subr.bf16.mxu0 0
    %1274 = vmatpush2.bf16.msra.mxu0 0
    %1275 = vmatprep.subr.bf16.mxu0 0
    %1276 = vmatpush2.bf16.msra.mxu0 0
    %1277 = vmatprep.subr.bf16.mxu0 0
    %1278 = vmatpush2.bf16.msra.mxu0 0
    %1279 = vmatprep.subr.bf16.mxu0 0
    %1280 = vmatpush2.bf16.msra.mxu0 0
    %1281 = vmatprep.subr.bf16.mxu0 0
    %1282 = vmatpush2.bf16.msra.mxu0 0
    %1283 = vmatprep.subr.bf16.mxu0 0
    %1284 = vmatpush2.bf16.msra.mxu0 0
    %1285 = vmatprep.subr.bf16.mxu0 0
    %1286 = vmatpush2.bf16.msra.mxu0 0
    %1287 = vmatprep.mubr.bf16.mxu0 0
    %1288 = vmatmul.mubr.bf16.gmra.mxu0 %v1211
    %v1289 = vpop.f32.mrf.mxu0
    %v1290 = vadd.f32 0.0, %v1289
    %v1291 = vpop.f32.mrf.mxu0
    %v1292 = vadd.f32 0.0, %v1291
    %v1293 = vpop.f32.mrf.mxu0
    %v1294 = vadd.f32 0.0, %v1293
    %v1295 = vpop.f32.mrf.mxu0
    %v1296 = vadd.f32 0.0, %v1295
    %1297 = vdwg.mxu0
    %v1300 = vunpack.c.l.b16 %v1209
    %v1301 = vunpack.c.l.b16 %v1210
    %v1302 = vpack.c.b16 %v1301, %v1300
    %1304 = vmatprep.subr.bf16.mxu0 %v555
    %1305 = vmatpush1.bf16.msra.mxu0 %v554
    %1306 = vmatprep.subr.bf16.mxu0 %v551
    %1307 = vmatpush1.bf16.msra.mxu0 %v550
    %1308 = vmatprep.subr.bf16.mxu0 %v547
    %1309 = vmatpush1.bf16.msra.mxu0 %v546
    %1310 = vmatprep.subr.bf16.mxu0 %v543
    %1311 = vmatpush1.bf16.msra.mxu0 %v542
    %1312 = vmatprep.subr.bf16.mxu0 %v539
    %1313 = vmatpush1.bf16.msra.mxu0 %v538
    %1314 = vmatprep.subr.bf16.mxu0 %v535
    %1315 = vmatpush1.bf16.msra.mxu0 %v534
    %1316 = vmatprep.subr.bf16.mxu0 %v531
    %1317 = vmatpush1.bf16.msra.mxu0 %v530
    %1318 = vmatprep.subr.bf16.mxu0 %v527
    %1319 = vmatpush1.bf16.msra.mxu0 %v526
    %1320 = vmatprep.subr.bf16.mxu0 0
    %1321 = vmatpush2.bf16.msra.mxu0 0
    %1322 = vmatprep.subr.bf16.mxu0 0
    %1323 = vmatpush2.bf16.msra.mxu0 0
    %1324 = vmatprep.subr.bf16.mxu0 0
    %1325 = vmatpush2.bf16.msra.mxu0 0
    %1326 = vmatprep.subr.bf16.mxu0 0
    %1327 = vmatpush2.bf16.msra.mxu0 0
    %1328 = vmatprep.subr.bf16.mxu0 0
    %1329 = vmatpush2.bf16.msra.mxu0 0
    %1330 = vmatprep.subr.bf16.mxu0 0
    %1331 = vmatpush2.bf16.msra.mxu0 0
    %1332 = vmatprep.subr.bf16.mxu0 0
    %1333 = vmatpush2.bf16.msra.mxu0 0
    %1334 = vmatprep.subr.bf16.mxu0 0
    %1335 = vmatpush2.bf16.msra.mxu0 0
    %1336 = vmatprep.mubr.bf16.mxu0 0
    %1337 = vmatmul.mubr.bf16.gmra.mxu0 %v1302
    %v1338 = vpop.f32.mrf.mxu0
    %v1339 = vadd.f32 %v1247, %v1338
    %v1340 = vpop.f32.mrf.mxu0
    %v1341 = vadd.f32 %v1249, %v1340
    %v1342 = vpop.f32.mrf.mxu0
    %v1343 = vadd.f32 %v1251, %v1342
    %v1344 = vpop.f32.mrf.mxu0
    %v1345 = vadd.f32 %v1253, %v1344
    %1346 = vdwg.mxu0
    %1347 = vmatprep.subr.bf16.mxu0 %v557
    %1348 = vmatpush1.bf16.msra.mxu0 %v556
    %1349 = vmatprep.subr.bf16.mxu0 %v553
    %1350 = vmatpush1.bf16.msra.mxu0 %v552
    %1351 = vmatprep.subr.bf16.mxu0 %v549
    %1352 = vmatpush1.bf16.msra.mxu0 %v548
    %1353 = vmatprep.subr.bf16.mxu0 %v545
    %1354 = vmatpush1.bf16.msra.mxu0 %v544
    %1355 = vmatprep.subr.bf16.mxu0 %v541
    %1356 = vmatpush1.bf16.msra.mxu0 %v540
    %1357 = vmatprep.subr.bf16.mxu0 %v537
    %1358 = vmatpush1.bf16.msra.mxu0 %v536
    %1359 = vmatprep.subr.bf16.mxu0 %v533
    %1360 = vmatpush1.bf16.msra.mxu0 %v532
    %1361 = vmatprep.subr.bf16.mxu0 %v529
    %1362 = vmatpush1.bf16.msra.mxu0 %v528
    %1363 = vmatprep.subr.bf16.mxu0 0
    %1364 = vmatpush2.bf16.msra.mxu0 0
    %1365 = vmatprep.subr.bf16.mxu0 0
    %1366 = vmatpush2.bf16.msra.mxu0 0
    %1367 = vmatprep.subr.bf16.mxu0 0
    %1368 = vmatpush2.bf16.msra.mxu0 0
    %1369 = vmatprep.subr.bf16.mxu0 0
    %1370 = vmatpush2.bf16.msra.mxu0 0
    %1371 = vmatprep.subr.bf16.mxu0 0
    %1372 = vmatpush2.bf16.msra.mxu0 0
    %1373 = vmatprep.subr.bf16.mxu0 0
    %1374 = vmatpush2.bf16.msra.mxu0 0
    %1375 = vmatprep.subr.bf16.mxu0 0
    %1376 = vmatpush2.bf16.msra.mxu0 0
    %1377 = vmatprep.subr.bf16.mxu0 0
    %1378 = vmatpush2.bf16.msra.mxu0 0
    %1379 = vmatprep.mubr.bf16.mxu0 0
    %1380 = vmatmul.mubr.bf16.gmra.mxu0 %v1302
    %v1381 = vpop.f32.mrf.mxu0
    %v1382 = vadd.f32 %v1290, %v1381
    %v1383 = vpop.f32.mrf.mxu0
    %v1384 = vadd.f32 %v1292, %v1383
    %v1385 = vpop.f32.mrf.mxu0
    %v1386 = vadd.f32 %v1294, %v1385
    %v1387 = vpop.f32.mrf.mxu0
    %v1388 = vadd.f32 %v1296, %v1387
    %1389 = vdwg.mxu0
    %v1390 = vadd.f32 %v1339, %v61
    %v1391 = vadd.f32 %v1341, %v65
    %v1392 = vadd.f32 %v1382, %v69
    %v1393 = vadd.f32 %v1384, %v73
    %v1394 = vadd.f32 %v1343, %v61
    %v1395 = vadd.f32 %v1345, %v65
    %v1396 = vadd.f32 %v1386, %v69
    %v1397 = vadd.f32 %v1388, %v73
    %v1398 = vxor.u32 %v1390, 2147483648
    %v1399 = vxor.u32 %v1394, 2147483648
    %v1400 = vmul.f32 %v1398, 1.442695
    %v1401 = vpow.pop %v1400
    %v1402 = vmul.f32 %v1399, 1.442695
    %v1403 = vpow.pop %v1402
    %v1404 = vadd.f32 %v1401, 1.0
    %v1405 = vadd.f32 %v1403, 1.0
    %v1406 = vrcp.pop %v1404
    %v1407 = vmul.f32 1.0, %v1406
    %v1408 = vrcp.pop %v1405
    %v1409 = vmul.f32 1.0, %v1408
    %v1410 = vxor.u32 %v1391, 2147483648
    %v1411 = vxor.u32 %v1395, 2147483648
    %v1412 = vmul.f32 %v1410, 1.442695
    %v1413 = vpow.pop %v1412
    %v1414 = vmul.f32 %v1411, 1.442695
    %v1415 = vpow.pop %v1414
    %v1416 = vadd.f32 %v1413, 1.0
    %v1417 = vadd.f32 %v1415, 1.0
    %v1418 = vrcp.pop %v1416
    %v1419 = vmul.f32 1.0, %v1418
    %v1420 = vrcp.pop %v1417
    %v1421 = vmul.f32 1.0, %v1420
    %v1422 = vtanh.pop %v1392
    %v1423 = vtanh.pop %v1396
    %v1424 = vxor.u32 %v1393, 2147483648
    %v1425 = vxor.u32 %v1397, 2147483648
    %v1426 = vmul.f32 %v1424, 1.442695
    %v1427 = vpow.pop %v1426
    %v1428 = vmul.f32 %v1425, 1.442695
    %v1429 = vpow.pop %v1428
    %v1430 = vadd.f32 %v1427, 1.0
    %v1431 = vadd.f32 %v1429, 1.0
    %v1432 = vrcp.pop %v1430
    %v1433 = vmul.f32 1.0, %v1432
    %v1434 = vrcp.pop %v1431
    %v1435 = vmul.f32 1.0, %v1434
    %v1436 = vmul.f32 %v1419, %v1202
    %v1437 = vmul.f32 %v1421, %v1203
    %v1438 = vmul.f32 %v1407, %v1422
    %v1439 = vmul.f32 %v1409, %v1423
    %v1440 = vadd.f32 %v1436, %v1438
    %v1441 = vadd.f32 %v1437, %v1439
    %v1442 = vtanh.pop %v1440
    %v1443 = vtanh.pop %v1441
    %v1444 = vmul.f32 %v1433, %v1442
    %v1445 = vmul.f32 %v1435, %v1443
    %s1446 = scalar_lea.vmem %s1, 32
    %v1447 = vld [vmem:[%s1446] sm:$0xf]
    %v1448 = vld [vmem:[%s1446 + $0x4] sm:$0xf]
    %v1449 = vpack.c.bf16 %v1445, %v1444
    %1450 = vmatprep.subr.bf16.mxu0 %v303
    %1451 = vmatpush1.bf16.msra.mxu0 %v302
    %1452 = vmatprep.subr.bf16.mxu0 %v299
    %1453 = vmatpush1.bf16.msra.mxu0 %v298
    %1454 = vmatprep.subr.bf16.mxu0 %v295
    %1455 = vmatpush1.bf16.msra.mxu0 %v294
    %1456 = vmatprep.subr.bf16.mxu0 %v291
    %1457 = vmatpush1.bf16.msra.mxu0 %v290
    %1458 = vmatprep.subr.bf16.mxu0 %v287
    %1459 = vmatpush1.bf16.msra.mxu0 %v286
    %1460 = vmatprep.subr.bf16.mxu0 %v283
    %1461 = vmatpush1.bf16.msra.mxu0 %v282
    %1462 = vmatprep.subr.bf16.mxu0 %v279
    %1463 = vmatpush1.bf16.msra.mxu0 %v278
    %1464 = vmatprep.subr.bf16.mxu0 %v275
    %1465 = vmatpush1.bf16.msra.mxu0 %v274
    %1466 = vmatprep.subr.bf16.mxu0 0
    %1467 = vmatpush2.bf16.msra.mxu0 0
    %1468 = vmatprep.subr.bf16.mxu0 0
    %1469 = vmatpush2.bf16.msra.mxu0 0
    %1470 = vmatprep.subr.bf16.mxu0 0
    %1471 = vmatpush2.bf16.msra.mxu0 0
    %1472 = vmatprep.subr.bf16.mxu0 0
    %1473 = vmatpush2.bf16.msra.mxu0 0
    %1474 = vmatprep.subr.bf16.mxu0 0
    %1475 = vmatpush2.bf16.msra.mxu0 0
    %1476 = vmatprep.subr.bf16.mxu0 0
    %1477 = vmatpush2.bf16.msra.mxu0 0
    %1478 = vmatprep.subr.bf16.mxu0 0
    %1479 = vmatpush2.bf16.msra.mxu0 0
    %1480 = vmatprep.subr.bf16.mxu0 0
    %1481 = vmatpush2.bf16.msra.mxu0 0
    %1482 = vmatprep.mubr.bf16.mxu0 0
    %1483 = vmatmul.mubr.bf16.gmra.mxu0 %v1449
    %v1484 = vpop.f32.mrf.mxu0
    %v1485 = vadd.f32 0.0, %v1484
    %v1486 = vpop.f32.mrf.mxu0
    %v1487 = vadd.f32 0.0, %v1486
    %v1488 = vpop.f32.mrf.mxu0
    %v1489 = vadd.f32 0.0, %v1488
    %v1490 = vpop.f32.mrf.mxu0
    %v1491 = vadd.f32 0.0, %v1490
    %1492 = vdwg.mxu0
    %1493 = vmatprep.subr.bf16.mxu0 %v305
    %1494 = vmatpush1.bf16.msra.mxu0 %v304
    %1495 = vmatprep.subr.bf16.mxu0 %v301
    %1496 = vmatpush1.bf16.msra.mxu0 %v300
    %1497 = vmatprep.subr.bf16.mxu0 %v297
    %1498 = vmatpush1.bf16.msra.mxu0 %v296
    %1499 = vmatprep.subr.bf16.mxu0 %v293
    %1500 = vmatpush1.bf16.msra.mxu0 %v292
    %1501 = vmatprep.subr.bf16.mxu0 %v289
    %1502 = vmatpush1.bf16.msra.mxu0 %v288
    %1503 = vmatprep.subr.bf16.mxu0 %v285
    %1504 = vmatpush1.bf16.msra.mxu0 %v284
    %1505 = vmatprep.subr.bf16.mxu0 %v281
    %1506 = vmatpush1.bf16.msra.mxu0 %v280
    %1507 = vmatprep.subr.bf16.mxu0 %v277
    %1508 = vmatpush1.bf16.msra.mxu0 %v276
    %1509 = vmatprep.subr.bf16.mxu0 0
    %1510 = vmatpush2.bf16.msra.mxu0 0
    %1511 = vmatprep.subr.bf16.mxu0 0
    %1512 = vmatpush2.bf16.msra.mxu0 0
    %1513 = vmatprep.subr.bf16.mxu0 0
    %1514 = vmatpush2.bf16.msra.mxu0 0
    %1515 = vmatprep.subr.bf16.mxu0 0
    %1516 = vmatpush2.bf16.msra.mxu0 0
    %1517 = vmatprep.subr.bf16.mxu0 0
    %1518 = vmatpush2.bf16.msra.mxu0 0
    %1519 = vmatprep.subr.bf16.mxu0 0
    %1520 = vmatpush2.bf16.msra.mxu0 0
    %1521 = vmatprep.subr.bf16.mxu0 0
    %1522 = vmatpush2.bf16.msra.mxu0 0
    %1523 = vmatprep.subr.bf16.mxu0 0
    %1524 = vmatpush2.bf16.msra.mxu0 0
    %1525 = vmatprep.mubr.bf16.mxu0 0
    %1526 = vmatmul.mubr.bf16.gmra.mxu0 %v1449
    %v1527 = vpop.f32.mrf.mxu0
    %v1528 = vadd.f32 0.0, %v1527
    %v1529 = vpop.f32.mrf.mxu0
    %v1530 = vadd.f32 0.0, %v1529
    %v1531 = vpop.f32.mrf.mxu0
    %v1532 = vadd.f32 0.0, %v1531
    %v1533 = vpop.f32.mrf.mxu0
    %v1534 = vadd.f32 0.0, %v1533
    %1535 = vdwg.mxu0
    %v1538 = vunpack.c.l.b16 %v1447
    %v1539 = vunpack.c.l.b16 %v1448
    %v1540 = vpack.c.b16 %v1539, %v1538
    %1542 = vmatprep.subr.bf16.mxu0 %v555
    %1543 = vmatpush1.bf16.msra.mxu0 %v554
    %1544 = vmatprep.subr.bf16.mxu0 %v551
    %1545 = vmatpush1.bf16.msra.mxu0 %v550
    %1546 = vmatprep.subr.bf16.mxu0 %v547
    %1547 = vmatpush1.bf16.msra.mxu0 %v546
    %1548 = vmatprep.subr.bf16.mxu0 %v543
    %1549 = vmatpush1.bf16.msra.mxu0 %v542
    %1550 = vmatprep.subr.bf16.mxu0 %v539
    %1551 = vmatpush1.bf16.msra.mxu0 %v538
    %1552 = vmatprep.subr.bf16.mxu0 %v535
    %1553 = vmatpush1.bf16.msra.mxu0 %v534
    %1554 = vmatprep.subr.bf16.mxu0 %v531
    %1555 = vmatpush1.bf16.msra.mxu0 %v530
    %1556 = vmatprep.subr.bf16.mxu0 %v527
    %1557 = vmatpush1.bf16.msra.mxu0 %v526
    %1558 = vmatprep.subr.bf16.mxu0 0
    %1559 = vmatpush2.bf16.msra.mxu0 0
    %1560 = vmatprep.subr.bf16.mxu0 0
    %1561 = vmatpush2.bf16.msra.mxu0 0
    %1562 = vmatprep.subr.bf16.mxu0 0
    %1563 = vmatpush2.bf16.msra.mxu0 0
    %1564 = vmatprep.subr.bf16.mxu0 0
    %1565 = vmatpush2.bf16.msra.mxu0 0
    %1566 = vmatprep.subr.bf16.mxu0 0
    %1567 = vmatpush2.bf16.msra.mxu0 0
    %1568 = vmatprep.subr.bf16.mxu0 0
    %1569 = vmatpush2.bf16.msra.mxu0 0
    %1570 = vmatprep.subr.bf16.mxu0 0
    %1571 = vmatpush2.bf16.msra.mxu0 0
    %1572 = vmatprep.subr.bf16.mxu0 0
    %1573 = vmatpush2.bf16.msra.mxu0 0
    %1574 = vmatprep.mubr.bf16.mxu0 0
    %1575 = vmatmul.mubr.bf16.gmra.mxu0 %v1540
    %v1576 = vpop.f32.mrf.mxu0
    %v1577 = vadd.f32 %v1485, %v1576
    %v1578 = vpop.f32.mrf.mxu0
    %v1579 = vadd.f32 %v1487, %v1578
    %v1580 = vpop.f32.mrf.mxu0
    %v1581 = vadd.f32 %v1489, %v1580
    %v1582 = vpop.f32.mrf.mxu0
    %v1583 = vadd.f32 %v1491, %v1582
    %1584 = vdwg.mxu0
    %1585 = vmatprep.subr.bf16.mxu0 %v557
    %1586 = vmatpush1.bf16.msra.mxu0 %v556
    %1587 = vmatprep.subr.bf16.mxu0 %v553
    %1588 = vmatpush1.bf16.msra.mxu0 %v552
    %1589 = vmatprep.subr.bf16.mxu0 %v549
    %1590 = vmatpush1.bf16.msra.mxu0 %v548
    %1591 = vmatprep.subr.bf16.mxu0 %v545
    %1592 = vmatpush1.bf16.msra.mxu0 %v544
    %1593 = vmatprep.subr.bf16.mxu0 %v541
    %1594 = vmatpush1.bf16.msra.mxu0 %v540
    %1595 = vmatprep.subr.bf16.mxu0 %v537
    %1596 = vmatpush1.bf16.msra.mxu0 %v536
    %1597 = vmatprep.subr.bf16.mxu0 %v533
    %1598 = vmatpush1.bf16.msra.mxu0 %v532
    %1599 = vmatprep.subr.bf16.mxu0 %v529
    %1600 = vmatpush1.bf16.msra.mxu0 %v528
    %1601 = vmatprep.subr.bf16.mxu0 0
    %1602 = vmatpush2.bf16.msra.mxu0 0
    %1603 = vmatprep.subr.bf16.mxu0 0
    %1604 = vmatpush2.bf16.msra.mxu0 0
    %1605 = vmatprep.subr.bf16.mxu0 0
    %1606 = vmatpush2.bf16.msra.mxu0 0
    %1607 = vmatprep.subr.bf16.mxu0 0
    %1608 = vmatpush2.bf16.msra.mxu0 0
    %1609 = vmatprep.subr.bf16.mxu0 0
    %1610 = vmatpush2.bf16.msra.mxu0 0
    %1611 = vmatprep.subr.bf16.mxu0 0
    %1612 = vmatpush2.bf16.msra.mxu0 0
    %1613 = vmatprep.subr.bf16.mxu0 0
    %1614 = vmatpush2.bf16.msra.mxu0 0
    %1615 = vmatprep.subr.bf16.mxu0 0
    %1616 = vmatpush2.bf16.msra.mxu0 0
    %1617 = vmatprep.mubr.bf16.mxu0 0
    %1618 = vmatmul.mubr.bf16.gmra.mxu0 %v1540
    %v1619 = vpop.f32.mrf.mxu0
    %v1620 = vadd.f32 %v1528, %v1619
    %v1621 = vpop.f32.mrf.mxu0
    %v1622 = vadd.f32 %v1530, %v1621
    %v1623 = vpop.f32.mrf.mxu0
    %v1624 = vadd.f32 %v1532, %v1623
    %v1625 = vpop.f32.mrf.mxu0
    %v1626 = vadd.f32 %v1534, %v1625
    %1627 = vdwg.mxu0
    %v1628 = vadd.f32 %v1577, %v61
    %v1629 = vadd.f32 %v1579, %v65
    %v1630 = vadd.f32 %v1620, %v69
    %v1631 = vadd.f32 %v1622, %v73
    %v1632 = vadd.f32 %v1581, %v61
    %v1633 = vadd.f32 %v1583, %v65
    %v1634 = vadd.f32 %v1624, %v69
    %v1635 = vadd.f32 %v1626, %v73
    %v1636 = vxor.u32 %v1628, 2147483648
    %v1637 = vxor.u32 %v1632, 2147483648
    %v1638 = vmul.f32 %v1636, 1.442695
    %v1639 = vpow.pop %v1638
    %v1640 = vmul.f32 %v1637, 1.442695
    %v1641 = vpow.pop %v1640
    %v1642 = vadd.f32 %v1639, 1.0
    %v1643 = vadd.f32 %v1641, 1.0
    %v1644 = vrcp.pop %v1642
    %v1645 = vmul.f32 1.0, %v1644
    %v1646 = vrcp.pop %v1643
    %v1647 = vmul.f32 1.0, %v1646
    %v1648 = vxor.u32 %v1629, 2147483648
    %v1649 = vxor.u32 %v1633, 2147483648
    %v1650 = vmul.f32 %v1648, 1.442695
    %v1651 = vpow.pop %v1650
    %v1652 = vmul.f32 %v1649, 1.442695
    %v1653 = vpow.pop %v1652
    %v1654 = vadd.f32 %v1651, 1.0
    %v1655 = vadd.f32 %v1653, 1.0
    %v1656 = vrcp.pop %v1654
    %v1657 = vmul.f32 1.0, %v1656
    %v1658 = vrcp.pop %v1655
    %v1659 = vmul.f32 1.0, %v1658
    %v1660 = vtanh.pop %v1630
    %v1661 = vtanh.pop %v1634
    %v1662 = vxor.u32 %v1631, 2147483648
    %v1663 = vxor.u32 %v1635, 2147483648
    %v1664 = vmul.f32 %v1662, 1.442695
    %v1665 = vpow.pop %v1664
    %v1666 = vmul.f32 %v1663, 1.442695
    %v1667 = vpow.pop %v1666
    %v1668 = vadd.f32 %v1665, 1.0
    %v1669 = vadd.f32 %v1667, 1.0
    %v1670 = vrcp.pop %v1668
    %v1671 = vmul.f32 1.0, %v1670
    %v1672 = vrcp.pop %v1669
    %v1673 = vmul.f32 1.0, %v1672
    %v1674 = vmul.f32 %v1657, %v1440
    %v1675 = vmul.f32 %v1659, %v1441
    %v1676 = vmul.f32 %v1645, %v1660
    %v1677 = vmul.f32 %v1647, %v1661
    %v1678 = vadd.f32 %v1674, %v1676
    %v1679 = vadd.f32 %v1675, %v1677
    %v1680 = vtanh.pop %v1678
    %v1681 = vtanh.pop %v1679
    %v1682 = vmul.f32 %v1671, %v1680
    %v1683 = vmul.f32 %v1673, %v1681
    %s1684 = scalar_lea.vmem %s1, 40
    %v1685 = vld [vmem:[%s1684] sm:$0xf]
    %v1686 = vld [vmem:[%s1684 + $0x4] sm:$0xf]
    %v1687 = vpack.c.bf16 %v1683, %v1682
    %1688 = vmatprep.subr.bf16.mxu0 %v303
    %1689 = vmatpush1.bf16.msra.mxu0 %v302
    %1690 = vmatprep.subr.bf16.mxu0 %v299
    %1691 = vmatpush1.bf16.msra.mxu0 %v298
    %1692 = vmatprep.subr.bf16.mxu0 %v295
    %1693 = vmatpush1.bf16.msra.mxu0 %v294
    %1694 = vmatprep.subr.bf16.mxu0 %v291
    %1695 = vmatpush1.bf16.msra.mxu0 %v290
    %1696 = vmatprep.subr.bf16.mxu0 %v287
    %1697 = vmatpush1.bf16.msra.mxu0 %v286
    %1698 = vmatprep.subr.bf16.mxu0 %v283
    %1699 = vmatpush1.bf16.msra.mxu0 %v282
    %1700 = vmatprep.subr.bf16.mxu0 %v279
    %1701 = vmatpush1.bf16.msra.mxu0 %v278
    %1702 = vmatprep.subr.bf16.mxu0 %v275
    %1703 = vmatpush1.bf16.msra.mxu0 %v274
    %1704 = vmatprep.subr.bf16.mxu0 0
    %1705 = vmatpush2.bf16.msra.mxu0 0
    %1706 = vmatprep.subr.bf16.mxu0 0
    %1707 = vmatpush2.bf16.msra.mxu0 0
    %1708 = vmatprep.subr.bf16.mxu0 0
    %1709 = vmatpush2.bf16.msra.mxu0 0
    %1710 = vmatprep.subr.bf16.mxu0 0
    %1711 = vmatpush2.bf16.msra.mxu0 0
    %1712 = vmatprep.subr.bf16.mxu0 0
    %1713 = vmatpush2.bf16.msra.mxu0 0
    %1714 = vmatprep.subr.bf16.mxu0 0
    %1715 = vmatpush2.bf16.msra.mxu0 0
    %1716 = vmatprep.subr.bf16.mxu0 0
    %1717 = vmatpush2.bf16.msra.mxu0 0
    %1718 = vmatprep.subr.bf16.mxu0 0
    %1719 = vmatpush2.bf16.msra.mxu0 0
    %1720 = vmatprep.mubr.bf16.mxu0 0
    %1721 = vmatmul.mubr.bf16.gmra.mxu0 %v1687
    %v1722 = vpop.f32.mrf.mxu0
    %v1723 = vadd.f32 0.0, %v1722
    %v1724 = vpop.f32.mrf.mxu0
    %v1725 = vadd.f32 0.0, %v1724
    %v1726 = vpop.f32.mrf.mxu0
    %v1727 = vadd.f32 0.0, %v1726
    %v1728 = vpop.f32.mrf.mxu0
    %v1729 = vadd.f32 0.0, %v1728
    %1730 = vdwg.mxu0
    %1731 = vmatprep.subr.bf16.mxu0 %v305
    %1732 = vmatpush1.bf16.msra.mxu0 %v304
    %1733 = vmatprep.subr.bf16.mxu0 %v301
    %1734 = vmatpush1.bf16.msra.mxu0 %v300
    %1735 = vmatprep.subr.bf16.mxu0 %v297
    %1736 = vmatpush1.bf16.msra.mxu0 %v296
    %1737 = vmatprep.subr.bf16.mxu0 %v293
    %1738 = vmatpush1.bf16.msra.mxu0 %v292
    %1739 = vmatprep.subr.bf16.mxu0 %v289
    %1740 = vmatpush1.bf16.msra.mxu0 %v288
    %1741 = vmatprep.subr.bf16.mxu0 %v285
    %1742 = vmatpush1.bf16.msra.mxu0 %v284
    %1743 = vmatprep.subr.bf16.mxu0 %v281
    %1744 = vmatpush1.bf16.msra.mxu0 %v280
    %1745 = vmatprep.subr.bf16.mxu0 %v277
    %1746 = vmatpush1.bf16.msra.mxu0 %v276
    %1747 = vmatprep.subr.bf16.mxu0 0
    %1748 = vmatpush2.bf16.msra.mxu0 0
    %1749 = vmatprep.subr.bf16.mxu0 0
    %1750 = vmatpush2.bf16.msra.mxu0 0
    %1751 = vmatprep.subr.bf16.mxu0 0
    %1752 = vmatpush2.bf16.msra.mxu0 0
    %1753 = vmatprep.subr.bf16.mxu0 0
    %1754 = vmatpush2.bf16.msra.mxu0 0
    %1755 = vmatprep.subr.bf16.mxu0 0
    %1756 = vmatpush2.bf16.msra.mxu0 0
    %1757 = vmatprep.subr.bf16.mxu0 0
    %1758 = vmatpush2.bf16.msra.mxu0 0
    %1759 = vmatprep.subr.bf16.mxu0 0
    %1760 = vmatpush2.bf16.msra.mxu0 0
    %1761 = vmatprep.subr.bf16.mxu0 0
    %1762 = vmatpush2.bf16.msra.mxu0 0
    %1763 = vmatprep.mubr.bf16.mxu0 0
    %1764 = vmatmul.mubr.bf16.gmra.mxu0 %v1687
    %v1765 = vpop.f32.mrf.mxu0
    %v1766 = vadd.f32 0.0, %v1765
    %v1767 = vpop.f32.mrf.mxu0
    %v1768 = vadd.f32 0.0, %v1767
    %v1769 = vpop.f32.mrf.mxu0
    %v1770 = vadd.f32 0.0, %v1769
    %v1771 = vpop.f32.mrf.mxu0
    %v1772 = vadd.f32 0.0, %v1771
    %1773 = vdwg.mxu0
    %v1776 = vunpack.c.l.b16 %v1685
    %v1777 = vunpack.c.l.b16 %v1686
    %v1778 = vpack.c.b16 %v1777, %v1776
    %1780 = vmatprep.subr.bf16.mxu0 %v555
    %1781 = vmatpush1.bf16.msra.mxu0 %v554
    %1782 = vmatprep.subr.bf16.mxu0 %v551
    %1783 = vmatpush1.bf16.msra.mxu0 %v550
    %1784 = vmatprep.subr.bf16.mxu0 %v547
    %1785 = vmatpush1.bf16.msra.mxu0 %v546
    %1786 = vmatprep.subr.bf16.mxu0 %v543
    %1787 = vmatpush1.bf16.msra.mxu0 %v542
    %1788 = vmatprep.subr.bf16.mxu0 %v539
    %1789 = vmatpush1.bf16.msra.mxu0 %v538
    %1790 = vmatprep.subr.bf16.mxu0 %v535
    %1791 = vmatpush1.bf16.msra.mxu0 %v534
    %1792 = vmatprep.subr.bf16.mxu0 %v531
    %1793 = vmatpush1.bf16.msra.mxu0 %v530
    %1794 = vmatprep.subr.bf16.mxu0 %v527
    %1795 = vmatpush1.bf16.msra.mxu0 %v526
    %1796 = vmatprep.subr.bf16.mxu0 0
    %1797 = vmatpush2.bf16.msra.mxu0 0
    %1798 = vmatprep.subr.bf16.mxu0 0
    %1799 = vmatpush2.bf16.msra.mxu0 0
    %1800 = vmatprep.subr.bf16.mxu0 0
    %1801 = vmatpush2.bf16.msra.mxu0 0
    %1802 = vmatprep.subr.bf16.mxu0 0
    %1803 = vmatpush2.bf16.msra.mxu0 0
    %1804 = vmatprep.subr.bf16.mxu0 0
    %1805 = vmatpush2.bf16.msra.mxu0 0
    %1806 = vmatprep.subr.bf16.mxu0 0
    %1807 = vmatpush2.bf16.msra.mxu0 0
    %1808 = vmatprep.subr.bf16.mxu0 0
    %1809 = vmatpush2.bf16.msra.mxu0 0
    %1810 = vmatprep.subr.bf16.mxu0 0
    %1811 = vmatpush2.bf16.msra.mxu0 0
    %1812 = vmatprep.mubr.bf16.mxu0 0
    %1813 = vmatmul.mubr.bf16.gmra.mxu0 %v1778
    %v1814 = vpop.f32.mrf.mxu0
    %v1815 = vadd.f32 %v1723, %v1814
    %v1816 = vpop.f32.mrf.mxu0
    %v1817 = vadd.f32 %v1725, %v1816
    %v1818 = vpop.f32.mrf.mxu0
    %v1819 = vadd.f32 %v1727, %v1818
    %v1820 = vpop.f32.mrf.mxu0
    %v1821 = vadd.f32 %v1729, %v1820
    %1822 = vdwg.mxu0
    %1823 = vmatprep.subr.bf16.mxu0 %v557
    %1824 = vmatpush1.bf16.msra.mxu0 %v556
    %1825 = vmatprep.subr.bf16.mxu0 %v553
    %1826 = vmatpush1.bf16.msra.mxu0 %v552
    %1827 = vmatprep.subr.bf16.mxu0 %v549
    %1828 = vmatpush1.bf16.msra.mxu0 %v548
    %1829 = vmatprep.subr.bf16.mxu0 %v545
    %1830 = vmatpush1.bf16.msra.mxu0 %v544
    %1831 = vmatprep.subr.bf16.mxu0 %v541
    %1832 = vmatpush1.bf16.msra.mxu0 %v540
    %1833 = vmatprep.subr.bf16.mxu0 %v537
    %1834 = vmatpush1.bf16.msra.mxu0 %v536
    %1835 = vmatprep.subr.bf16.mxu0 %v533
    %1836 = vmatpush1.bf16.msra.mxu0 %v532
    %1837 = vmatprep.subr.bf16.mxu0 %v529
    %1838 = vmatpush1.bf16.msra.mxu0 %v528
    %1839 = vmatprep.subr.bf16.mxu0 0
    %1840 = vmatpush2.bf16.msra.mxu0 0
    %1841 = vmatprep.subr.bf16.mxu0 0
    %1842 = vmatpush2.bf16.msra.mxu0 0
    %1843 = vmatprep.subr.bf16.mxu0 0
    %1844 = vmatpush2.bf16.msra.mxu0 0
    %1845 = vmatprep.subr.bf16.mxu0 0
    %1846 = vmatpush2.bf16.msra.mxu0 0
    %1847 = vmatprep.subr.bf16.mxu0 0
    %1848 = vmatpush2.bf16.msra.mxu0 0
    %1849 = vmatprep.subr.bf16.mxu0 0
    %1850 = vmatpush2.bf16.msra.mxu0 0
    %1851 = vmatprep.subr.bf16.mxu0 0
    %1852 = vmatpush2.bf16.msra.mxu0 0
    %1853 = vmatprep.subr.bf16.mxu0 0
    %1854 = vmatpush2.bf16.msra.mxu0 0
    %1855 = vmatprep.mubr.bf16.mxu0 0
    %1856 = vmatmul.mubr.bf16.gmra.mxu0 %v1778
    %v1857 = vpop.f32.mrf.mxu0
    %v1858 = vadd.f32 %v1766, %v1857
    %v1859 = vpop.f32.mrf.mxu0
    %v1860 = vadd.f32 %v1768, %v1859
    %v1861 = vpop.f32.mrf.mxu0
    %v1862 = vadd.f32 %v1770, %v1861
    %v1863 = vpop.f32.mrf.mxu0
    %v1864 = vadd.f32 %v1772, %v1863
    %1865 = vdwg.mxu0
    %v1866 = vadd.f32 %v1815, %v61
    %v1867 = vadd.f32 %v1817, %v65
    %v1868 = vadd.f32 %v1858, %v69
    %v1869 = vadd.f32 %v1860, %v73
    %v1870 = vadd.f32 %v1819, %v61
    %v1871 = vadd.f32 %v1821, %v65
    %v1872 = vadd.f32 %v1862, %v69
    %v1873 = vadd.f32 %v1864, %v73
    %v1874 = vxor.u32 %v1866, 2147483648
    %v1875 = vxor.u32 %v1870, 2147483648
    %v1876 = vmul.f32 %v1874, 1.442695
    %v1877 = vpow.pop %v1876
    %v1878 = vmul.f32 %v1875, 1.442695
    %v1879 = vpow.pop %v1878
    %v1880 = vadd.f32 %v1877, 1.0
    %v1881 = vadd.f32 %v1879, 1.0
    %v1882 = vrcp.pop %v1880
    %v1883 = vmul.f32 1.0, %v1882
    %v1884 = vrcp.pop %v1881
    %v1885 = vmul.f32 1.0, %v1884
    %v1886 = vxor.u32 %v1867, 2147483648
    %v1887 = vxor.u32 %v1871, 2147483648
    %v1888 = vmul.f32 %v1886, 1.442695
    %v1889 = vpow.pop %v1888
    %v1890 = vmul.f32 %v1887, 1.442695
    %v1891 = vpow.pop %v1890
    %v1892 = vadd.f32 %v1889, 1.0
    %v1893 = vadd.f32 %v1891, 1.0
    %v1894 = vrcp.pop %v1892
    %v1895 = vmul.f32 1.0, %v1894
    %v1896 = vrcp.pop %v1893
    %v1897 = vmul.f32 1.0, %v1896
    %v1898 = vtanh.pop %v1868
    %v1899 = vtanh.pop %v1872
    %v1900 = vxor.u32 %v1869, 2147483648
    %v1901 = vxor.u32 %v1873, 2147483648
    %v1902 = vmul.f32 %v1900, 1.442695
    %v1903 = vpow.pop %v1902
    %v1904 = vmul.f32 %v1901, 1.442695
    %v1905 = vpow.pop %v1904
    %v1906 = vadd.f32 %v1903, 1.0
    %v1907 = vadd.f32 %v1905, 1.0
    %v1908 = vrcp.pop %v1906
    %v1909 = vmul.f32 1.0, %v1908
    %v1910 = vrcp.pop %v1907
    %v1911 = vmul.f32 1.0, %v1910
    %v1912 = vmul.f32 %v1895, %v1678
    %v1913 = vmul.f32 %v1897, %v1679
    %v1914 = vmul.f32 %v1883, %v1898
    %v1915 = vmul.f32 %v1885, %v1899
    %v1916 = vadd.f32 %v1912, %v1914
    %v1917 = vadd.f32 %v1913, %v1915
    %v1918 = vtanh.pop %v1916
    %v1919 = vtanh.pop %v1917
    %v1920 = vmul.f32 %v1909, %v1918
    %v1921 = vmul.f32 %v1911, %v1919
    %1922 = vst [vmem:[#allocation2] sm:$0xff] %v1920
    %1923 = vst [vmem:[#allocation2 + $0x8] sm:$0xff] %v1921
    %1924 = vst [vmem:[#allocation3] sm:$0xff] %v1916
    %1925 = vst [vmem:[#allocation3 + $0x8] sm:$0xff] %v1917
    %1926 = vst [vmem:[#allocation8] sm:$0xff] 0.0
    %1927 = vst [vmem:[#allocation8 + $0x8] sm:$0xff] 0.0
    %1928 = vst [vmem:[#allocation8 + $0x10] sm:$0xff] 0.0
    %1929 = vst [vmem:[#allocation8 + $0x18] sm:$0xff] 0.0
    %v1930 = vld [vmem:[%s2] sm:$0xf]
    %v1931 = vld [vmem:[%s2 + $0x4] sm:$0xf]
    %1932 = vst [vmem:[#allocation4] sm:$0xf] %v1930
    %1933 = vst [vmem:[#allocation4 + $0x4] sm:$0xf] %v1931
    loop: start=0, step=1, limit=7
    $region54: #{seq2seq_forward.1} parent=1 // loop_pre_header
      _
    $region55: #{seq2seq_forward.1} parent=1 // loop_header
      %s1935 = sphi 0, %s1939
      %p1936 = scmp.ge.s32.totalorder %s1935, 7
    $region56: #{seq2seq_forward.1} parent=1 // loop_header_branch
      %1938 = sbr.rel (%p1936) target = $region60
    $region57: #{seq2seq_forward.1} parent=1 // loop_body
      %s1940 = sadd.s32 %s1935, 1
      %v1941 = vld [vmem:[#allocation4] sm:$0xf]
      %v1942 = vld [vmem:[#allocation4 + $0x4] sm:$0xf]
      %v1943 = vld [vmem:[#allocation2] sm:$0xff]
      %v1944 = vld [vmem:[#allocation2 + $0x8] sm:$0xff]
      %v1945 = vld [vmem:[#allocation3] sm:$0xff]
      %v1946 = vld [vmem:[#allocation3 + $0x8] sm:$0xff]
      %v1947 = vld [vmem:[%s7] sm:$0xff]
      %v1948 = vld [vmem:[%s7 + $0x8] sm:$0xff]
      %v1949 = vld [vmem:[%s7 + $0x10] sm:$0xff]
      %v1950 = vld [vmem:[%s7 + $0x18] sm:$0xff]
      %v1951 = vld [vmem:[%s7 + $0x20] sm:$0xff]
      %v1952 = vld [vmem:[%s7 + $0x28] sm:$0xff]
      %v1953 = vld [vmem:[%s7 + $0x30] sm:$0xff]
      %v1954 = vld [vmem:[%s7 + $0x38] sm:$0xff]
      %v1955 = vld [vmem:[%s7 + $0x40] sm:$0xff]
      %v1956 = vld [vmem:[%s7 + $0x48] sm:$0xff]
      %v1957 = vld [vmem:[%s7 + $0x50] sm:$0xff]
      %v1958 = vld [vmem:[%s7 + $0x58] sm:$0xff]
      %v1959 = vld [vmem:[%s7 + $0x60] sm:$0xff]
      %v1960 = vld [vmem:[%s7 + $0x68] sm:$0xff]
      %v1961 = vld [vmem:[%s7 + $0x70] sm:$0xff]
      %v1962 = vld [vmem:[%s7 + $0x78] sm:$0xff]
      %v1963 = vld [vmem:[%s7 + $0x80] sm:$0xff]
      %v1964 = vld [vmem:[%s7 + $0x88] sm:$0xff]
      %v1965 = vld [vmem:[%s7 + $0x90] sm:$0xff]
      %v1966 = vld [vmem:[%s7 + $0x98] sm:$0xff]
      %v1967 = vld [vmem:[%s7 + $0xa0] sm:$0xff]
      %v1968 = vld [vmem:[%s7 + $0xa8] sm:$0xff]
      %v1969 = vld [vmem:[%s7 + $0xb0] sm:$0xff]
      %v1970 = vld [vmem:[%s7 + $0xb8] sm:$0xff]
      %v1971 = vld [vmem:[%s7 + $0xc0] sm:$0xff]
      %v1972 = vld [vmem:[%s7 + $0xc8] sm:$0xff]
      %v1973 = vld [vmem:[%s7 + $0xd0] sm:$0xff]
      %v1974 = vld [vmem:[%s7 + $0xd8] sm:$0xff]
      %v1975 = vld [vmem:[%s7 + $0xe0] sm:$0xff]
      %v1976 = vld [vmem:[%s7 + $0xe8] sm:$0xff]
      %v1977 = vld [vmem:[%s7 + $0xf0] sm:$0xff]
      %v1978 = vld [vmem:[%s7 + $0xf8] sm:$0xff]
      %v1979 = vpack.c.bf16 %v1944, %v1943
      %v1980 = vld [vmem:[%s8] sm:$0xff]
      %v1981 = vld [vmem:[%s8 + $0x8] sm:$0xff]
      %v1982 = vld [vmem:[%s8 + $0x10] sm:$0xff]
      %v1983 = vld [vmem:[%s8 + $0x18] sm:$0xff]
      %v1984 = vld [vmem:[%s8 + $0x20] sm:$0xff]
      %v1985 = vld [vmem:[%s8 + $0x28] sm:$0xff]
      %v1986 = vld [vmem:[%s8 + $0x30] sm:$0xff]
      %v1987 = vld [vmem:[%s8 + $0x38] sm:$0xff]
      %v1988 = vld [vmem:[%s8 + $0x40] sm:$0xff]
      %v1989 = vld [vmem:[%s8 + $0x48] sm:$0xff]
      %v1990 = vld [vmem:[%s8 + $0x50] sm:$0xff]
      %v1991 = vld [vmem:[%s8 + $0x58] sm:$0xff]
      %v1992 = vld [vmem:[%s8 + $0x60] sm:$0xff]
      %v1993 = vld [vmem:[%s8 + $0x68] sm:$0xff]
      %v1994 = vld [vmem:[%s8 + $0x70] sm:$0xff]
      %v1995 = vld [vmem:[%s8 + $0x78] sm:$0xff]
      %v1996 = vld [vmem:[%s8 + $0x80] sm:$0xff]
      %v1997 = vld [vmem:[%s8 + $0x88] sm:$0xff]
      %v1998 = vld [vmem:[%s8 + $0x90] sm:$0xff]
      %v1999 = vld [vmem:[%s8 + $0x98] sm:$0xff]
      %v2000 = vld [vmem:[%s8 + $0xa0] sm:$0xff]
      %v2001 = vld [vmem:[%s8 + $0xa8] sm:$0xff]
      %v2002 = vld [vmem:[%s8 + $0xb0] sm:$0xff]
      %v2003 = vld [vmem:[%s8 + $0xb8] sm:$0xff]
      %v2004 = vld [vmem:[%s8 + $0xc0] sm:$0xff]
      %v2005 = vld [vmem:[%s8 + $0xc8] sm:$0xff]
      %v2006 = vld [vmem:[%s8 + $0xd0] sm:$0xff]
      %v2007 = vld [vmem:[%s8 + $0xd8] sm:$0xff]
      %v2008 = vld [vmem:[%s8 + $0xe0] sm:$0xff]
      %v2009 = vld [vmem:[%s8 + $0xe8] sm:$0xff]
      %v2010 = vld [vmem:[%s8 + $0xf0] sm:$0xff]
      %v2011 = vld [vmem:[%s8 + $0xf8] sm:$0xff]
      %v2044 = vunpack.c.l.b16 %v1980
      %v2045 = vunpack.c.h.b16 %v1980
      %v2046 = vunpack.c.l.b16 %v1981
      %v2047 = vunpack.c.h.b16 %v1981
      %v2048 = vunpack.c.l.b16 %v1982
      %v2049 = vunpack.c.h.b16 %v1982
      %v2050 = vunpack.c.l.b16 %v1983
      %v2051 = vunpack.c.h.b16 %v1983
      %v2052 = vunpack.c.l.b16 %v1984
      %v2053 = vunpack.c.h.b16 %v1984
      %v2054 = vunpack.c.l.b16 %v1985
      %v2055 = vunpack.c.h.b16 %v1985
      %v2056 = vunpack.c.l.b16 %v1986
      %v2057 = vunpack.c.h.b16 %v1986
      %v2058 = vunpack.c.l.b16 %v1987
      %v2059 = vunpack.c.h.b16 %v1987
      %v2060 = vunpack.c.l.b16 %v1988
      %v2061 = vunpack.c.h.b16 %v1988
      %v2062 = vunpack.c.l.b16 %v1989
      %v2063 = vunpack.c.h.b16 %v1989
      %v2064 = vunpack.c.l.b16 %v1990
      %v2065 = vunpack.c.h.b16 %v1990
      %v2066 = vunpack.c.l.b16 %v1991
      %v2067 = vunpack.c.h.b16 %v1991
      %v2068 = vunpack.c.l.b16 %v1992
      %v2069 = vunpack.c.h.b16 %v1992
      %v2070 = vunpack.c.l.b16 %v1993
      %v2071 = vunpack.c.h.b16 %v1993
      %v2072 = vunpack.c.l.b16 %v1994
      %v2073 = vunpack.c.h.b16 %v1994
      %v2074 = vunpack.c.l.b16 %v1995
      %v2075 = vunpack.c.h.b16 %v1995
      %v2076 = vunpack.c.l.b16 %v1996
      %v2077 = vunpack.c.h.b16 %v1996
      %v2078 = vunpack.c.l.b16 %v1997
      %v2079 = vunpack.c.h.b16 %v1997
      %v2080 = vunpack.c.l.b16 %v1998
      %v2081 = vunpack.c.h.b16 %v1998
      %v2082 = vunpack.c.l.b16 %v1999
      %v2083 = vunpack.c.h.b16 %v1999
      %v2084 = vunpack.c.l.b16 %v2000
      %v2085 = vunpack.c.h.b16 %v2000
      %v2086 = vunpack.c.l.b16 %v2001
      %v2087 = vunpack.c.h.b16 %v2001
      %v2088 = vunpack.c.l.b16 %v2002
      %v2089 = vunpack.c.h.b16 %v2002
      %v2090 = vunpack.c.l.b16 %v2003
      %v2091 = vunpack.c.h.b16 %v2003
      %v2092 = vunpack.c.l.b16 %v2004
      %v2093 = vunpack.c.h.b16 %v2004
      %v2094 = vunpack.c.l.b16 %v2005
      %v2095 = vunpack.c.h.b16 %v2005
      %v2096 = vunpack.c.l.b16 %v2006
      %v2097 = vunpack.c.h.b16 %v2006
      %v2098 = vunpack.c.l.b16 %v2007
      %v2099 = vunpack.c.h.b16 %v2007
      %v2100 = vunpack.c.l.b16 %v2008
      %v2101 = vunpack.c.h.b16 %v2008
      %v2102 = vunpack.c.l.b16 %v2009
      %v2103 = vunpack.c.h.b16 %v2009
      %v2104 = vunpack.c.l.b16 %v2010
      %v2105 = vunpack.c.h.b16 %v2010
      %v2106 = vunpack.c.l.b16 %v2011
      %v2107 = vunpack.c.h.b16 %v2011
      %v2108 = vpack.c.b16 %v2048, %v2044
      %v2109 = vpack.c.b16 %v2049, %v2045
      %v2110 = vpack.c.b16 %v2050, %v2046
      %v2111 = vpack.c.b16 %v2051, %v2047
      %v2112 = vpack.c.b16 %v2056, %v2052
      %v2113 = vpack.c.b16 %v2057, %v2053
      %v2114 = vpack.c.b16 %v2058, %v2054
      %v2115 = vpack.c.b16 %v2059, %v2055
      %v2116 = vpack.c.b16 %v2064, %v2060
      %v2117 = vpack.c.b16 %v2065, %v2061
      %v2118 = vpack.c.b16 %v2066, %v2062
      %v2119 = vpack.c.b16 %v2067, %v2063
      %v2120 = vpack.c.b16 %v2072, %v2068
      %v2121 = vpack.c.b16 %v2073, %v2069
      %v2122 = vpack.c.b16 %v2074, %v2070
      %v2123 = vpack.c.b16 %v2075, %v2071
      %v2124 = vpack.c.b16 %v2080, %v2076
      %v2125 = vpack.c.b16 %v2081, %v2077
      %v2126 = vpack.c.b16 %v2082, %v2078
      %v2127 = vpack.c.b16 %v2083, %v2079
      %v2128 = vpack.c.b16 %v2088, %v2084
      %v2129 = vpack.c.b16 %v2089, %v2085
      %v2130 = vpack.c.b16 %v2090, %v2086
      %v2131 = vpack.c.b16 %v2091, %v2087
      %v2132 = vpack.c.b16 %v2096, %v2092
      %v2133 = vpack.c.b16 %v2097, %v2093
      %v2134 = vpack.c.b16 %v2098, %v2094
      %v2135 = vpack.c.b16 %v2099, %v2095
      %v2136 = vpack.c.b16 %v2104, %v2100
      %v2137 = vpack.c.b16 %v2105, %v2101
      %v2138 = vpack.c.b16 %v2106, %v2102
      %v2139 = vpack.c.b16 %v2107, %v2103
      %2172 = vmatprep.subr.bf16.mxu0 %v2137
      %2173 = vmatpush1.bf16.msra.mxu0 %v2136
      %2174 = vmatprep.subr.bf16.mxu0 %v2133
      %2175 = vmatpush1.bf16.msra.mxu0 %v2132
      %2176 = vmatprep.subr.bf16.mxu0 %v2129
      %2177 = vmatpush1.bf16.msra.mxu0 %v2128
      %2178 = vmatprep.subr.bf16.mxu0 %v2125
      %2179 = vmatpush1.bf16.msra.mxu0 %v2124
      %2180 = vmatprep.subr.bf16.mxu0 %v2121
      %2181 = vmatpush1.bf16.msra.mxu0 %v2120
      %2182 = vmatprep.subr.bf16.mxu0 %v2117
      %2183 = vmatpush1.bf16.msra.mxu0 %v2116
      %2184 = vmatprep.subr.bf16.mxu0 %v2113
      %2185 = vmatpush1.bf16.msra.mxu0 %v2112
      %2186 = vmatprep.subr.bf16.mxu0 %v2109
      %2187 = vmatpush1.bf16.msra.mxu0 %v2108
      %2188 = vmatprep.subr.bf16.mxu0 0
      %2189 = vmatpush2.bf16.msra.mxu0 0
      %2190 = vmatprep.subr.bf16.mxu0 0
      %2191 = vmatpush2.bf16.msra.mxu0 0
      %2192 = vmatprep.subr.bf16.mxu0 0
      %2193 = vmatpush2.bf16.msra.mxu0 0
      %2194 = vmatprep.subr.bf16.mxu0 0
      %2195 = vmatpush2.bf16.msra.mxu0 0
      %2196 = vmatprep.subr.bf16.mxu0 0
      %2197 = vmatpush2.bf16.msra.mxu0 0
      %2198 = vmatprep.subr.bf16.mxu0 0
      %2199 = vmatpush2.bf16.msra.mxu0 0
      %2200 = vmatprep.subr.bf16.mxu0 0
      %2201 = vmatpush2.bf16.msra.mxu0 0
      %2202 = vmatprep.subr.bf16.mxu0 0
      %2203 = vmatpush2.bf16.msra.mxu0 0
      %2204 = vmatprep.mubr.bf16.mxu0 0
      %2205 = vmatmul.mubr.bf16.gmra.mxu0 %v1979
      %v2206 = vpop.f32.mrf.mxu0
      %v2207 = vadd.f32 0.0, %v2206
      %v2208 = vpop.f32.mrf.mxu0
      %v2209 = vadd.f32 0.0, %v2208
      %v2210 = vpop.f32.mrf.mxu0
      %v2211 = vadd.f32 0.0, %v2210
      %v2212 = vpop.f32.mrf.mxu0
      %v2213 = vadd.f32 0.0, %v2212
      %2214 = vdwg.mxu0
      %2215 = vmatprep.subr.bf16.mxu0 %v2139
      %2216 = vmatpush1.bf16.msra.mxu0 %v2138
      %2217 = vmatprep.subr.bf16.mxu0 %v2135
      %2218 = vmatpush1.bf16.msra.mxu0 %v2134
      %2219 = vmatprep.subr.bf16.mxu0 %v2131
      %2220 = vmatpush1.bf16.msra.mxu0 %v2130
      %2221 = vmatprep.subr.bf16.mxu0 %v2127
      %2222 = vmatpush1.bf16.msra.mxu0 %v2126
      %2223 = vmatprep.subr.bf16.mxu0 %v2123
      %2224 = vmatpush1.bf16.msra.mxu0 %v2122
      %2225 = vmatprep.subr.bf16.mxu0 %v2119
      %2226 = vmatpush1.bf16.msra.mxu0 %v2118
      %2227 = vmatprep.subr.bf16.mxu0 %v2115
      %2228 = vmatpush1.bf16.msra.mxu0 %v2114
      %2229 = vmatprep.subr.bf16.mxu0 %v2111
      %2230 = vmatpush1.bf16.msra.mxu0 %v2110
      %2231 = vmatprep.subr.bf16.mxu0 0
      %2232 = vmatpush2.bf16.msra.mxu0 0
      %2233 = vmatprep.subr.bf16.mxu0 0
      %2234 = vmatpush2.bf16.msra.mxu0 0
      %2235 = vmatprep.subr.bf16.mxu0 0
      %2236 = vmatpush2.bf16.msra.mxu0 0
      %2237 = vmatprep.subr.bf16.mxu0 0
      %2238 = vmatpush2.bf16.msra.mxu0 0
      %2239 = vmatprep.subr.bf16.mxu0 0
      %2240 = vmatpush2.bf16.msra.mxu0 0
      %2241 = vmatprep.subr.bf16.mxu0 0
      %2242 = vmatpush2.bf16.msra.mxu0 0
      %2243 = vmatprep.subr.bf16.mxu0 0
      %2244 = vmatpush2.bf16.msra.mxu0 0
      %2245 = vmatprep.subr.bf16.mxu0 0
      %2246 = vmatpush2.bf16.msra.mxu0 0
      %2247 = vmatprep.mubr.bf16.mxu0 0
      %2248 = vmatmul.mubr.bf16.gmra.mxu0 %v1979
      %v2249 = vpop.f32.mrf.mxu0
      %v2250 = vadd.f32 0.0, %v2249
      %v2251 = vpop.f32.mrf.mxu0
      %v2252 = vadd.f32 0.0, %v2251
      %v2253 = vpop.f32.mrf.mxu0
      %v2254 = vadd.f32 0.0, %v2253
      %v2255 = vpop.f32.mrf.mxu0
      %v2256 = vadd.f32 0.0, %v2255
      %2257 = vdwg.mxu0
      %v2260 = vunpack.c.l.b16 %v1941
      %v2261 = vunpack.c.l.b16 %v1942
      %v2262 = vpack.c.b16 %v2261, %v2260
      %v2296 = vunpack.c.l.b16 %v1947
      %v2297 = vunpack.c.h.b16 %v1947
      %v2298 = vunpack.c.l.b16 %v1948
      %v2299 = vunpack.c.h.b16 %v1948
      %v2300 = vunpack.c.l.b16 %v1949
      %v2301 = vunpack.c.h.b16 %v1949
      %v2302 = vunpack.c.l.b16 %v1950
      %v2303 = vunpack.c.h.b16 %v1950
      %v2304 = vunpack.c.l.b16 %v1951
      %v2305 = vunpack.c.h.b16 %v1951
      %v2306 = vunpack.c.l.b16 %v1952
      %v2307 = vunpack.c.h.b16 %v1952
      %v2308 = vunpack.c.l.b16 %v1953
      %v2309 = vunpack.c.h.b16 %v1953
      %v2310 = vunpack.c.l.b16 %v1954
      %v2311 = vunpack.c.h.b16 %v1954
      %v2312 = vunpack.c.l.b16 %v1955
      %v2313 = vunpack.c.h.b16 %v1955
      %v2314 = vunpack.c.l.b16 %v1956
      %v2315 = vunpack.c.h.b16 %v1956
      %v2316 = vunpack.c.l.b16 %v1957
      %v2317 = vunpack.c.h.b16 %v1957
      %v2318 = vunpack.c.l.b16 %v1958
      %v2319 = vunpack.c.h.b16 %v1958
      %v2320 = vunpack.c.l.b16 %v1959
      %v2321 = vunpack.c.h.b16 %v1959
      %v2322 = vunpack.c.l.b16 %v1960
      %v2323 = vunpack.c.h.b16 %v1960
      %v2324 = vunpack.c.l.b16 %v1961
      %v2325 = vunpack.c.h.b16 %v1961
      %v2326 = vunpack.c.l.b16 %v1962
      %v2327 = vunpack.c.h.b16 %v1962
      %v2328 = vunpack.c.l.b16 %v1963
      %v2329 = vunpack.c.h.b16 %v1963
      %v2330 = vunpack.c.l.b16 %v1964
      %v2331 = vunpack.c.h.b16 %v1964
      %v2332 = vunpack.c.l.b16 %v1965
      %v2333 = vunpack.c.h.b16 %v1965
      %v2334 = vunpack.c.l.b16 %v1966
      %v2335 = vunpack.c.h.b16 %v1966
      %v2336 = vunpack.c.l.b16 %v1967
      %v2337 = vunpack.c.h.b16 %v1967
      %v2338 = vunpack.c.l.b16 %v1968
      %v2339 = vunpack.c.h.b16 %v1968
      %v2340 = vunpack.c.l.b16 %v1969
      %v2341 = vunpack.c.h.b16 %v1969
      %v2342 = vunpack.c.l.b16 %v1970
      %v2343 = vunpack.c.h.b16 %v1970
      %v2344 = vunpack.c.l.b16 %v1971
      %v2345 = vunpack.c.h.b16 %v1971
      %v2346 = vunpack.c.l.b16 %v1972
      %v2347 = vunpack.c.h.b16 %v1972
      %v2348 = vunpack.c.l.b16 %v1973
      %v2349 = vunpack.c.h.b16 %v1973
      %v2350 = vunpack.c.l.b16 %v1974
      %v2351 = vunpack.c.h.b16 %v1974
      %v2352 = vunpack.c.l.b16 %v1975
      %v2353 = vunpack.c.h.b16 %v1975
      %v2354 = vunpack.c.l.b16 %v1976
      %v2355 = vunpack.c.h.b16 %v1976
      %v2356 = vunpack.c.l.b16 %v1977
      %v2357 = vunpack.c.h.b16 %v1977
      %v2358 = vunpack.c.l.b16 %v1978
      %v2359 = vunpack.c.h.b16 %v1978
      %v2360 = vpack.c.b16 %v2300, %v2296
      %v2361 = vpack.c.b16 %v2301, %v2297
      %v2362 = vpack.c.b16 %v2302, %v2298
      %v2363 = vpack.c.b16 %v2303, %v2299
      %v2364 = vpack.c.b16 %v2308, %v2304
      %v2365 = vpack.c.b16 %v2309, %v2305
      %v2366 = vpack.c.b16 %v2310, %v2306
      %v2367 = vpack.c.b16 %v2311, %v2307
      %v2368 = vpack.c.b16 %v2316, %v2312
      %v2369 = vpack.c.b16 %v2317, %v2313
      %v2370 = vpack.c.b16 %v2318, %v2314
      %v2371 = vpack.c.b16 %v2319, %v2315
      %v2372 = vpack.c.b16 %v2324, %v2320
      %v2373 = vpack.c.b16 %v2325, %v2321
      %v2374 = vpack.c.b16 %v2326, %v2322
      %v2375 = vpack.c.b16 %v2327, %v2323
      %v2376 = vpack.c.b16 %v2332, %v2328
      %v2377 = vpack.c.b16 %v2333, %v2329
      %v2378 = vpack.c.b16 %v2334, %v2330
      %v2379 = vpack.c.b16 %v2335, %v2331
      %v2380 = vpack.c.b16 %v2340, %v2336
      %v2381 = vpack.c.b16 %v2341, %v2337
      %v2382 = vpack.c.b16 %v2342, %v2338
      %v2383 = vpack.c.b16 %v2343, %v2339
      %v2384 = vpack.c.b16 %v2348, %v2344
      %v2385 = vpack.c.b16 %v2349, %v2345
      %v2386 = vpack.c.b16 %v2350, %v2346
      %v2387 = vpack.c.b16 %v2351, %v2347
      %v2388 = vpack.c.b16 %v2356, %v2352
      %v2389 = vpack.c.b16 %v2357, %v2353
      %v2390 = vpack.c.b16 %v2358, %v2354
      %v2391 = vpack.c.b16 %v2359, %v2355
      %2424 = vmatprep.subr.bf16.mxu0 %v2389
      %2425 = vmatpush1.bf16.msra.mxu0 %v2388
      %2426 = vmatprep.subr.bf16.mxu0 %v2385
      %2427 = vmatpush1.bf16.msra.mxu0 %v2384
      %2428 = vmatprep.subr.bf16.mxu0 %v2381
      %2429 = vmatpush1.bf16.msra.mxu0 %v2380
      %2430 = vmatprep.subr.bf16.mxu0 %v2377
      %2431 = vmatpush1.bf16.msra.mxu0 %v2376
      %2432 = vmatprep.subr.bf16.mxu0 %v2373
      %2433 = vmatpush1.bf16.msra.mxu0 %v2372
      %2434 = vmatprep.subr.bf16.mxu0 %v2369
      %2435 = vmatpush1.bf16.msra.mxu0 %v2368
      %2436 = vmatprep.subr.bf16.mxu0 %v2365
      %2437 = vmatpush1.bf16.msra.mxu0 %v2364
      %2438 = vmatprep.subr.bf16.mxu0 %v2361
      %2439 = vmatpush1.bf16.msra.mxu0 %v2360
      %2440 = vmatprep.subr.bf16.mxu0 0
      %2441 = vmatpush2.bf16.msra.mxu0 0
      %2442 = vmatprep.subr.bf16.mxu0 0
      %2443 = vmatpush2.bf16.msra.mxu0 0
      %2444 = vmatprep.subr.bf16.mxu0 0
      %2445 = vmatpush2.bf16.msra.mxu0 0
      %2446 = vmatprep.subr.bf16.mxu0 0
      %2447 = vmatpush2.bf16.msra.mxu0 0
      %2448 = vmatprep.subr.bf16.mxu0 0
      %2449 = vmatpush2.bf16.msra.mxu0 0
      %2450 = vmatprep.subr.bf16.mxu0 0
      %2451 = vmatpush2.bf16.msra.mxu0 0
      %2452 = vmatprep.subr.bf16.mxu0 0
      %2453 = vmatpush2.bf16.msra.mxu0 0
      %2454 = vmatprep.subr.bf16.mxu0 0
      %2455 = vmatpush2.bf16.msra.mxu0 0
      %2456 = vmatprep.mubr.bf16.mxu0 0
      %2457 = vmatmul.mubr.bf16.gmra.mxu0 %v2262
      %v2458 = vpop.f32.mrf.mxu0
      %v2459 = vadd.f32 %v2207, %v2458
      %v2460 = vpop.f32.mrf.mxu0
      %v2461 = vadd.f32 %v2209, %v2460
      %v2462 = vpop.f32.mrf.mxu0
      %v2463 = vadd.f32 %v2211, %v2462
      %v2464 = vpop.f32.mrf.mxu0
      %v2465 = vadd.f32 %v2213, %v2464
      %2466 = vdwg.mxu0
      %2467 = vmatprep.subr.bf16.mxu0 %v2391
      %2468 = vmatpush1.bf16.msra.mxu0 %v2390
      %2469 = vmatprep.subr.bf16.mxu0 %v2387
      %2470 = vmatpush1.bf16.msra.mxu0 %v2386
      %2471 = vmatprep.subr.bf16.mxu0 %v2383
      %2472 = vmatpush1.bf16.msra.mxu0 %v2382
      %2473 = vmatprep.subr.bf16.mxu0 %v2379
      %2474 = vmatpush1.bf16.msra.mxu0 %v2378
      %2475 = vmatprep.subr.bf16.mxu0 %v2375
      %2476 = vmatpush1.bf16.msra.mxu0 %v2374
      %2477 = vmatprep.subr.bf16.mxu0 %v2371
      %2478 = vmatpush1.bf16.msra.mxu0 %v2370
      %2479 = vmatprep.subr.bf16.mxu0 %v2367
      %2480 = vmatpush1.bf16.msra.mxu0 %v2366
      %2481 = vmatprep.subr.bf16.mxu0 %v2363
      %2482 = vmatpush1.bf16.msra.mxu0 %v2362
      %2483 = vmatprep.subr.bf16.mxu0 0
      %2484 = vmatpush2.bf16.msra.mxu0 0
      %2485 = vmatprep.subr.bf16.mxu0 0
      %2486 = vmatpush2.bf16.msra.mxu0 0
      %2487 = vmatprep.subr.bf16.mxu0 0
      %2488 = vmatpush2.bf16.msra.mxu0 0
      %2489 = vmatprep.subr.bf16.mxu0 0
      %2490 = vmatpush2.bf16.msra.mxu0 0
      %2491 = vmatprep.subr.bf16.mxu0 0
      %2492 = vmatpush2.bf16.msra.mxu0 0
      %2493 = vmatprep.subr.bf16.mxu0 0
      %2494 = vmatpush2.bf16.msra.mxu0 0
      %2495 = vmatprep.subr.bf16.mxu0 0
      %2496 = vmatpush2.bf16.msra.mxu0 0
      %2497 = vmatprep.subr.bf16.mxu0 0
      %2498 = vmatpush2.bf16.msra.mxu0 0
      %2499 = vmatprep.mubr.bf16.mxu0 0
      %2500 = vmatmul.mubr.bf16.gmra.mxu0 %v2262
      %v2501 = vpop.f32.mrf.mxu0
      %v2502 = vadd.f32 %v2250, %v2501
      %v2503 = vpop.f32.mrf.mxu0
      %v2504 = vadd.f32 %v2252, %v2503
      %v2505 = vpop.f32.mrf.mxu0
      %v2506 = vadd.f32 %v2254, %v2505
      %v2507 = vpop.f32.mrf.mxu0
      %v2508 = vadd.f32 %v2256, %v2507
      %2509 = vdwg.mxu0
      %v2510 = vadd.f32 %v2459, %v83
      %v2511 = vadd.f32 %v2461, %v87
      %v2512 = vadd.f32 %v2502, %v91
      %v2513 = vadd.f32 %v2504, %v95
      %v2514 = vadd.f32 %v2463, %v83
      %v2515 = vadd.f32 %v2465, %v87
      %v2516 = vadd.f32 %v2506, %v91
      %v2517 = vadd.f32 %v2508, %v95
      %v2518 = vxor.u32 %v2510, 2147483648
      %v2519 = vxor.u32 %v2514, 2147483648
      %v2520 = vmul.f32 %v2518, 1.442695
      %v2521 = vpow.pop %v2520
      %v2522 = vmul.f32 %v2519, 1.442695
      %v2523 = vpow.pop %v2522
      %v2524 = vadd.f32 %v2521, 1.0
      %v2525 = vadd.f32 %v2523, 1.0
      %v2526 = vrcp.pop %v2524
      %v2527 = vmul.f32 1.0, %v2526
      %v2528 = vrcp.pop %v2525
      %v2529 = vmul.f32 1.0, %v2528
      %v2530 = vxor.u32 %v2511, 2147483648
      %v2531 = vxor.u32 %v2515, 2147483648
      %v2532 = vmul.f32 %v2530, 1.442695
      %v2533 = vpow.pop %v2532
      %v2534 = vmul.f32 %v2531, 1.442695
      %v2535 = vpow.pop %v2534
      %v2536 = vadd.f32 %v2533, 1.0
      %v2537 = vadd.f32 %v2535, 1.0
      %v2538 = vrcp.pop %v2536
      %v2539 = vmul.f32 1.0, %v2538
      %v2540 = vrcp.pop %v2537
      %v2541 = vmul.f32 1.0, %v2540
      %v2542 = vtanh.pop %v2512
      %v2543 = vtanh.pop %v2516
      %v2544 = vxor.u32 %v2513, 2147483648
      %v2545 = vxor.u32 %v2517, 2147483648
      %v2546 = vmul.f32 %v2544, 1.442695
      %v2547 = vpow.pop %v2546
      %v2548 = vmul.f32 %v2545, 1.442695
      %v2549 = vpow.pop %v2548
      %v2550 = vadd.f32 %v2547, 1.0
      %v2551 = vadd.f32 %v2549, 1.0
      %v2552 = vrcp.pop %v2550
      %v2553 = vmul.f32 1.0, %v2552
      %v2554 = vrcp.pop %v2551
      %v2555 = vmul.f32 1.0, %v2554
      %v2556 = vmul.f32 %v2539, %v1945
      %v2557 = vmul.f32 %v2541, %v1946
      %v2558 = vmul.f32 %v2527, %v2542
      %v2559 = vmul.f32 %v2529, %v2543
      %v2560 = vadd.f32 %v2556, %v2558
      %v2561 = vadd.f32 %v2557, %v2559
      %v2562 = vtanh.pop %v2560
      %v2563 = vtanh.pop %v2561
      %v2564 = vmul.f32 %v2553, %v2562
      %v2565 = vmul.f32 %v2555, %v2563
      %2566 = vst [vmem:[#allocation2] sm:$0xff] %v2564
      %2567 = vst [vmem:[#allocation2 + $0x8] sm:$0xff] %v2565
      %2568 = vst [vmem:[#allocation3] sm:$0xff] %v2560
      %2569 = vst [vmem:[#allocation3 + $0x8] sm:$0xff] %v2561
      %v2570 = vpack.c.bf16 %v2565, %v2564
      %v2571 = vld [vmem:[%s10] sm:$0xff]
      %v2572 = vld [vmem:[%s10 + $0x8] sm:$0xff]
      %v2573 = vld [vmem:[%s10 + $0x10] sm:$0xff]
      %v2574 = vld [vmem:[%s10 + $0x18] sm:$0xff]
      %v2575 = vld [vmem:[%s10 + $0x20] sm:$0xff]
      %v2576 = vld [vmem:[%s10 + $0x28] sm:$0xff]
      %v2577 = vld [vmem:[%s10 + $0x30] sm:$0xff]
      %v2578 = vld [vmem:[%s10 + $0x38] sm:$0xff]
      %v2579 = vld [vmem:[%s10 + $0x40] sm:$0xff]
      %v2580 = vld [vmem:[%s10 + $0x48] sm:$0xff]
      %v2581 = vld [vmem:[%s10 + $0x50] sm:$0xff]
      %v2582 = vld [vmem:[%s10 + $0x58] sm:$0xff]
      %v2583 = vld [vmem:[%s10 + $0x60] sm:$0xff]
      %v2584 = vld [vmem:[%s10 + $0x68] sm:$0xff]
      %v2585 = vld [vmem:[%s10 + $0x70] sm:$0xff]
      %v2586 = vld [vmem:[%s10 + $0x78] sm:$0xff]
      %v2603 = vunpack.c.l.b16 %v2571
      %v2604 = vunpack.c.h.b16 %v2571
      %v2605 = vunpack.c.l.b16 %v2572
      %v2606 = vunpack.c.h.b16 %v2572
      %v2607 = vunpack.c.l.b16 %v2573
      %v2608 = vunpack.c.h.b16 %v2573
      %v2609 = vunpack.c.l.b16 %v2574
      %v2610 = vunpack.c.h.b16 %v2574
      %v2611 = vunpack.c.l.b16 %v2575
      %v2612 = vunpack.c.h.b16 %v2575
      %v2613 = vunpack.c.l.b16 %v2576
      %v2614 = vunpack.c.h.b16 %v2576
      %v2615 = vunpack.c.l.b16 %v2577
      %v2616 = vunpack.c.h.b16 %v2577
      %v2617 = vunpack.c.l.b16 %v2578
      %v2618 = vunpack.c.h.b16 %v2578
      %v2619 = vunpack.c.l.b16 %v2579
      %v2620 = vunpack.c.h.b16 %v2579
      %v2621 = vunpack.c.l.b16 %v2580
      %v2622 = vunpack.c.h.b16 %v2580
      %v2623 = vunpack.c.l.b16 %v2581
      %v2624 = vunpack.c.h.b16 %v2581
      %v2625 = vunpack.c.l.b16 %v2582
      %v2626 = vunpack.c.h.b16 %v2582
      %v2627 = vunpack.c.l.b16 %v2583
      %v2628 = vunpack.c.h.b16 %v2583
      %v2629 = vunpack.c.l.b16 %v2584
      %v2630 = vunpack.c.h.b16 %v2584
      %v2631 = vunpack.c.l.b16 %v2585
      %v2632 = vunpack.c.h.b16 %v2585
      %v2633 = vunpack.c.l.b16 %v2586
      %v2634 = vunpack.c.h.b16 %v2586
      %v2635 = vpack.c.b16 %v2605, %v2603
      %v2636 = vpack.c.b16 %v2606, %v2604
      %v2637 = vpack.c.b16 %v2609, %v2607
      %v2638 = vpack.c.b16 %v2610, %v2608
      %v2639 = vpack.c.b16 %v2613, %v2611
      %v2640 = vpack.c.b16 %v2614, %v2612
      %v2641 = vpack.c.b16 %v2617, %v2615
      %v2642 = vpack.c.b16 %v2618, %v2616
      %v2643 = vpack.c.b16 %v2621, %v2619
      %v2644 = vpack.c.b16 %v2622, %v2620
      %v2645 = vpack.c.b16 %v2625, %v2623
      %v2646 = vpack.c.b16 %v2626, %v2624
      %v2647 = vpack.c.b16 %v2629, %v2627
      %v2648 = vpack.c.b16 %v2630, %v2628
      %v2649 = vpack.c.b16 %v2633, %v2631
      %v2650 = vpack.c.b16 %v2634, %v2632
      %2667 = vmatprep.subr.bf16.mxu0 %v2650
      %2668 = vmatpush1.bf16.msra.mxu0 %v2649
      %2669 = vmatprep.subr.bf16.mxu0 %v2648
      %2670 = vmatpush1.bf16.msra.mxu0 %v2647
      %2671 = vmatprep.subr.bf16.mxu0 %v2646
      %2672 = vmatpush1.bf16.msra.mxu0 %v2645
      %2673 = vmatprep.subr.bf16.mxu0 %v2644
      %2674 = vmatpush1.bf16.msra.mxu0 %v2643
      %2675 = vmatprep.subr.bf16.mxu0 %v2642
      %2676 = vmatpush1.bf16.msra.mxu0 %v2641
      %2677 = vmatprep.subr.bf16.mxu0 %v2640
      %2678 = vmatpush1.bf16.msra.mxu0 %v2639
      %2679 = vmatprep.subr.bf16.mxu0 %v2638
      %2680 = vmatpush1.bf16.msra.mxu0 %v2637
      %2681 = vmatprep.subr.bf16.mxu0 %v2636
      %2682 = vmatpush1.bf16.msra.mxu0 %v2635
      %2683 = vmatprep.subr.bf16.mxu0 0
      %2684 = vmatpush2.bf16.msra.mxu0 0
      %2685 = vmatprep.subr.bf16.mxu0 0
      %2686 = vmatpush2.bf16.msra.mxu0 0
      %2687 = vmatprep.subr.bf16.mxu0 0
      %2688 = vmatpush2.bf16.msra.mxu0 0
      %2689 = vmatprep.subr.bf16.mxu0 0
      %2690 = vmatpush2.bf16.msra.mxu0 0
      %2691 = vmatprep.subr.bf16.mxu0 0
      %2692 = vmatpush2.bf16.msra.mxu0 0
      %2693 = vmatprep.subr.bf16.mxu0 0
      %2694 = vmatpush2.bf16.msra.mxu0 0
      %2695 = vmatprep.subr.bf16.mxu0 0
      %2696 = vmatpush2.bf16.msra.mxu0 0
      %2697 = vmatprep.subr.bf16.mxu0 0
      %2698 = vmatpush2.bf16.msra.mxu0 0
      %2699 = vmatprep.mubr.bf16.mxu0 0
      %2700 = vmatmul.mubr.bf16.gmra.mxu0 %v2570
      %v2701 = vpop.f32.mrf.mxu0
      %v2702 = vadd.f32 %v105, %v2701
      %v2703 = vpop.f32.mrf.mxu0
      %v2704 = vadd.f32 %v109, %v2703
      %v2705 = vpop.f32.mrf.mxu0
      %v2706 = vadd.f32 %v105, %v2705
      %v2707 = vpop.f32.mrf.mxu0
      %v2708 = vadd.f32 %v109, %v2707
      %2709 = vdwg.mxu0
      %s2710 = smul.u32 %s1940, 4
      %s2711 = smul.addr %s2710, 8
      %s2712 = scalar_lea.vmem [#allocation8], %s2711
      %2713 = vst [vmem:[%s2712] sm:$0xff] %v2702
      %2714 = vst [vmem:[%s2712 + $0x8] sm:$0xff] %v2704
      %2715 = vst [vmem:[%s2712 + $0x10] sm:$0xff] %v2706
      %2716 = vst [vmem:[%s2712 + $0x18] sm:$0xff] %v2708
      %s2717 = sld [smem:[#allocation5 + %s1940]]
      %p2718 = scmp.ne.s32.totalorder %s2717, 0
      // Predicated region
      $region61: #{seq2seq_forward.1} parent=57 // pred_check
        %p2719 = pneg %p2718
      $region62: #{seq2seq_forward.1} parent=57 // pred_check_branch
        %2721 = sbr.rel (%p2719) target = $region64
      $region63: #{seq2seq_forward.1} parent=57 // pred_region
        %s2722 = smul.u32 %s1940, 2
        %s2723 = smul.addr %s2722, 4
        %s2724 = scalar_lea.vmem %s2, %s2723
        %v2725 = vld [vmem:[%s2724] sm:$0xf]
        %v2726 = vld [vmem:[%s2724 + $0x4] sm:$0xf]
        %2727 = vst [vmem:[#allocation4] sm:$0xf] %v2725
        %2728 = vst [vmem:[#allocation4 + $0x4] sm:$0xf] %v2726
      $region64: #{seq2seq_forward.1} parent=57 // pred_fallthru
        _
      %p2729 = scmp.eq.s32.totalorder %s2717, 0
      // Predicated region
      $region65: #{seq2seq_forward.1} parent=57 // pred_check
        %p2730 = pneg %p2729
      $region66: #{seq2seq_forward.1} parent=57 // pred_check_branch
        %2732 = sbr.rel (%p2730) target = $region68
      $region67: #{seq2seq_forward.1} parent=57 // pred_region
        %v2733 = vmax.f32 %v2702, %v2704
        %2734 = vmax.xlane.f32.xlu0 %v2733
        %v2735 = vpop.xlane.xlu0 %2734
        %v2736 = vmax.f32 %v2706, %v2708
        %2737 = vmax.xlane.f32.xlu0 %v2736
        %v2738 = vpop.xlane.xlu0 %2737
        %v2739 = vlaneseq
        %v2740 = vand.u32 %v2739, 127
        %v2741 = vadd.s32 %v2740, 128
        %vm2742 = vcmp.eq.f32.partialorder %v2702, %v2735
        %vm2743 = vcmp.eq.f32.partialorder %v2704, %v2735
        %vm2744 = vcmp.eq.f32.partialorder %v2706, %v2738
        %vm2745 = vcmp.eq.f32.partialorder %v2708, %v2738
        %v2746 = vsel %vm2742, %v2740, 256
        %v2747 = vsel %vm2743, %v2741, 256
        %v2748 = vsel %vm2744, %v2740, 256
        %v2749 = vsel %vm2745, %v2741, 256
        %vm2750 = vcmp.lt.s32.totalorder %v2746, %v2747
        %v2751 = vsel %vm2750, %v2746, %v2747
        %v2752 = vand.u32 %v2751, 65535
        %v2753 = vshra.s32 %v2751, 16
        %v2754 = vcvt.s32.f32 %v2752
        %v2755 = vcvt.s32.f32 %v2753
        %2756 = vmin.xlane.f32.xlu0 %v2755
        %v2757 = vpop.xlane.xlu0 %2756
        %vm2758 = vcmp.eq.f32.partialorder %v2755, %v2757
        %v2759 = vsel %vm2758, %v2754, inf
        %2760 = vmin.xlane.f32.xlu0 %v2759
        %v2761 = vpop.xlane.xlu0 %2760
        %v2762 = vcvt.f32.s32 %v2761
        %v2763 = vcvt.f32.s32 %v2757
        %v2764 = vshll.u32 %v2763, 16
        %v2765 = vadd.s32 %v2764, %v2762
        %vm2766 = vcmp.lt.s32.totalorder %v2748, %v2749
        %v2767 = vsel %vm2766, %v2748, %v2749
        %v2768 = vand.u32 %v2767, 65535
        %v2769 = vshra.s32 %v2767, 16
        %v2770 = vcvt.s32.f32 %v2768
        %v2771 = vcvt.s32.f32 %v2769
        %2772 = vmin.xlane.f32.xlu0 %v2771
        %v2773 = vpop.xlane.xlu0 %2772
        %vm2774 = vcmp.eq.f32.partialorder %v2771, %v2773
        %v2775 = vsel %vm2774, %v2770, inf
        %2776 = vmin.xlane.f32.xlu0 %v2775
        %v2777 = vpop.xlane.xlu0 %2776
        %v2778 = vcvt.f32.s32 %v2777
        %v2779 = vcvt.f32.s32 %v2773
        %v2780 = vshll.u32 %v2779, 16
        %v2781 = vadd.s32 %v2780, %v2778
        %vm2782 = vcmp.eq.s32.totalorder %v2740, %v2765
        %vm2783 = vcmp.eq.s32.totalorder %v2741, %v2765
        %vm2784 = vcmp.eq.s32.totalorder %v2740, %v2781
        %vm2785 = vcmp.eq.s32.totalorder %v2741, %v2781
        %v2786 = vsel %vm2782, 1, 0
        %v2787 = vsel %vm2783, 1, 0
        %v2788 = vsel %vm2784, 1, 0
        %v2789 = vsel %vm2785, 1, 0
        %v2790 = vcvt.s32.f32 %v2786
        %v2791 = vcvt.s32.f32 %v2787
        %v2792 = vcvt.s32.f32 %v2788
        %v2793 = vcvt.s32.f32 %v2789
        %v2794 = vpack.c.bf16 %v2792, %v2790
        %v2795 = vpack.c.bf16 %v2793, %v2791
        %v2796 = vld [vmem:[%s3] sm:$0xf]
        %v2797 = vld [vmem:[%s3 + $0x4] sm:$0xf]
        %v2798 = vld [vmem:[%s3 + $0x8] sm:$0xf]
        %v2799 = vld [vmem:[%s3 + $0xc] sm:$0xf]
        %v2800 = vld [vmem:[%s3 + $0x10] sm:$0xf]
        %v2801 = vld [vmem:[%s3 + $0x14] sm:$0xf]
        %v2802 = vld [vmem:[%s3 + $0x18] sm:$0xf]
        %v2803 = vld [vmem:[%s3 + $0x1c] sm:$0xf]
        %v2804 = vld [vmem:[%s3 + $0x20] sm:$0xf]
        %v2805 = vld [vmem:[%s3 + $0x24] sm:$0xf]
        %v2806 = vld [vmem:[%s3 + $0x28] sm:$0xf]
        %v2807 = vld [vmem:[%s3 + $0x2c] sm:$0xf]
        %v2808 = vld [vmem:[%s3 + $0x30] sm:$0xf]
        %v2809 = vld [vmem:[%s3 + $0x34] sm:$0xf]
        %v2810 = vld [vmem:[%s3 + $0x38] sm:$0xf]
        %v2811 = vld [vmem:[%s3 + $0x3c] sm:$0xf]
        %v2812 = vld [vmem:[%s3 + $0x40] sm:$0xf]
        %v2813 = vld [vmem:[%s3 + $0x44] sm:$0xf]
        %v2814 = vld [vmem:[%s3 + $0x48] sm:$0xf]
        %v2815 = vld [vmem:[%s3 + $0x4c] sm:$0xf]
        %v2816 = vld [vmem:[%s3 + $0x50] sm:$0xf]
        %v2817 = vld [vmem:[%s3 + $0x54] sm:$0xf]
        %v2818 = vld [vmem:[%s3 + $0x58] sm:$0xf]
        %v2819 = vld [vmem:[%s3 + $0x5c] sm:$0xf]
        %v2820 = vld [vmem:[%s3 + $0x60] sm:$0xf]
        %v2821 = vld [vmem:[%s3 + $0x64] sm:$0xf]
        %v2822 = vld [vmem:[%s3 + $0x68] sm:$0xf]
        %v2823 = vld [vmem:[%s3 + $0x6c] sm:$0xf]
        %v2824 = vld [vmem:[%s3 + $0x70] sm:$0xf]
        %v2825 = vld [vmem:[%s3 + $0x74] sm:$0xf]
        %v2826 = vld [vmem:[%s3 + $0x78] sm:$0xf]
        %v2827 = vld [vmem:[%s3 + $0x7c] sm:$0xf]
        %v2860 = vunpack.c.l.b16 %v2796
        %v2861 = vunpack.c.l.b16 %v2797
        %v2862 = vunpack.c.l.b16 %v2798
        %v2863 = vunpack.c.l.b16 %v2799
        %v2864 = vunpack.c.l.b16 %v2800
        %v2865 = vunpack.c.l.b16 %v2801
        %v2866 = vunpack.c.l.b16 %v2802
        %v2867 = vunpack.c.l.b16 %v2803
        %v2868 = vunpack.c.l.b16 %v2804
        %v2869 = vunpack.c.l.b16 %v2805
        %v2870 = vunpack.c.l.b16 %v2806
        %v2871 = vunpack.c.l.b16 %v2807
        %v2872 = vunpack.c.l.b16 %v2808
        %v2873 = vunpack.c.l.b16 %v2809
        %v2874 = vunpack.c.l.b16 %v2810
        %v2875 = vunpack.c.l.b16 %v2811
        %v2876 = vunpack.c.l.b16 %v2812
        %v2877 = vunpack.c.l.b16 %v2813
        %v2878 = vunpack.c.l.b16 %v2814
        %v2879 = vunpack.c.l.b16 %v2815
        %v2880 = vunpack.c.l.b16 %v2816
        %v2881 = vunpack.c.l.b16 %v2817
        %v2882 = vunpack.c.l.b16 %v2818
        %v2883 = vunpack.c.l.b16 %v2819
        %v2884 = vunpack.c.l.b16 %v2820
        %v2885 = vunpack.c.l.b16 %v2821
        %v2886 = vunpack.c.l.b16 %v2822
        %v2887 = vunpack.c.l.b16 %v2823
        %v2888 = vunpack.c.l.b16 %v2824
        %v2889 = vunpack.c.l.b16 %v2825
        %v2890 = vunpack.c.l.b16 %v2826
        %v2891 = vunpack.c.l.b16 %v2827
        %v2892 = vpack.c.b16 %v2861, %v2860
        %v2893 = vpack.c.b16 %v2863, %v2862
        %v2894 = vpack.c.b16 %v2865, %v2864
        %v2895 = vpack.c.b16 %v2867, %v2866
        %v2896 = vpack.c.b16 %v2869, %v2868
        %v2897 = vpack.c.b16 %v2871, %v2870
        %v2898 = vpack.c.b16 %v2873, %v2872
        %v2899 = vpack.c.b16 %v2875, %v2874
        %v2900 = vpack.c.b16 %v2877, %v2876
        %v2901 = vpack.c.b16 %v2879, %v2878
        %v2902 = vpack.c.b16 %v2881, %v2880
        %v2903 = vpack.c.b16 %v2883, %v2882
        %v2904 = vpack.c.b16 %v2885, %v2884
        %v2905 = vpack.c.b16 %v2887, %v2886
        %v2906 = vpack.c.b16 %v2889, %v2888
        %v2907 = vpack.c.b16 %v2891, %v2890
        %2924 = vmatprep.subr.bf16.mxu0 0
        %2925 = vmatpush1.bf16.msra.mxu0 %v2899
        %2926 = vmatprep.subr.bf16.mxu0 0
        %2927 = vmatpush1.bf16.msra.mxu0 %v2898
        %2928 = vmatprep.subr.bf16.mxu0 0
        %2929 = vmatpush1.bf16.msra.mxu0 %v2897
        %2930 = vmatprep.subr.bf16.mxu0 0
        %2931 = vmatpush1.bf16.msra.mxu0 %v2896
        %2932 = vmatprep.subr.bf16.mxu0 0
        %2933 = vmatpush1.bf16.msra.mxu0 %v2895
        %2934 = vmatprep.subr.bf16.mxu0 0
        %2935 = vmatpush1.bf16.msra.mxu0 %v2894
        %2936 = vmatprep.subr.bf16.mxu0 0
        %2937 = vmatpush1.bf16.msra.mxu0 %v2893
        %2938 = vmatprep.subr.bf16.mxu0 0
        %2939 = vmatpush1.bf16.msra.mxu0 %v2892
        %2940 = vmatprep.subr.bf16.mxu0 0
        %2941 = vmatpush2.bf16.msra.mxu0 %v2907
        %2942 = vmatprep.subr.bf16.mxu0 0
        %2943 = vmatpush2.bf16.msra.mxu0 %v2906
        %2944 = vmatprep.subr.bf16.mxu0 0
        %2945 = vmatpush2.bf16.msra.mxu0 %v2905
        %2946 = vmatprep.subr.bf16.mxu0 0
        %2947 = vmatpush2.bf16.msra.mxu0 %v2904
        %2948 = vmatprep.subr.bf16.mxu0 0
        %2949 = vmatpush2.bf16.msra.mxu0 %v2903
        %2950 = vmatprep.subr.bf16.mxu0 0
        %2951 = vmatpush2.bf16.msra.mxu0 %v2902
        %2952 = vmatprep.subr.bf16.mxu0 0
        %2953 = vmatpush2.bf16.msra.mxu0 %v2901
        %2954 = vmatprep.subr.bf16.mxu0 0
        %2955 = vmatpush2.bf16.msra.mxu0 %v2900
        %2956 = vmatprep.mubr.bf16.mxu0 %v2795
        %2957 = vmatmul.mubr.bf16.gmra.mxu0 %v2794
        %v2958 = vpop.f32.mrf.mxu0
        %v2959 = vadd.f32 0.0, %v2958
        %v2960 = vpop.f32.mrf.mxu0
        %v2961 = vpop.f32.mrf.mxu0
        %v2962 = vadd.f32 0.0, %v2961
        %v2963 = vpop.f32.mrf.mxu0
        %2964 = vdwg.mxu0
        %v2965 = vpack.c.bf16 %v2962, %v2959
        %v2967 = vunpack.c.l.b16 %v2965
        %v2968 = vunpack.c.h.b16 %v2965
        %v2969 = vpack.c.b16 %v2967, %v2967
        %v2970 = vpack.c.b16 %v2968, %v2968
        %2973 = vst [vmem:[#allocation4] sm:$0xf] %v2969
        %2974 = vst [vmem:[#allocation4 + $0x4] sm:$0xf] %v2970
      $region68: #{seq2seq_forward.1} parent=57 // pred_fallthru
        _
    $region58: #{seq2seq_forward.1} parent=1 // loop_footer
      %s1939 = sadd.s32 1, %s1935
    $region59: #{seq2seq_forward.1} parent=1 // loop_footer_branch
      %1934 = sbr.rel target = $region55
    $region60: #{seq2seq_forward.1} parent=1 // loop_exit
      _
    // Predicated region
    $region69: #{seq2seq_forward.1} parent=1 // pred_check
      _
    $region70: #{seq2seq_forward.1} parent=1 // pred_check_branch
      %2976 = sbr.rel (0) target = $region72
    $region71: #{seq2seq_forward.1} parent=1 // pred_region
      %s2978 = ssub.s32 4096, 4096
      %2979 = vsyncadd [#allocation6], %s2978
      %s2980 = sshll.u32 [#allocation8], 4
      %s2981 = int_to_ptr.vmem [resolvable:$true] %s2980
      %2986 = dma.vmem_to_hbm [thread:$0]  %s2981, 4096, %s12, [#allocation6], 256, 256, 16
    $region72: #{seq2seq_forward.1} parent=1 // pred_fallthru
      _
    // Predicated region
    $region73: #{seq2seq_forward.1} parent=1 // pred_check
      _
    $region74: #{seq2seq_forward.1} parent=1 // pred_check_branch
      %2988 = sbr.rel (0) target = $region76
    $region75: #{seq2seq_forward.1} parent=1 // pred_region
      %2989 = dma.done [#allocation6], 4096
    $region76: #{seq2seq_forward.1} parent=1 // pred_fallthru
      _
    %2990 = vsyncpa [#allocation6], 1
    %2991 = vsyncpa [#allocation7], 1

</llo_original>
